<compile_context>
chip_gen: v7x
topology: tpu7x:2x2x1
jax: 0.10.0
libtpu: 0.0.40
codegen_flags: <defaults>
</compile_context>

<pallas_src>
import functools
import math

import numpy as np
import jax
import jax.numpy as jnp
from jax import lax
from jax.experimental import pallas as pl
from jax.experimental.pallas import tpu as pltpu


_VMEM_LIMIT = 32 * 1024 * 1024  # explicit, safe on v5e/v6e/v7x


# ----------------------- host-side weight constant folds -----------------------
def _toeplitz_weight(w_hwio, width, dtype):
    """(KH, KW, Cin, Cout) 'same' conv weight -> width-Toeplitz matrix of shape
    (KH*(width+KW-1)*Cin, width*Cout) so one padded image row-band becomes a
    single matmul.  K order: (dy, w_in, cin); N order: (w_out, cout)."""
    kh, kw, cin, cout = w_hwio.shape
    wp = width + kw - 1
    big = jnp.zeros((kh, wp, cin, width, cout), w_hwio.dtype)
    for wo in range(width):
        big = big.at[:, wo:wo + kw, :, wo, :].set(w_hwio)
    return big.reshape(kh * wp * cin, width * cout).astype(dtype)


# ------------------------------- fused kernel ----------------------------------
def _fused_kernel(xp_ref, wqkv_ref, wu_ref, e_ref, et_ref, o_ref,
                  *, T, H, W, C, NH):
    """Per batch element: QKV 3x3 conv -> multi-head tile attention -> unify
    3x3 conv, all intermediates in VMEM.

    xp_ref : (T, H+2, (W+2)*C)   padded NHWC activation, lanes = (w_in, c)
    wqkv_ref: (3*(W+2)*C, 3*W*NH*C) Toeplitz QKV weight, lanes = (sel, w, n, c)
    wu_ref : (3*(W+2)*NH*C, W*C) Toeplitz unify weight
    e_ref  : (W*NH*C, NH)        0/1 lane -> head indicator
    et_ref : (NH, W*NH*C)        its transpose
    o_ref  : (T*H, W*C)          output, rows=(t,h), lanes=(w,c)
    """
    f32 = jnp.float32
    Wp = W + 2
    L = W * NH * C                     # q/k/v lane width per tile, order (w, n, c)

    wqkv = wqkv_ref[...]               # bf16
    wu = wu_ref[...]                   # bf16
    E = e_ref[...]                     # f32
    Et = et_ref[...]                   # f32

    # ---- fused Q|K|V 3x3 conv: taps assembled in VMEM, one matmul ----
    rows = []
    for t in range(T):
        taps = [xp_ref[t, dy:dy + H, :] for dy in range(3)]        # 3 x (H, Wp*C)
        rows.append(jnp.concatenate(taps, axis=1))                 # (H, 3*Wp*C)
    lhs = jnp.concatenate(rows, axis=0).astype(jnp.bfloat16)       # (T*H, 3*Wp*C)
    qkv = jnp.dot(lhs, wqkv, preferred_element_type=f32)           # (T*H, 3*L)

    q = [qkv[t * H:(t + 1) * H, 0:L] for t in range(T)]
    k = [qkv[t * H:(t + 1) * H, L:2 * L] for t in range(T)]
    v = [qkv[t * H:(t + 1) * H, 2 * L:3 * L] for t in range(T)]

    # ---- attention scores s[(a,b), head]; 1/sqrt(H*W) already in wq ----
    srows = []
    for a in range(T):
        for b in range(T):
            srows.append(jnp.sum(q[a] * k[b], axis=0, keepdims=True))   # (1, L)
    S = jnp.dot(jnp.concatenate(srows, axis=0), E,
                preferred_element_type=f32)                        # (T*T, NH)

    # ---- softmax over key tiles per (query tile, head) ----
    prows = []
    for a in range(T):
        s_a = S[a * T:(a + 1) * T, :]                              # (T, NH)
        m = jnp.max(s_a, axis=0, keepdims=True)
        e = jnp.exp(s_a - m)
        d = jnp.sum(e, axis=0, keepdims=True)
        prows.append(e * pl.reciprocal(d, approx=True))
    P_all = jnp.concatenate(prows, axis=0)                         # (T*T, NH)
    Mul = jnp.dot(P_all, Et, preferred_element_type=f32)           # (T*T, L)

    # ---- attention output + unify 3x3 conv (taps built in VMEM) ----
    zlane = jnp.zeros((H, NH * C), f32)
    zrow = jnp.zeros((1, Wp * NH * C), f32)
    urows = []
    for a in range(T):
        o_a = jnp.zeros((H, L), f32)
        for b in range(T):
            o_a = o_a + v[b] * Mul[a * T + b:a * T + b + 1, :]     # (H, L)
        padded = jnp.concatenate(
            [zrow, jnp.concatenate([zlane, o_a, zlane], axis=1), zrow],
            axis=0)                                                # (H+2, Wp*NH*C)
        urows.append(jnp.concatenate(
            [padded[dy:dy + H, :] for dy in range(3)], axis=1))    # (H, 3*Wp*NH*C)
    lhs_u = jnp.concatenate(urows, axis=0).astype(jnp.bfloat16)    # (T*H, 3*Wp*NH*C)
    out = jnp.dot(lhs_u, wu, preferred_element_type=f32)           # (T*H, W*C)
    o_ref[...] = out.astype(o_ref.dtype)


# ------------------------------- full forward -----------------------------------
def cnn_self_attention(x, params):
    """x: (B, N_TILES_H, N_TILES_W, HIDDEN, H, W) -> same shape."""
    B, nth, ntw, C, H, W = x.shape
    NH = params["wq"].shape[-1] // C
    T = nth * ntw
    Wp = W + 2
    L = W * NH * C

    # Padded NHWC activation with (w, c) merged into lanes -- the only wrapper
    # data movement on the (small) raw activation; big intermediates never
    # touch HBM.
    xn = jnp.transpose(x.reshape(B, T, C, H, W), (0, 1, 3, 4, 2))       # (B,T,H,W,C)
    xp = jnp.pad(xn, ((0, 0), (0, 0), (1, 1), (1, 1), (0, 0)))
    xp = xp.reshape(B, T, H + 2, Wp * C).astype(jnp.float32)

    # Width-Toeplitz conv weights (host-side constant folds); QKV fused along
    # output columns with lane order (sel, w, head, c); softmax scale folded
    # into the Q columns.
    scale = 1.0 / math.sqrt(float(H * W))
    w_qkv = jnp.concatenate(
        [_toeplitz_weight(params["wq"] * scale, W, jnp.bfloat16),
         _toeplitz_weight(params["wk"], W, jnp.bfloat16),
         _toeplitz_weight(params["wv"], W, jnp.bfloat16)], axis=1)      # (3*Wp*C, 3*L)
    w_u = _toeplitz_weight(params["wu"], W, jnp.bfloat16)               # (3*Wp*NH*C, W*C)

    # Constant 0/1 lane -> head indicator (lane order (w, n, c)).
    head_of_lane = (np.arange(L) // C) % NH
    e_np = (head_of_lane[:, None] == np.arange(NH)[None, :]).astype(np.float32)
    E = jnp.asarray(e_np)                                               # (L, NH)
    Et = jnp.asarray(e_np.T)                                            # (NH, L)

    kernel = functools.partial(_fused_kernel, T=T, H=H, W=W, C=C, NH=NH)
    out = pl.pallas_call(
        kernel,
        out_shape=jax.ShapeDtypeStruct((B, T * H, W * C), jnp.float32),
        grid=(B,),
        in_specs=[
            pl.BlockSpec((None, T, H + 2, Wp * C), lambda b: (b, 0, 0, 0)),
            pl.BlockSpec(w_qkv.shape, lambda b: (0, 0)),
            pl.BlockSpec(w_u.shape, lambda b: (0, 0)),
            pl.BlockSpec(E.shape, lambda b: (0, 0)),
            pl.BlockSpec(Et.shape, lambda b: (0, 0)),
        ],
        out_specs=pl.BlockSpec((None, T * H, W * C), lambda b: (b, 0, 0)),
        compiler_params=pltpu.CompilerParams(
            dimension_semantics=("parallel",),
            vmem_limit_bytes=_VMEM_LIMIT),
    )(xp, w_qkv, w_u, E, Et)

    # (B, (t,h), (w,c)) -> (B, nth, ntw, C, H, W): tiny final-layout transpose.
    out = jnp.transpose(out.reshape(B, T, H, W, C), (0, 1, 4, 2, 3))
    return out.reshape(B, nth, ntw, C, H, W)


# --------------------------- deterministic params -------------------------------
def init_params(key, hidden, n_heads):
    ks = jax.random.split(key, 4)
    s = 0.1
    return {
        "wq": s * jax.random.normal(ks[0], (3, 3, hidden, hidden * n_heads), jnp.float32),
        "wk": s * jax.random.normal(ks[1], (3, 3, hidden, hidden * n_heads), jnp.float32),
        "wv": s * jax.random.normal(ks[2], (3, 3, hidden, hidden * n_heads), jnp.float32),
        "wu": s * jax.random.normal(ks[3], (3, 3, hidden * n_heads, hidden), jnp.float32),
    }


# ---------------------------- pure-JAX reference --------------------------------
def reference_forward(x, params):
    B, nth, ntw, hidden, H, W = x.shape
    n_heads = params["wq"].shape[-1] // hidden
    T = nth * ntw
    N = B * T
    hp = jax.lax.Precision.HIGHEST
    xf = x.reshape(N, hidden, H, W)

    def conv(z, w):
        return jax.lax.conv_general_dilated(
            z, w, window_strides=(1, 1), padding=((1, 1), (1, 1)),
            dimension_numbers=("NCHW", "HWIO", "NCHW"), precision=hp)

    shp = (B, T, n_heads, hidden, H, W)
    q = conv(xf, params["wq"]).reshape(shp)
    k = conv(xf, params["wk"]).reshape(shp)
    v = conv(xf, params["wv"]).reshape(shp)
    scale = float(H * W) ** 0.25
    q = q / scale
    k = k / scale
    wts = jnp.einsum("ijklmn,icklmn->ikjc", q, k, precision=hp)
    wts = jax.nn.softmax(wts, axis=3)
    out = jnp.einsum("ijkl,iljcmn->ikjcmn", wts, v, precision=hp)
    out = out.reshape(N, n_heads * hidden, H, W)
    out = conv(out, params["wu"])
    return out.reshape(B, nth, ntw, hidden, H, W)


if __name__ == "__main__":
    B, nth, ntw = 2, 2, 2
    hidden, H, W, n_heads = 8, 8, 8, 8

    key = jax.random.PRNGKey(0)
    kx, kp = jax.random.split(key)
    x = jax.random.normal(kx, (B, nth, ntw, hidden, H, W), jnp.float32)
    params = init_params(kp, hidden, n_heads)

    out = jax.jit(cnn_self_attention)(x, params)
    out = jax.block_until_ready(out)
    assert out.shape == (B, nth, ntw, hidden, H, W)

    ref = reference_forward(x, params)
    ref_scale = float(jnp.max(jnp.abs(ref)))
    max_err = float(jnp.max(jnp.abs(out - ref)))
    rel_fro = float(jnp.linalg.norm(out - ref) / jnp.linalg.norm(ref))
    # bf16 MXU operands (f32 accumulation) + approx-reciprocal softmax ->
    # bf16-appropriate tolerances.
    if not (rel_fro < 4e-2 and max_err < 5e-2 * ref_scale):
        raise AssertionError(
            f"mismatch vs reference: rel_fro={rel_fro:.4e}, "
            f"max_abs={max_err:.4e}, ref_scale={ref_scale:.4e}")

    print("KERNEL_OK")
</pallas_src>

<mosaic_0001>
module attributes {stable_mosaic.version = 11 : i64} {
  func.func @_fused_kernel(%arg0: i32, %arg1: memref<1x4x10x80xf32, #tpu.memory_space<vmem>>, %arg2: memref<240x1536xbf16, #tpu.memory_space<vmem>>, %arg3: memref<1920x64xbf16, #tpu.memory_space<vmem>>, %arg4: memref<512x8xf32, #tpu.memory_space<vmem>>, %arg5: memref<8x512xf32, #tpu.memory_space<vmem>>, %arg6: memref<1x32x64xf32, #tpu.memory_space<vmem>>) attributes {dimension_semantics = [#tpu.dimension_semantics<parallel>], iteration_bounds = array<i64: 2>, scalar_prefetch = 0 : i64, scratch_operands = 0 : i64, tpu.core_type = #tpu.core_type<tc>, window_params = [{transform_indices = @transform_0, window_bounds = array<i64: 1, 4, 10, 80>}, {pipeline_mode = #tpu.pipeline_mode<synchronous>, transform_indices = @transform_1, window_bounds = array<i64: 240, 1536>}, {pipeline_mode = #tpu.pipeline_mode<synchronous>, transform_indices = @transform_2, window_bounds = array<i64: 1920, 64>}, {pipeline_mode = #tpu.pipeline_mode<synchronous>, transform_indices = @transform_3, window_bounds = array<i64: 512, 8>}, {pipeline_mode = #tpu.pipeline_mode<synchronous>, transform_indices = @transform_4, window_bounds = array<i64: 8, 512>}, {transform_indices = @transform_5, window_bounds = array<i64: 1, 32, 64>}]} {
    %c0 = arith.constant 0 : index
    %c0_0 = arith.constant 0 : index
    %0 = vector.load %arg2[%c0, %c0_0] : memref<240x1536xbf16, #tpu.memory_space<vmem>>, vector<240x1536xbf16>
    %c0_1 = arith.constant 0 : index
    %c0_2 = arith.constant 0 : index
    %1 = vector.load %arg3[%c0_1, %c0_2] : memref<1920x64xbf16, #tpu.memory_space<vmem>>, vector<1920x64xbf16>
    %c0_3 = arith.constant 0 : index
    %c0_4 = arith.constant 0 : index
    %2 = vector.load %arg4[%c0_3, %c0_4] : memref<512x8xf32, #tpu.memory_space<vmem>>, vector<512x8xf32>
    %c0_5 = arith.constant 0 : index
    %c0_6 = arith.constant 0 : index
    %3 = vector.load %arg5[%c0_5, %c0_6] : memref<8x512xf32, #tpu.memory_space<vmem>>, vector<8x512xf32>
    %c0_7 = arith.constant 0 : index
    %c0_8 = arith.constant 0 : index
    %c0_9 = arith.constant 0 : index
    %c0_10 = arith.constant 0 : index
    %4 = vector.load %arg1[%c0_7, %c0_8, %c0_9, %c0_10] : memref<1x4x10x80xf32, #tpu.memory_space<vmem>>, vector<1x1x8x80xf32>
    %5 = vector.shape_cast %4 : vector<1x1x8x80xf32> to vector<8x80xf32>
    %c0_11 = arith.constant 0 : index
    %c0_12 = arith.constant 0 : index
    %c1 = arith.constant 1 : index
    %c0_13 = arith.constant 0 : index
    %6 = vector.load %arg1[%c0_11, %c0_12, %c1, %c0_13] : memref<1x4x10x80xf32, #tpu.memory_space<vmem>>, vector<1x1x8x80xf32>
    %7 = vector.shape_cast %6 : vector<1x1x8x80xf32> to vector<8x80xf32>
    %c0_14 = arith.constant 0 : index
    %c0_15 = arith.constant 0 : index
    %c2 = arith.constant 2 : index
    %c0_16 = arith.constant 0 : index
    %8 = vector.load %arg1[%c0_14, %c0_15, %c2, %c0_16] : memref<1x4x10x80xf32, #tpu.memory_space<vmem>>, vector<1x1x8x80xf32>
    %9 = vector.shape_cast %8 : vector<1x1x8x80xf32> to vector<8x80xf32>
    %10 = tpu.concatenate %5, %7, %9 in 1 : vector<8x80xf32>, vector<8x80xf32>, vector<8x80xf32> -> vector<8x240xf32>
    %c0_17 = arith.constant 0 : index
    %c1_18 = arith.constant 1 : index
    %c0_19 = arith.constant 0 : index
    %c0_20 = arith.constant 0 : index
    %11 = vector.load %arg1[%c0_17, %c1_18, %c0_19, %c0_20] : memref<1x4x10x80xf32, #tpu.memory_space<vmem>>, vector<1x1x8x80xf32>
    %12 = vector.shape_cast %11 : vector<1x1x8x80xf32> to vector<8x80xf32>
    %c0_21 = arith.constant 0 : index
    %c1_22 = arith.constant 1 : index
    %c1_23 = arith.constant 1 : index
    %c0_24 = arith.constant 0 : index
    %13 = vector.load %arg1[%c0_21, %c1_22, %c1_23, %c0_24] : memref<1x4x10x80xf32, #tpu.memory_space<vmem>>, vector<1x1x8x80xf32>
    %14 = vector.shape_cast %13 : vector<1x1x8x80xf32> to vector<8x80xf32>
    %c0_25 = arith.constant 0 : index
    %c1_26 = arith.constant 1 : index
    %c2_27 = arith.constant 2 : index
    %c0_28 = arith.constant 0 : index
    %15 = vector.load %arg1[%c0_25, %c1_26, %c2_27, %c0_28] : memref<1x4x10x80xf32, #tpu.memory_space<vmem>>, vector<1x1x8x80xf32>
    %16 = vector.shape_cast %15 : vector<1x1x8x80xf32> to vector<8x80xf32>
    %17 = tpu.concatenate %12, %14, %16 in 1 : vector<8x80xf32>, vector<8x80xf32>, vector<8x80xf32> -> vector<8x240xf32>
    %c0_29 = arith.constant 0 : index
    %c2_30 = arith.constant 2 : index
    %c0_31 = arith.constant 0 : index
    %c0_32 = arith.constant 0 : index
    %18 = vector.load %arg1[%c0_29, %c2_30, %c0_31, %c0_32] : memref<1x4x10x80xf32, #tpu.memory_space<vmem>>, vector<1x1x8x80xf32>
    %19 = vector.shape_cast %18 : vector<1x1x8x80xf32> to vector<8x80xf32>
    %c0_33 = arith.constant 0 : index
    %c2_34 = arith.constant 2 : index
    %c1_35 = arith.constant 1 : index
    %c0_36 = arith.constant 0 : index
    %20 = vector.load %arg1[%c0_33, %c2_34, %c1_35, %c0_36] : memref<1x4x10x80xf32, #tpu.memory_space<vmem>>, vector<1x1x8x80xf32>
    %21 = vector.shape_cast %20 : vector<1x1x8x80xf32> to vector<8x80xf32>
    %c0_37 = arith.constant 0 : index
    %c2_38 = arith.constant 2 : index
    %c2_39 = arith.constant 2 : index
    %c0_40 = arith.constant 0 : index
    %22 = vector.load %arg1[%c0_37, %c2_38, %c2_39, %c0_40] : memref<1x4x10x80xf32, #tpu.memory_space<vmem>>, vector<1x1x8x80xf32>
    %23 = vector.shape_cast %22 : vector<1x1x8x80xf32> to vector<8x80xf32>
    %24 = tpu.concatenate %19, %21, %23 in 1 : vector<8x80xf32>, vector<8x80xf32>, vector<8x80xf32> -> vector<8x240xf32>
    %c0_41 = arith.constant 0 : index
    %c3 = arith.constant 3 : index
    %c0_42 = arith.constant 0 : index
    %c0_43 = arith.constant 0 : index
    %25 = vector.load %arg1[%c0_41, %c3, %c0_42, %c0_43] : memref<1x4x10x80xf32, #tpu.memory_space<vmem>>, vector<1x1x8x80xf32>
    %26 = vector.shape_cast %25 : vector<1x1x8x80xf32> to vector<8x80xf32>
    %c0_44 = arith.constant 0 : index
    %c3_45 = arith.constant 3 : index
    %c1_46 = arith.constant 1 : index
    %c0_47 = arith.constant 0 : index
    %27 = vector.load %arg1[%c0_44, %c3_45, %c1_46, %c0_47] : memref<1x4x10x80xf32, #tpu.memory_space<vmem>>, vector<1x1x8x80xf32>
    %28 = vector.shape_cast %27 : vector<1x1x8x80xf32> to vector<8x80xf32>
    %c0_48 = arith.constant 0 : index
    %c3_49 = arith.constant 3 : index
    %c2_50 = arith.constant 2 : index
    %c0_51 = arith.constant 0 : index
    %29 = vector.load %arg1[%c0_48, %c3_49, %c2_50, %c0_51] : memref<1x4x10x80xf32, #tpu.memory_space<vmem>>, vector<1x1x8x80xf32>
    %30 = vector.shape_cast %29 : vector<1x1x8x80xf32> to vector<8x80xf32>
    %31 = tpu.concatenate %26, %28, %30 in 1 : vector<8x80xf32>, vector<8x80xf32>, vector<8x80xf32> -> vector<8x240xf32>
    %32 = tpu.concatenate %10, %17, %24, %31 in 0 : vector<8x240xf32>, vector<8x240xf32>, vector<8x240xf32>, vector<8x240xf32> -> vector<32x240xf32>
    %33 = arith.truncf %32 : vector<32x240xf32> to vector<32x240xbf16>
    %cst = arith.constant dense<0.000000e+00> : vector<32x1536xf32>
    %34 = tpu.matmul %33, %0, %cst {dimension_numbers = #tpu.dot_dimension_numbers<[1], [0], [0], [1], [0, 0, 1, 1], [], []>} : vector<32x240xbf16>, vector<240x1536xbf16>, vector<32x1536xf32> -> vector<32x1536xf32>
    %35 = vector.extract_strided_slice %34 {offsets = [0, 0], sizes = [8, 512], strides = [1, 1]} : vector<32x1536xf32> to vector<8x512xf32>
    %36 = vector.extract_strided_slice %34 {offsets = [8, 0], sizes = [8, 512], strides = [1, 1]} : vector<32x1536xf32> to vector<8x512xf32>
    %37 = vector.extract_strided_slice %34 {offsets = [16, 0], sizes = [8, 512], strides = [1, 1]} : vector<32x1536xf32> to vector<8x512xf32>
    %38 = vector.extract_strided_slice %34 {offsets = [24, 0], sizes = [8, 512], strides = [1, 1]} : vector<32x1536xf32> to vector<8x512xf32>
    %39 = vector.extract_strided_slice %34 {offsets = [0, 512], sizes = [8, 512], strides = [1, 1]} : vector<32x1536xf32> to vector<8x512xf32>
    %40 = vector.extract_strided_slice %34 {offsets = [8, 512], sizes = [8, 512], strides = [1, 1]} : vector<32x1536xf32> to vector<8x512xf32>
    %41 = vector.extract_strided_slice %34 {offsets = [16, 512], sizes = [8, 512], strides = [1, 1]} : vector<32x1536xf32> to vector<8x512xf32>
    %42 = vector.extract_strided_slice %34 {offsets = [24, 512], sizes = [8, 512], strides = [1, 1]} : vector<32x1536xf32> to vector<8x512xf32>
    %43 = vector.extract_strided_slice %34 {offsets = [0, 1024], sizes = [8, 512], strides = [1, 1]} : vector<32x1536xf32> to vector<8x512xf32>
    %44 = vector.extract_strided_slice %34 {offsets = [8, 1024], sizes = [8, 512], strides = [1, 1]} : vector<32x1536xf32> to vector<8x512xf32>
    %45 = vector.extract_strided_slice %34 {offsets = [16, 1024], sizes = [8, 512], strides = [1, 1]} : vector<32x1536xf32> to vector<8x512xf32>
    %46 = vector.extract_strided_slice %34 {offsets = [24, 1024], sizes = [8, 512], strides = [1, 1]} : vector<32x1536xf32> to vector<8x512xf32>
    %47 = arith.mulf %35, %39 : vector<8x512xf32>
    %cst_52 = arith.constant dense<0.000000e+00> : vector<512xf32>
    %48 = vector.multi_reduction <add>, %47, %cst_52 [0] : vector<8x512xf32> to vector<512xf32>
    %49 = vector.shape_cast %48 : vector<512xf32> to vector<1x512xf32>
    %50 = arith.mulf %35, %40 : vector<8x512xf32>
    %cst_53 = arith.constant dense<0.000000e+00> : vector<512xf32>
    %51 = vector.multi_reduction <add>, %50, %cst_53 [0] : vector<8x512xf32> to vector<512xf32>
    %52 = vector.shape_cast %51 : vector<512xf32> to vector<1x512xf32>
    %53 = arith.mulf %35, %41 : vector<8x512xf32>
    %cst_54 = arith.constant dense<0.000000e+00> : vector<512xf32>
    %54 = vector.multi_reduction <add>, %53, %cst_54 [0] : vector<8x512xf32> to vector<512xf32>
    %55 = vector.shape_cast %54 : vector<512xf32> to vector<1x512xf32>
    %56 = arith.mulf %35, %42 : vector<8x512xf32>
    %cst_55 = arith.constant dense<0.000000e+00> : vector<512xf32>
    %57 = vector.multi_reduction <add>, %56, %cst_55 [0] : vector<8x512xf32> to vector<512xf32>
    %58 = vector.shape_cast %57 : vector<512xf32> to vector<1x512xf32>
    %59 = arith.mulf %36, %39 : vector<8x512xf32>
    %cst_56 = arith.constant dense<0.000000e+00> : vector<512xf32>
    %60 = vector.multi_reduction <add>, %59, %cst_56 [0] : vector<8x512xf32> to vector<512xf32>
    %61 = vector.shape_cast %60 : vector<512xf32> to vector<1x512xf32>
    %62 = arith.mulf %36, %40 : vector<8x512xf32>
    %cst_57 = arith.constant dense<0.000000e+00> : vector<512xf32>
    %63 = vector.multi_reduction <add>, %62, %cst_57 [0] : vector<8x512xf32> to vector<512xf32>
    %64 = vector.shape_cast %63 : vector<512xf32> to vector<1x512xf32>
    %65 = arith.mulf %36, %41 : vector<8x512xf32>
    %cst_58 = arith.constant dense<0.000000e+00> : vector<512xf32>
    %66 = vector.multi_reduction <add>, %65, %cst_58 [0] : vector<8x512xf32> to vector<512xf32>
    %67 = vector.shape_cast %66 : vector<512xf32> to vector<1x512xf32>
    %68 = arith.mulf %36, %42 : vector<8x512xf32>
    %cst_59 = arith.constant dense<0.000000e+00> : vector<512xf32>
    %69 = vector.multi_reduction <add>, %68, %cst_59 [0] : vector<8x512xf32> to vector<512xf32>
    %70 = vector.shape_cast %69 : vector<512xf32> to vector<1x512xf32>
    %71 = arith.mulf %37, %39 : vector<8x512xf32>
    %cst_60 = arith.constant dense<0.000000e+00> : vector<512xf32>
    %72 = vector.multi_reduction <add>, %71, %cst_60 [0] : vector<8x512xf32> to vector<512xf32>
    %73 = vector.shape_cast %72 : vector<512xf32> to vector<1x512xf32>
    %74 = arith.mulf %37, %40 : vector<8x512xf32>
    %cst_61 = arith.constant dense<0.000000e+00> : vector<512xf32>
    %75 = vector.multi_reduction <add>, %74, %cst_61 [0] : vector<8x512xf32> to vector<512xf32>
    %76 = vector.shape_cast %75 : vector<512xf32> to vector<1x512xf32>
    %77 = arith.mulf %37, %41 : vector<8x512xf32>
    %cst_62 = arith.constant dense<0.000000e+00> : vector<512xf32>
    %78 = vector.multi_reduction <add>, %77, %cst_62 [0] : vector<8x512xf32> to vector<512xf32>
    %79 = vector.shape_cast %78 : vector<512xf32> to vector<1x512xf32>
    %80 = arith.mulf %37, %42 : vector<8x512xf32>
    %cst_63 = arith.constant dense<0.000000e+00> : vector<512xf32>
    %81 = vector.multi_reduction <add>, %80, %cst_63 [0] : vector<8x512xf32> to vector<512xf32>
    %82 = vector.shape_cast %81 : vector<512xf32> to vector<1x512xf32>
    %83 = arith.mulf %38, %39 : vector<8x512xf32>
    %cst_64 = arith.constant dense<0.000000e+00> : vector<512xf32>
    %84 = vector.multi_reduction <add>, %83, %cst_64 [0] : vector<8x512xf32> to vector<512xf32>
    %85 = vector.shape_cast %84 : vector<512xf32> to vector<1x512xf32>
    %86 = arith.mulf %38, %40 : vector<8x512xf32>
    %cst_65 = arith.constant dense<0.000000e+00> : vector<512xf32>
    %87 = vector.multi_reduction <add>, %86, %cst_65 [0] : vector<8x512xf32> to vector<512xf32>
    %88 = vector.shape_cast %87 : vector<512xf32> to vector<1x512xf32>
    %89 = arith.mulf %38, %41 : vector<8x512xf32>
    %cst_66 = arith.constant dense<0.000000e+00> : vector<512xf32>
    %90 = vector.multi_reduction <add>, %89, %cst_66 [0] : vector<8x512xf32> to vector<512xf32>
    %91 = vector.shape_cast %90 : vector<512xf32> to vector<1x512xf32>
    %92 = arith.mulf %38, %42 : vector<8x512xf32>
    %cst_67 = arith.constant dense<0.000000e+00> : vector<512xf32>
    %93 = vector.multi_reduction <add>, %92, %cst_67 [0] : vector<8x512xf32> to vector<512xf32>
    %94 = vector.shape_cast %93 : vector<512xf32> to vector<1x512xf32>
    %95 = tpu.concatenate %49, %52, %55, %58, %61, %64, %67, %70, %73, %76, %79, %82, %85, %88, %91, %94 in 0 : vector<1x512xf32>, vector<1x512xf32>, vector<1x512xf32>, vector<1x512xf32>, vector<1x512xf32>, vector<1x512xf32>, vector<1x512xf32>, vector<1x512xf32>, vector<1x512xf32>, vector<1x512xf32>, vector<1x512xf32>, vector<1x512xf32>, vector<1x512xf32>, vector<1x512xf32>, vector<1x512xf32>, vector<1x512xf32> -> vector<16x512xf32>
    %cst_68 = arith.constant dense<0.000000e+00> : vector<16x8xf32>
    %96 = tpu.matmul %95, %2, %cst_68 {dimension_numbers = #tpu.dot_dimension_numbers<[1], [0], [0], [1], [0, 0, 1, 1], [], []>} : vector<16x512xf32>, vector<512x8xf32>, vector<16x8xf32> -> vector<16x8xf32>
    %97 = vector.extract_strided_slice %96 {offsets = [0, 0], sizes = [4, 8], strides = [1, 1]} : vector<16x8xf32> to vector<4x8xf32>
    %cst_69 = arith.constant dense<0xFF800000> : vector<8xf32>
    %98 = vector.multi_reduction <maximumf>, %97, %cst_69 [0] : vector<4x8xf32> to vector<8xf32>
    %99 = vector.shape_cast %98 : vector<8xf32> to vector<1x8xf32>
    %100 = vector.broadcast %99 : vector<1x8xf32> to vector<4x8xf32>
    %101 = arith.subf %97, %100 : vector<4x8xf32>
    %102 = math.exp %101 : vector<4x8xf32>
    %cst_70 = arith.constant dense<0.000000e+00> : vector<8xf32>
    %103 = vector.multi_reduction <add>, %102, %cst_70 [0] : vector<4x8xf32> to vector<8xf32>
    %104 = vector.shape_cast %103 : vector<8xf32> to vector<1x8xf32>
    %105 = tpu.reciprocal %104 {approx = true} : vector<1x8xf32> -> vector<1x8xf32>
    %106 = vector.broadcast %105 : vector<1x8xf32> to vector<4x8xf32>
    %107 = arith.mulf %102, %106 : vector<4x8xf32>
    %108 = vector.extract_strided_slice %96 {offsets = [4, 0], sizes = [4, 8], strides = [1, 1]} : vector<16x8xf32> to vector<4x8xf32>
    %cst_71 = arith.constant dense<0xFF800000> : vector<8xf32>
    %109 = vector.multi_reduction <maximumf>, %108, %cst_71 [0] : vector<4x8xf32> to vector<8xf32>
    %110 = vector.shape_cast %109 : vector<8xf32> to vector<1x8xf32>
    %111 = vector.broadcast %110 : vector<1x8xf32> to vector<4x8xf32>
    %112 = arith.subf %108, %111 : vector<4x8xf32>
    %113 = math.exp %112 : vector<4x8xf32>
    %cst_72 = arith.constant dense<0.000000e+00> : vector<8xf32>
    %114 = vector.multi_reduction <add>, %113, %cst_72 [0] : vector<4x8xf32> to vector<8xf32>
    %115 = vector.shape_cast %114 : vector<8xf32> to vector<1x8xf32>
    %116 = tpu.reciprocal %115 {approx = true} : vector<1x8xf32> -> vector<1x8xf32>
    %117 = vector.broadcast %116 : vector<1x8xf32> to vector<4x8xf32>
    %118 = arith.mulf %113, %117 : vector<4x8xf32>
    %119 = vector.extract_strided_slice %96 {offsets = [8, 0], sizes = [4, 8], strides = [1, 1]} : vector<16x8xf32> to vector<4x8xf32>
    %cst_73 = arith.constant dense<0xFF800000> : vector<8xf32>
    %120 = vector.multi_reduction <maximumf>, %119, %cst_73 [0] : vector<4x8xf32> to vector<8xf32>
    %121 = vector.shape_cast %120 : vector<8xf32> to vector<1x8xf32>
    %122 = vector.broadcast %121 : vector<1x8xf32> to vector<4x8xf32>
    %123 = arith.subf %119, %122 : vector<4x8xf32>
    %124 = math.exp %123 : vector<4x8xf32>
    %cst_74 = arith.constant dense<0.000000e+00> : vector<8xf32>
    %125 = vector.multi_reduction <add>, %124, %cst_74 [0] : vector<4x8xf32> to vector<8xf32>
    %126 = vector.shape_cast %125 : vector<8xf32> to vector<1x8xf32>
    %127 = tpu.reciprocal %126 {approx = true} : vector<1x8xf32> -> vector<1x8xf32>
    %128 = vector.broadcast %127 : vector<1x8xf32> to vector<4x8xf32>
    %129 = arith.mulf %124, %128 : vector<4x8xf32>
    %130 = vector.extract_strided_slice %96 {offsets = [12, 0], sizes = [4, 8], strides = [1, 1]} : vector<16x8xf32> to vector<4x8xf32>
    %cst_75 = arith.constant dense<0xFF800000> : vector<8xf32>
    %131 = vector.multi_reduction <maximumf>, %130, %cst_75 [0] : vector<4x8xf32> to vector<8xf32>
    %132 = vector.shape_cast %131 : vector<8xf32> to vector<1x8xf32>
    %133 = vector.broadcast %132 : vector<1x8xf32> to vector<4x8xf32>
    %134 = arith.subf %130, %133 : vector<4x8xf32>
    %135 = math.exp %134 : vector<4x8xf32>
    %cst_76 = arith.constant dense<0.000000e+00> : vector<8xf32>
    %136 = vector.multi_reduction <add>, %135, %cst_76 [0] : vector<4x8xf32> to vector<8xf32>
    %137 = vector.shape_cast %136 : vector<8xf32> to vector<1x8xf32>
    %138 = tpu.reciprocal %137 {approx = true} : vector<1x8xf32> -> vector<1x8xf32>
    %139 = vector.broadcast %138 : vector<1x8xf32> to vector<4x8xf32>
    %140 = arith.mulf %135, %139 : vector<4x8xf32>
    %141 = tpu.concatenate %107, %118, %129, %140 in 0 : vector<4x8xf32>, vector<4x8xf32>, vector<4x8xf32>, vector<4x8xf32> -> vector<16x8xf32>
    %cst_77 = arith.constant dense<0.000000e+00> : vector<16x512xf32>
    %142 = tpu.matmul %141, %3, %cst_77 {dimension_numbers = #tpu.dot_dimension_numbers<[1], [0], [0], [1], [0, 0, 1, 1], [], []>} : vector<16x8xf32>, vector<8x512xf32>, vector<16x512xf32> -> vector<16x512xf32>
    %cst_78 = arith.constant 0.000000e+00 : f32
    %143 = vector.broadcast %cst_78 : f32 to vector<8x64xf32>
    %cst_79 = arith.constant 0.000000e+00 : f32
    %144 = vector.broadcast %cst_79 : f32 to vector<1x640xf32>
    %cst_80 = arith.constant 0.000000e+00 : f32
    %145 = vector.broadcast %cst_80 : f32 to vector<8x512xf32>
    %146 = vector.extract_strided_slice %142 {offsets = [0, 0], sizes = [1, 512], strides = [1, 1]} : vector<16x512xf32> to vector<1x512xf32>
    %147 = vector.broadcast %146 : vector<1x512xf32> to vector<8x512xf32>
    %148 = arith.mulf %43, %147 : vector<8x512xf32>
    %149 = arith.addf %145, %148 : vector<8x512xf32>
    %150 = vector.extract_strided_slice %142 {offsets = [1, 0], sizes = [1, 512], strides = [1, 1]} : vector<16x512xf32> to vector<1x512xf32>
    %151 = vector.broadcast %150 : vector<1x512xf32> to vector<8x512xf32>
    %152 = arith.mulf %44, %151 : vector<8x512xf32>
    %153 = arith.addf %149, %152 : vector<8x512xf32>
    %154 = vector.extract_strided_slice %142 {offsets = [2, 0], sizes = [1, 512], strides = [1, 1]} : vector<16x512xf32> to vector<1x512xf32>
    %155 = vector.broadcast %154 : vector<1x512xf32> to vector<8x512xf32>
    %156 = arith.mulf %45, %155 : vector<8x512xf32>
    %157 = arith.addf %153, %156 : vector<8x512xf32>
    %158 = vector.extract_strided_slice %142 {offsets = [3, 0], sizes = [1, 512], strides = [1, 1]} : vector<16x512xf32> to vector<1x512xf32>
    %159 = vector.broadcast %158 : vector<1x512xf32> to vector<8x512xf32>
    %160 = arith.mulf %46, %159 : vector<8x512xf32>
    %161 = arith.addf %157, %160 : vector<8x512xf32>
    %162 = tpu.concatenate %143, %161, %143 in 1 : vector<8x64xf32>, vector<8x512xf32>, vector<8x64xf32> -> vector<8x640xf32>
    %163 = tpu.concatenate %144, %162, %144 in 0 : vector<1x640xf32>, vector<8x640xf32>, vector<1x640xf32> -> vector<10x640xf32>
    %164 = vector.extract_strided_slice %163 {offsets = [0, 0], sizes = [8, 640], strides = [1, 1]} : vector<10x640xf32> to vector<8x640xf32>
    %165 = vector.extract_strided_slice %163 {offsets = [1, 0], sizes = [8, 640], strides = [1, 1]} : vector<10x640xf32> to vector<8x640xf32>
    %166 = vector.extract_strided_slice %163 {offsets = [2, 0], sizes = [8, 640], strides = [1, 1]} : vector<10x640xf32> to vector<8x640xf32>
    %167 = tpu.concatenate %164, %165, %166 in 1 : vector<8x640xf32>, vector<8x640xf32>, vector<8x640xf32> -> vector<8x1920xf32>
    %cst_81 = arith.constant 0.000000e+00 : f32
    %168 = vector.broadcast %cst_81 : f32 to vector<8x512xf32>
    %169 = vector.extract_strided_slice %142 {offsets = [4, 0], sizes = [1, 512], strides = [1, 1]} : vector<16x512xf32> to vector<1x512xf32>
    %170 = vector.broadcast %169 : vector<1x512xf32> to vector<8x512xf32>
    %171 = arith.mulf %43, %170 : vector<8x512xf32>
    %172 = arith.addf %168, %171 : vector<8x512xf32>
    %173 = vector.extract_strided_slice %142 {offsets = [5, 0], sizes = [1, 512], strides = [1, 1]} : vector<16x512xf32> to vector<1x512xf32>
    %174 = vector.broadcast %173 : vector<1x512xf32> to vector<8x512xf32>
    %175 = arith.mulf %44, %174 : vector<8x512xf32>
    %176 = arith.addf %172, %175 : vector<8x512xf32>
    %177 = vector.extract_strided_slice %142 {offsets = [6, 0], sizes = [1, 512], strides = [1, 1]} : vector<16x512xf32> to vector<1x512xf32>
    %178 = vector.broadcast %177 : vector<1x512xf32> to vector<8x512xf32>
    %179 = arith.mulf %45, %178 : vector<8x512xf32>
    %180 = arith.addf %176, %179 : vector<8x512xf32>
    %181 = vector.extract_strided_slice %142 {offsets = [7, 0], sizes = [1, 512], strides = [1, 1]} : vector<16x512xf32> to vector<1x512xf32>
    %182 = vector.broadcast %181 : vector<1x512xf32> to vector<8x512xf32>
    %183 = arith.mulf %46, %182 : vector<8x512xf32>
    %184 = arith.addf %180, %183 : vector<8x512xf32>
    %185 = tpu.concatenate %143, %184, %143 in 1 : vector<8x64xf32>, vector<8x512xf32>, vector<8x64xf32> -> vector<8x640xf32>
    %186 = tpu.concatenate %144, %185, %144 in 0 : vector<1x640xf32>, vector<8x640xf32>, vector<1x640xf32> -> vector<10x640xf32>
    %187 = vector.extract_strided_slice %186 {offsets = [0, 0], sizes = [8, 640], strides = [1, 1]} : vector<10x640xf32> to vector<8x640xf32>
    %188 = vector.extract_strided_slice %186 {offsets = [1, 0], sizes = [8, 640], strides = [1, 1]} : vector<10x640xf32> to vector<8x640xf32>
    %189 = vector.extract_strided_slice %186 {offsets = [2, 0], sizes = [8, 640], strides = [1, 1]} : vector<10x640xf32> to vector<8x640xf32>
    %190 = tpu.concatenate %187, %188, %189 in 1 : vector<8x640xf32>, vector<8x640xf32>, vector<8x640xf32> -> vector<8x1920xf32>
    %cst_82 = arith.constant 0.000000e+00 : f32
    %191 = vector.broadcast %cst_82 : f32 to vector<8x512xf32>
    %192 = vector.extract_strided_slice %142 {offsets = [8, 0], sizes = [1, 512], strides = [1, 1]} : vector<16x512xf32> to vector<1x512xf32>
    %193 = vector.broadcast %192 : vector<1x512xf32> to vector<8x512xf32>
    %194 = arith.mulf %43, %193 : vector<8x512xf32>
    %195 = arith.addf %191, %194 : vector<8x512xf32>
    %196 = vector.extract_strided_slice %142 {offsets = [9, 0], sizes = [1, 512], strides = [1, 1]} : vector<16x512xf32> to vector<1x512xf32>
    %197 = vector.broadcast %196 : vector<1x512xf32> to vector<8x512xf32>
    %198 = arith.mulf %44, %197 : vector<8x512xf32>
    %199 = arith.addf %195, %198 : vector<8x512xf32>
    %200 = vector.extract_strided_slice %142 {offsets = [10, 0], sizes = [1, 512], strides = [1, 1]} : vector<16x512xf32> to vector<1x512xf32>
    %201 = vector.broadcast %200 : vector<1x512xf32> to vector<8x512xf32>
    %202 = arith.mulf %45, %201 : vector<8x512xf32>
    %203 = arith.addf %199, %202 : vector<8x512xf32>
    %204 = vector.extract_strided_slice %142 {offsets = [11, 0], sizes = [1, 512], strides = [1, 1]} : vector<16x512xf32> to vector<1x512xf32>
    %205 = vector.broadcast %204 : vector<1x512xf32> to vector<8x512xf32>
    %206 = arith.mulf %46, %205 : vector<8x512xf32>
    %207 = arith.addf %203, %206 : vector<8x512xf32>
    %208 = tpu.concatenate %143, %207, %143 in 1 : vector<8x64xf32>, vector<8x512xf32>, vector<8x64xf32> -> vector<8x640xf32>
    %209 = tpu.concatenate %144, %208, %144 in 0 : vector<1x640xf32>, vector<8x640xf32>, vector<1x640xf32> -> vector<10x640xf32>
    %210 = vector.extract_strided_slice %209 {offsets = [0, 0], sizes = [8, 640], strides = [1, 1]} : vector<10x640xf32> to vector<8x640xf32>
    %211 = vector.extract_strided_slice %209 {offsets = [1, 0], sizes = [8, 640], strides = [1, 1]} : vector<10x640xf32> to vector<8x640xf32>
    %212 = vector.extract_strided_slice %209 {offsets = [2, 0], sizes = [8, 640], strides = [1, 1]} : vector<10x640xf32> to vector<8x640xf32>
    %213 = tpu.concatenate %210, %211, %212 in 1 : vector<8x640xf32>, vector<8x640xf32>, vector<8x640xf32> -> vector<8x1920xf32>
    %cst_83 = arith.constant 0.000000e+00 : f32
    %214 = vector.broadcast %cst_83 : f32 to vector<8x512xf32>
    %215 = vector.extract_strided_slice %142 {offsets = [12, 0], sizes = [1, 512], strides = [1, 1]} : vector<16x512xf32> to vector<1x512xf32>
    %216 = vector.broadcast %215 : vector<1x512xf32> to vector<8x512xf32>
    %217 = arith.mulf %43, %216 : vector<8x512xf32>
    %218 = arith.addf %214, %217 : vector<8x512xf32>
    %219 = vector.extract_strided_slice %142 {offsets = [13, 0], sizes = [1, 512], strides = [1, 1]} : vector<16x512xf32> to vector<1x512xf32>
    %220 = vector.broadcast %219 : vector<1x512xf32> to vector<8x512xf32>
    %221 = arith.mulf %44, %220 : vector<8x512xf32>
    %222 = arith.addf %218, %221 : vector<8x512xf32>
    %223 = vector.extract_strided_slice %142 {offsets = [14, 0], sizes = [1, 512], strides = [1, 1]} : vector<16x512xf32> to vector<1x512xf32>
    %224 = vector.broadcast %223 : vector<1x512xf32> to vector<8x512xf32>
    %225 = arith.mulf %45, %224 : vector<8x512xf32>
    %226 = arith.addf %222, %225 : vector<8x512xf32>
    %227 = vector.extract_strided_slice %142 {offsets = [15, 0], sizes = [1, 512], strides = [1, 1]} : vector<16x512xf32> to vector<1x512xf32>
    %228 = vector.broadcast %227 : vector<1x512xf32> to vector<8x512xf32>
    %229 = arith.mulf %46, %228 : vector<8x512xf32>
    %230 = arith.addf %226, %229 : vector<8x512xf32>
    %231 = tpu.concatenate %143, %230, %143 in 1 : vector<8x64xf32>, vector<8x512xf32>, vector<8x64xf32> -> vector<8x640xf32>
    %232 = tpu.concatenate %144, %231, %144 in 0 : vector<1x640xf32>, vector<8x640xf32>, vector<1x640xf32> -> vector<10x640xf32>
    %233 = vector.extract_strided_slice %232 {offsets = [0, 0], sizes = [8, 640], strides = [1, 1]} : vector<10x640xf32> to vector<8x640xf32>
    %234 = vector.extract_strided_slice %232 {offsets = [1, 0], sizes = [8, 640], strides = [1, 1]} : vector<10x640xf32> to vector<8x640xf32>
    %235 = vector.extract_strided_slice %232 {offsets = [2, 0], sizes = [8, 640], strides = [1, 1]} : vector<10x640xf32> to vector<8x640xf32>
    %236 = tpu.concatenate %233, %234, %235 in 1 : vector<8x640xf32>, vector<8x640xf32>, vector<8x640xf32> -> vector<8x1920xf32>
    %237 = tpu.concatenate %167, %190, %213, %236 in 0 : vector<8x1920xf32>, vector<8x1920xf32>, vector<8x1920xf32>, vector<8x1920xf32> -> vector<32x1920xf32>
    %238 = arith.truncf %237 : vector<32x1920xf32> to vector<32x1920xbf16>
    %cst_84 = arith.constant dense<0.000000e+00> : vector<32x64xf32>
    %239 = tpu.matmul %238, %1, %cst_84 {dimension_numbers = #tpu.dot_dimension_numbers<[1], [0], [0], [1], [0, 0, 1, 1], [], []>} : vector<32x1920xbf16>, vector<1920x64xbf16>, vector<32x64xf32> -> vector<32x64xf32>
    %c0_85 = arith.constant 0 : index
    %c0_86 = arith.constant 0 : index
    %c0_87 = arith.constant 0 : index
    %240 = vector.load %arg6[%c0_85, %c0_86, %c0_87] : memref<1x32x64xf32, #tpu.memory_space<vmem>>, vector<1x32x64xf32>
    %241 = vector.shape_cast %240 : vector<1x32x64xf32> to vector<32x64xf32>
    %242 = vector.shape_cast %239 : vector<32x64xf32> to vector<1x32x64xf32>
    tpu.vector_store %arg6[%c0_85, %c0_86, %c0_87], %242 {strides = array<i32>} : memref<1x32x64xf32, #tpu.memory_space<vmem>>, vector<1x32x64xf32>,
    return
  }
  func.func @transform_0(%arg0: i32) -> (i32, i32, i32, i32) {
    %c0_i32 = arith.constant 0 : i32
    %c0_i32_0 = arith.constant 0 : i32
    %c0_i32_1 = arith.constant 0 : i32
    %c0_i32_2 = arith.constant 0 : i32
    return %arg0, %c0_i32, %c0_i32_0, %c0_i32_1 : i32, i32, i32, i32
  }
  func.func @transform_1(%arg0: i32) -> (i32, i32) {
    %c0_i32 = arith.constant 0 : i32
    %c0_i32_0 = arith.constant 0 : i32
    %c0_i32_1 = arith.constant 0 : i32
    return %c0_i32, %c0_i32_0 : i32, i32
  }
  func.func @transform_2(%arg0: i32) -> (i32, i32) {
    %c0_i32 = arith.constant 0 : i32
    %c0_i32_0 = arith.constant 0 : i32
    %c0_i32_1 = arith.constant 0 : i32
    return %c0_i32, %c0_i32_0 : i32, i32
  }
  func.func @transform_3(%arg0: i32) -> (i32, i32) {
    %c0_i32 = arith.constant 0 : i32
    %c0_i32_0 = arith.constant 0 : i32
    %c0_i32_1 = arith.constant 0 : i32
    return %c0_i32, %c0_i32_0 : i32, i32
  }
  func.func @transform_4(%arg0: i32) -> (i32, i32) {
    %c0_i32 = arith.constant 0 : i32
    %c0_i32_0 = arith.constant 0 : i32
    %c0_i32_1 = arith.constant 0 : i32
    return %c0_i32, %c0_i32_0 : i32, i32
  }
  func.func @transform_5(%arg0: i32) -> (i32, i32, i32) {
    %c0_i32 = arith.constant 0 : i32
    %c0_i32_0 = arith.constant 0 : i32
    %c0_i32_1 = arith.constant 0 : i32
    return %arg0, %c0_i32, %c0_i32_0 : i32, i32, i32
  }
}

</mosaic_0001>

<llo_original>
// kernel: cnn_self_attention.1
$region0: #{cnn_self_attention.1}
  #allocation0 [shape = 'u32[]', space=smem, size = 0x4, offset = 0x4, fixed_abs, tag = 'smem constant byte address 0x4 - core index']
  #allocation1 [shape = 'u32[144,128]{1,0:T(1,128)}', space=vmem, size = 0x12000, scoped, tag = 'internal scratch']
  %s0 = inlined_call_operand.vmem [shape: f32[2,4,10,80], index: 0, kind: input, shape index: {}]
  %s1 = inlined_call_operand.vmem [shape: bf16[240,1536], index: 1, kind: input, shape index: {}]
  %s2 = inlined_call_operand.vmem [shape: bf16[1920,64], index: 2, kind: input, shape index: {}]
  %s3 = inlined_call_operand.vmem [shape: f32[512,8], index: 3, kind: input, shape index: {}]
  %s4 = inlined_call_operand.vmem [shape: f32[8,512], index: 4, kind: input, shape index: {}]
  %s5 = inlined_call_operand.vmem [shape: f32[2,32,64], index: 5, kind: output, shape index: {}]
  %s6 = sld [smem:[#allocation0]]
  $region53: #{cnn_self_attention.1} parent=0
    _
  %s8 = ssub.s32 1, %s6
  %s9 = scalar_select 0, %s8, %s6
  loop: start=0, step=1, limit=4
  $region2: #{cnn_self_attention.1} parent=0 // loop_pre_header
    _
  $region3: #{cnn_self_attention.1} parent=0 // loop_header
    %s11 = sphi 0, %s15
    %p12 = scmp.ge.s32.totalorder %s11, 4
    %s21 = sphi 0, %s23
    %s24 = sphi 0, %s21
    %s25 = sphi 0, %s24
    %s41 = sphi 0, %s25
    %s45 = sphi 0, %s45
    %s47 = sphi 0, %s45
    %s48 = sphi 0, %s47
    %s62 = sphi 0, %s48
    %s66 = sphi 0, %s66
    %s68 = sphi 0, %s66
    %s69 = sphi 0, %s68
    %s83 = sphi 0, %s69
    %s87 = sphi 0, %s87
    %s89 = sphi 0, %s87
    %s90 = sphi 0, %s89
    %s104 = sphi 0, %s90
    %s108 = sphi 0, %s108
    %s110 = sphi 0, %s108
    %s111 = sphi 0, %s110
    %s125 = sphi 0, %s111
    %s131 = sphi 0, %s133
    %s134 = sphi 0, %s131
    %s135 = sphi 0, %s134
    %s151 = sphi 0, %s135
  $region4: #{cnn_self_attention.1} parent=0 // loop_header_branch
    %14 = sbr.rel (%p12) target = $region8
  $region5: #{cnn_self_attention.1} parent=0 // loop_body
    %s16 = ssub.s32 %s11, 1
    %s17 = ssub.s32 %s11, 2
    %s18 = sadd.s32 %s11, 1
    %s19 = ssub.s32 %s11, %s18
    %p20 = scmp.eq.s32.totalorder %s19, 0
    %s22 = sadd.s32 %s21, 1
    %s23 = scalar_select %p20, %s21, %s22
    %p26 = pneg %p20
    %p27 = scmp.eq.s32.totalorder %s11, 1
    %p28 = por %p26, %p27
    %p29 = scmp.ne.s32.totalorder %s21, %s24
    %p30 = scmp.eq.s32.totalorder %s11, 0
    %p31 = por %p29, %p30
    %p32 = scmp.ne.s32.totalorder %s21, %s24
    %p33 = scmp.eq.s32.totalorder %s16, 1
    %p34 = por %p32, %p33
    %p35 = scmp.ne.s32.totalorder %s24, %s25
    %p36 = scmp.eq.s32.totalorder %s16, 0
    %p37 = por %p35, %p36
    %p38 = scmp.ne.s32.totalorder %s24, %s25
    %p39 = scmp.eq.s32.totalorder %s17, 1
    %p40 = por %p38, %p39
    %p42 = scmp.ne.s32.totalorder %s25, %s41
    %p43 = scmp.eq.s32.totalorder %s17, 0
    %p44 = por %p42, %p43
    %s46 = sadd.s32 %s45, 1
    %p49 = scmp.eq.s32.totalorder %s11, 1
    %p50 = scmp.ne.s32.totalorder %s45, %s47
    %p51 = scmp.eq.s32.totalorder %s11, 0
    %p52 = por %p50, %p51
    %p53 = scmp.ne.s32.totalorder %s45, %s47
    %p54 = scmp.eq.s32.totalorder %s16, 1
    %p55 = por %p53, %p54
    %p56 = scmp.ne.s32.totalorder %s47, %s48
    %p57 = scmp.eq.s32.totalorder %s16, 0
    %p58 = por %p56, %p57
    %p59 = scmp.ne.s32.totalorder %s47, %s48
    %p60 = scmp.eq.s32.totalorder %s17, 1
    %p61 = por %p59, %p60
    %p63 = scmp.ne.s32.totalorder %s48, %s62
    %p64 = scmp.eq.s32.totalorder %s17, 0
    %p65 = por %p63, %p64
    %s67 = sadd.s32 %s66, 1
    %p70 = scmp.eq.s32.totalorder %s11, 1
    %p71 = scmp.ne.s32.totalorder %s66, %s68
    %p72 = scmp.eq.s32.totalorder %s11, 0
    %p73 = por %p71, %p72
    %p74 = scmp.ne.s32.totalorder %s66, %s68
    %p75 = scmp.eq.s32.totalorder %s16, 1
    %p76 = por %p74, %p75
    %p77 = scmp.ne.s32.totalorder %s68, %s69
    %p78 = scmp.eq.s32.totalorder %s16, 0
    %p79 = por %p77, %p78
    %p80 = scmp.ne.s32.totalorder %s68, %s69
    %p81 = scmp.eq.s32.totalorder %s17, 1
    %p82 = por %p80, %p81
    %p84 = scmp.ne.s32.totalorder %s69, %s83
    %p85 = scmp.eq.s32.totalorder %s17, 0
    %p86 = por %p84, %p85
    %s88 = sadd.s32 %s87, 1
    %p91 = scmp.eq.s32.totalorder %s11, 1
    %p92 = scmp.ne.s32.totalorder %s87, %s89
    %p93 = scmp.eq.s32.totalorder %s11, 0
    %p94 = por %p92, %p93
    %p95 = scmp.ne.s32.totalorder %s87, %s89
    %p96 = scmp.eq.s32.totalorder %s16, 1
    %p97 = por %p95, %p96
    %p98 = scmp.ne.s32.totalorder %s89, %s90
    %p99 = scmp.eq.s32.totalorder %s16, 0
    %p100 = por %p98, %p99
    %p101 = scmp.ne.s32.totalorder %s89, %s90
    %p102 = scmp.eq.s32.totalorder %s17, 1
    %p103 = por %p101, %p102
    %p105 = scmp.ne.s32.totalorder %s90, %s104
    %p106 = scmp.eq.s32.totalorder %s17, 0
    %p107 = por %p105, %p106
    %s109 = sadd.s32 %s108, 1
    %p112 = scmp.eq.s32.totalorder %s11, 1
    %p113 = scmp.ne.s32.totalorder %s108, %s110
    %p114 = scmp.eq.s32.totalorder %s11, 0
    %p115 = por %p113, %p114
    %p116 = scmp.ne.s32.totalorder %s108, %s110
    %p117 = scmp.eq.s32.totalorder %s16, 1
    %p118 = por %p116, %p117
    %p119 = scmp.ne.s32.totalorder %s110, %s111
    %p120 = scmp.eq.s32.totalorder %s16, 0
    %p121 = por %p119, %p120
    %p122 = scmp.ne.s32.totalorder %s110, %s111
    %p123 = scmp.eq.s32.totalorder %s17, 1
    %p124 = por %p122, %p123
    %p126 = scmp.ne.s32.totalorder %s111, %s125
    %p127 = scmp.eq.s32.totalorder %s17, 0
    %p128 = por %p126, %p127
    %s129 = ssub.s32 %s11, %s18
    %p130 = scmp.eq.s32.totalorder %s129, 0
    %s132 = sadd.s32 %s131, 1
    %s133 = scalar_select %p130, %s131, %s132
    %p136 = pneg %p130
    %p137 = scmp.eq.s32.totalorder %s11, 1
    %p138 = por %p136, %p137
    %p139 = scmp.ne.s32.totalorder %s131, %s134
    %p140 = scmp.eq.s32.totalorder %s11, 0
    %p141 = por %p139, %p140
    %p142 = scmp.ne.s32.totalorder %s131, %s134
    %p143 = scmp.eq.s32.totalorder %s16, 1
    %p144 = por %p142, %p143
    %p145 = scmp.ne.s32.totalorder %s134, %s135
    %p146 = scmp.eq.s32.totalorder %s16, 0
    %p147 = por %p145, %p146
    %p148 = scmp.ne.s32.totalorder %s134, %s135
    %p149 = scmp.eq.s32.totalorder %s17, 1
    %p150 = por %p148, %p149
    %p152 = scmp.ne.s32.totalorder %s135, %s151
    %p153 = scmp.eq.s32.totalorder %s17, 0
    %p154 = por %p152, %p153
    %p155 = scmp.le.s32.totalorder 1, %s11
    %p156 = scmp.lt.s32.totalorder %s11, 3
    %p157 = pnand %p155, %p156
    %p158 = pneg %p157
    // Predicated region
    $region9: #{cnn_self_attention.1} parent=5 // pred_check
      _
    $region10: #{cnn_self_attention.1} parent=5 // pred_check_branch
      %160 = sbr.rel (%p157) target = $region12
    $region11: #{cnn_self_attention.1} parent=5 // pred_region
      %s161 = ssub.s32 %s11, 1
      // Predicated region
      $region13: #{cnn_self_attention.1} parent=11 // pred_check
        %p162 = pneg %p58
      $region14: #{cnn_self_attention.1} parent=11 // pred_check_branch
        %164 = sbr.rel (%p162) target = $region16
      $region15: #{cnn_self_attention.1} parent=11 // pred_region
        _
      $region16: #{cnn_self_attention.1} parent=11 // pred_fallthru
        _
      // Predicated region
      $region17: #{cnn_self_attention.1} parent=11 // pred_check
        %p165 = pneg %p79
      $region18: #{cnn_self_attention.1} parent=11 // pred_check_branch
        %167 = sbr.rel (%p165) target = $region20
      $region19: #{cnn_self_attention.1} parent=11 // pred_region
        _
      $region20: #{cnn_self_attention.1} parent=11 // pred_fallthru
        _
      // Predicated region
      $region21: #{cnn_self_attention.1} parent=11 // pred_check
        %p168 = pneg %p100
      $region22: #{cnn_self_attention.1} parent=11 // pred_check_branch
        %170 = sbr.rel (%p168) target = $region24
      $region23: #{cnn_self_attention.1} parent=11 // pred_region
        _
      $region24: #{cnn_self_attention.1} parent=11 // pred_fallthru
        _
      // Predicated region
      $region25: #{cnn_self_attention.1} parent=11 // pred_check
        %p171 = pneg %p121
      $region26: #{cnn_self_attention.1} parent=11 // pred_check_branch
        %173 = sbr.rel (%p171) target = $region28
      $region27: #{cnn_self_attention.1} parent=11 // pred_region
        _
      $region28: #{cnn_self_attention.1} parent=11 // pred_fallthru
        _
    $region12: #{cnn_self_attention.1} parent=5 // pred_fallthru
      _
    %p174 = scmp.lt.s32.totalorder %s11, 2
    // Predicated region
    $region29: #{cnn_self_attention.1} parent=5 // pred_check
      %p175 = pneg %p174
    $region30: #{cnn_self_attention.1} parent=5 // pred_check_branch
      %177 = sbr.rel (%p175) target = $region32
    $region31: #{cnn_self_attention.1} parent=5 // pred_region
      // Predicated region
      $region33: #{cnn_self_attention.1} parent=31 // pred_check
        %p178 = pneg %p31
      $region34: #{cnn_self_attention.1} parent=31 // pred_check_branch
        %180 = sbr.rel (%p178) target = $region36
      $region35: #{cnn_self_attention.1} parent=31 // pred_region
        %p181 = scmp.lt.s32.totalorder %s11, 1
        %s182 = scalar_select %p181, %s11, 1
        %s183 = smul.addr %s182, 8
        %s184 = smul.addr %s183, 8
        %s185 = scalar_lea.vmem %s0, %s184
      $region36: #{cnn_self_attention.1} parent=31 // pred_fallthru
        _
    $region32: #{cnn_self_attention.1} parent=5 // pred_fallthru
      _
    %p186 = scmp.le.s32.totalorder 1, %s11
    %p187 = scmp.lt.s32.totalorder %s11, 3
    %p188 = pnand %p186, %p187
    %p189 = pneg %p188
    // Predicated region
    $region37: #{cnn_self_attention.1} parent=5 // pred_check
      _
    $region38: #{cnn_self_attention.1} parent=5 // pred_check_branch
      %191 = sbr.rel (%p188) target = $region40
    $region39: #{cnn_self_attention.1} parent=5 // pred_region
      %s192 = ssub.s32 %s11, 1
      %p193 = scmp.lt.s32.totalorder %s16, 1
      %s194 = scalar_select %p193, %s16, 1
      %s195 = smul.addr %s194, 8
      %s196 = smul.addr %s195, 8
      %s197 = scalar_lea.vmem %s0, %s196
      %p198 = pneg %p37
      %p199 = pneg %p34
      %p200 = pneg %p58
      %p201 = pneg %p55
      %p202 = pneg %p79
      %p203 = pneg %p76
      %p204 = pneg %p100
      %p205 = pneg %p97
      %p206 = pneg %p121
      %p207 = pneg %p118
      %p208 = pneg %p147
      %p209 = pneg %p144
      %p210 = scmp.lt.s32.totalorder %s16, 1
      %s211 = scalar_select %p210, %s16, 1
      %s212 = smul.addr %s211, 4
      %s213 = smul.addr %s212, 8
      %s214 = scalar_lea.vmem %s5, %s213
      %p215 = scmp.lt.s32.totalorder %s16, 1
      %s216 = scalar_select %p215, %s16, 1
      %s217 = smul.addr %s216, 8
      %s218 = smul.addr %s217, 8
      %s219 = scalar_lea.vmem %s0, %s218
      %p220 = scmp.lt.s32.totalorder %s16, 1
      %s221 = scalar_select %p220, %s16, 1
      %s222 = smul.addr %s221, 4
      %s223 = smul.addr %s222, 8
      %s224 = scalar_lea.vmem %s5, %s223
      %v226 = vld [vmem:[%s1] sm:$0xff]
      %v227 = vld [vmem:[%s1 + $0x8] sm:$0xff]
      %v228 = vld [vmem:[%s1 + $0x10] sm:$0xff]
      %v229 = vld [vmem:[%s1 + $0x18] sm:$0xff]
      %v230 = vld [vmem:[%s1 + $0x20] sm:$0xff]
      %v231 = vld [vmem:[%s1 + $0x28] sm:$0xff]
      %v232 = vld [vmem:[%s1 + $0x30] sm:$0xff]
      %v233 = vld [vmem:[%s1 + $0x38] sm:$0xff]
      %v234 = vld [vmem:[%s1 + $0x40] sm:$0xff]
      %v235 = vld [vmem:[%s1 + $0x48] sm:$0xff]
      %v236 = vld [vmem:[%s1 + $0x50] sm:$0xff]
      %v237 = vld [vmem:[%s1 + $0x58] sm:$0xff]
      %v238 = vld [vmem:[%s1 + $0x60] sm:$0xff]
      %v239 = vld [vmem:[%s1 + $0x68] sm:$0xff]
      %v240 = vld [vmem:[%s1 + $0x70] sm:$0xff]
      %v241 = vld [vmem:[%s1 + $0x78] sm:$0xff]
      %v242 = vld [vmem:[%s1 + $0x80] sm:$0xff]
      %v243 = vld [vmem:[%s1 + $0x88] sm:$0xff]
      %v244 = vld [vmem:[%s1 + $0x90] sm:$0xff]
      %v245 = vld [vmem:[%s1 + $0x98] sm:$0xff]
      %v246 = vld [vmem:[%s1 + $0xa0] sm:$0xff]
      %v247 = vld [vmem:[%s1 + $0xa8] sm:$0xff]
      %v248 = vld [vmem:[%s1 + $0xb0] sm:$0xff]
      %v249 = vld [vmem:[%s1 + $0xb8] sm:$0xff]
      %v250 = vld [vmem:[%s1 + $0xc0] sm:$0xff]
      %v251 = vld [vmem:[%s1 + $0xc8] sm:$0xff]
      %v252 = vld [vmem:[%s1 + $0xd0] sm:$0xff]
      %v253 = vld [vmem:[%s1 + $0xd8] sm:$0xff]
      %v254 = vld [vmem:[%s1 + $0xe0] sm:$0xff]
      %v255 = vld [vmem:[%s1 + $0xe8] sm:$0xff]
      %v256 = vld [vmem:[%s1 + $0xf0] sm:$0xff]
      %v257 = vld [vmem:[%s1 + $0xf8] sm:$0xff]
      %v258 = vld [vmem:[%s1 + $0x100] sm:$0xff]
      %v259 = vld [vmem:[%s1 + $0x108] sm:$0xff]
      %v260 = vld [vmem:[%s1 + $0x110] sm:$0xff]
      %v261 = vld [vmem:[%s1 + $0x118] sm:$0xff]
      %v262 = vld [vmem:[%s1 + $0x120] sm:$0xff]
      %v263 = vld [vmem:[%s1 + $0x128] sm:$0xff]
      %v264 = vld [vmem:[%s1 + $0x130] sm:$0xff]
      %v265 = vld [vmem:[%s1 + $0x138] sm:$0xff]
      %v266 = vld [vmem:[%s1 + $0x140] sm:$0xff]
      %v267 = vld [vmem:[%s1 + $0x148] sm:$0xff]
      %v268 = vld [vmem:[%s1 + $0x150] sm:$0xff]
      %v269 = vld [vmem:[%s1 + $0x158] sm:$0xff]
      %v270 = vld [vmem:[%s1 + $0x160] sm:$0xff]
      %v271 = vld [vmem:[%s1 + $0x168] sm:$0xff]
      %v272 = vld [vmem:[%s1 + $0x170] sm:$0xff]
      %v273 = vld [vmem:[%s1 + $0x178] sm:$0xff]
      %v274 = vld [vmem:[%s1 + $0x180] sm:$0xff]
      %v275 = vld [vmem:[%s1 + $0x188] sm:$0xff]
      %v276 = vld [vmem:[%s1 + $0x190] sm:$0xff]
      %v277 = vld [vmem:[%s1 + $0x198] sm:$0xff]
      %v278 = vld [vmem:[%s1 + $0x1a0] sm:$0xff]
      %v279 = vld [vmem:[%s1 + $0x1a8] sm:$0xff]
      %v280 = vld [vmem:[%s1 + $0x1b0] sm:$0xff]
      %v281 = vld [vmem:[%s1 + $0x1b8] sm:$0xff]
      %v282 = vld [vmem:[%s1 + $0x1c0] sm:$0xff]
      %v283 = vld [vmem:[%s1 + $0x1c8] sm:$0xff]
      %v284 = vld [vmem:[%s1 + $0x1d0] sm:$0xff]
      %v285 = vld [vmem:[%s1 + $0x1d8] sm:$0xff]
      %v286 = vld [vmem:[%s1 + $0x1e0] sm:$0xff]
      %v287 = vld [vmem:[%s1 + $0x1e8] sm:$0xff]
      %v288 = vld [vmem:[%s1 + $0x1f0] sm:$0xff]
      %v289 = vld [vmem:[%s1 + $0x1f8] sm:$0xff]
      %v290 = vld [vmem:[%s1 + $0x200] sm:$0xff]
      %v291 = vld [vmem:[%s1 + $0x208] sm:$0xff]
      %v292 = vld [vmem:[%s1 + $0x210] sm:$0xff]
      %v293 = vld [vmem:[%s1 + $0x218] sm:$0xff]
      %v294 = vld [vmem:[%s1 + $0x220] sm:$0xff]
      %v295 = vld [vmem:[%s1 + $0x228] sm:$0xff]
      %v296 = vld [vmem:[%s1 + $0x230] sm:$0xff]
      %v297 = vld [vmem:[%s1 + $0x238] sm:$0xff]
      %v298 = vld [vmem:[%s1 + $0x240] sm:$0xff]
      %v299 = vld [vmem:[%s1 + $0x248] sm:$0xff]
      %v300 = vld [vmem:[%s1 + $0x250] sm:$0xff]
      %v301 = vld [vmem:[%s1 + $0x258] sm:$0xff]
      %v302 = vld [vmem:[%s1 + $0x260] sm:$0xff]
      %v303 = vld [vmem:[%s1 + $0x268] sm:$0xff]
      %v304 = vld [vmem:[%s1 + $0x270] sm:$0xff]
      %v305 = vld [vmem:[%s1 + $0x278] sm:$0xff]
      %v306 = vld [vmem:[%s1 + $0x280] sm:$0xff]
      %v307 = vld [vmem:[%s1 + $0x288] sm:$0xff]
      %v308 = vld [vmem:[%s1 + $0x290] sm:$0xff]
      %v309 = vld [vmem:[%s1 + $0x298] sm:$0xff]
      %v310 = vld [vmem:[%s1 + $0x2a0] sm:$0xff]
      %v311 = vld [vmem:[%s1 + $0x2a8] sm:$0xff]
      %v312 = vld [vmem:[%s1 + $0x2b0] sm:$0xff]
      %v313 = vld [vmem:[%s1 + $0x2b8] sm:$0xff]
      %v314 = vld [vmem:[%s1 + $0x2c0] sm:$0xff]
      %v315 = vld [vmem:[%s1 + $0x2c8] sm:$0xff]
      %v316 = vld [vmem:[%s1 + $0x2d0] sm:$0xff]
      %v317 = vld [vmem:[%s1 + $0x2d8] sm:$0xff]
      %v318 = vld [vmem:[%s1 + $0x2e0] sm:$0xff]
      %v319 = vld [vmem:[%s1 + $0x2e8] sm:$0xff]
      %v320 = vld [vmem:[%s1 + $0x2f0] sm:$0xff]
      %v321 = vld [vmem:[%s1 + $0x2f8] sm:$0xff]
      %v322 = vld [vmem:[%s1 + $0x300] sm:$0xff]
      %v323 = vld [vmem:[%s1 + $0x308] sm:$0xff]
      %v324 = vld [vmem:[%s1 + $0x310] sm:$0xff]
      %v325 = vld [vmem:[%s1 + $0x318] sm:$0xff]
      %v326 = vld [vmem:[%s1 + $0x320] sm:$0xff]
      %v327 = vld [vmem:[%s1 + $0x328] sm:$0xff]
      %v328 = vld [vmem:[%s1 + $0x330] sm:$0xff]
      %v329 = vld [vmem:[%s1 + $0x338] sm:$0xff]
      %v330 = vld [vmem:[%s1 + $0x340] sm:$0xff]
      %v331 = vld [vmem:[%s1 + $0x348] sm:$0xff]
      %v332 = vld [vmem:[%s1 + $0x350] sm:$0xff]
      %v333 = vld [vmem:[%s1 + $0x358] sm:$0xff]
      %v334 = vld [vmem:[%s1 + $0x360] sm:$0xff]
      %v335 = vld [vmem:[%s1 + $0x368] sm:$0xff]
      %v336 = vld [vmem:[%s1 + $0x370] sm:$0xff]
      %v337 = vld [vmem:[%s1 + $0x378] sm:$0xff]
      %v338 = vld [vmem:[%s1 + $0x380] sm:$0xff]
      %v339 = vld [vmem:[%s1 + $0x388] sm:$0xff]
      %v340 = vld [vmem:[%s1 + $0x390] sm:$0xff]
      %v341 = vld [vmem:[%s1 + $0x398] sm:$0xff]
      %v342 = vld [vmem:[%s1 + $0x3a0] sm:$0xff]
      %v343 = vld [vmem:[%s1 + $0x3a8] sm:$0xff]
      %v344 = vld [vmem:[%s1 + $0x3b0] sm:$0xff]
      %v345 = vld [vmem:[%s1 + $0x3b8] sm:$0xff]
      %v346 = vld [vmem:[%s1 + $0x3c0] sm:$0xff]
      %v347 = vld [vmem:[%s1 + $0x3c8] sm:$0xff]
      %v348 = vld [vmem:[%s1 + $0x3d0] sm:$0xff]
      %v349 = vld [vmem:[%s1 + $0x3d8] sm:$0xff]
      %v350 = vld [vmem:[%s1 + $0x3e0] sm:$0xff]
      %v351 = vld [vmem:[%s1 + $0x3e8] sm:$0xff]
      %v352 = vld [vmem:[%s1 + $0x3f0] sm:$0xff]
      %v353 = vld [vmem:[%s1 + $0x3f8] sm:$0xff]
      %v354 = vld [vmem:[%s1 + $0x400] sm:$0xff]
      %v355 = vld [vmem:[%s1 + $0x408] sm:$0xff]
      %v356 = vld [vmem:[%s1 + $0x410] sm:$0xff]
      %v357 = vld [vmem:[%s1 + $0x418] sm:$0xff]
      %v358 = vld [vmem:[%s1 + $0x420] sm:$0xff]
      %v359 = vld [vmem:[%s1 + $0x428] sm:$0xff]
      %v360 = vld [vmem:[%s1 + $0x430] sm:$0xff]
      %v361 = vld [vmem:[%s1 + $0x438] sm:$0xff]
      %v362 = vld [vmem:[%s1 + $0x440] sm:$0xff]
      %v363 = vld [vmem:[%s1 + $0x448] sm:$0xff]
      %v364 = vld [vmem:[%s1 + $0x450] sm:$0xff]
      %v365 = vld [vmem:[%s1 + $0x458] sm:$0xff]
      %v366 = vld [vmem:[%s1 + $0x460] sm:$0xff]
      %v367 = vld [vmem:[%s1 + $0x468] sm:$0xff]
      %v368 = vld [vmem:[%s1 + $0x470] sm:$0xff]
      %v369 = vld [vmem:[%s1 + $0x478] sm:$0xff]
      %v370 = vld [vmem:[%s1 + $0x480] sm:$0xff]
      %v371 = vld [vmem:[%s1 + $0x488] sm:$0xff]
      %v372 = vld [vmem:[%s1 + $0x490] sm:$0xff]
      %v373 = vld [vmem:[%s1 + $0x498] sm:$0xff]
      %v374 = vld [vmem:[%s1 + $0x4a0] sm:$0xff]
      %v375 = vld [vmem:[%s1 + $0x4a8] sm:$0xff]
      %v376 = vld [vmem:[%s1 + $0x4b0] sm:$0xff]
      %v377 = vld [vmem:[%s1 + $0x4b8] sm:$0xff]
      %v378 = vld [vmem:[%s1 + $0x4c0] sm:$0xff]
      %v379 = vld [vmem:[%s1 + $0x4c8] sm:$0xff]
      %v380 = vld [vmem:[%s1 + $0x4d0] sm:$0xff]
      %v381 = vld [vmem:[%s1 + $0x4d8] sm:$0xff]
      %v382 = vld [vmem:[%s1 + $0x4e0] sm:$0xff]
      %v383 = vld [vmem:[%s1 + $0x4e8] sm:$0xff]
      %v384 = vld [vmem:[%s1 + $0x4f0] sm:$0xff]
      %v385 = vld [vmem:[%s1 + $0x4f8] sm:$0xff]
      %v386 = vld [vmem:[%s1 + $0x500] sm:$0xff]
      %v387 = vld [vmem:[%s1 + $0x508] sm:$0xff]
      %v388 = vld [vmem:[%s1 + $0x510] sm:$0xff]
      %v389 = vld [vmem:[%s1 + $0x518] sm:$0xff]
      %v390 = vld [vmem:[%s1 + $0x520] sm:$0xff]
      %v391 = vld [vmem:[%s1 + $0x528] sm:$0xff]
      %v392 = vld [vmem:[%s1 + $0x530] sm:$0xff]
      %v393 = vld [vmem:[%s1 + $0x538] sm:$0xff]
      %v394 = vld [vmem:[%s1 + $0x540] sm:$0xff]
      %v395 = vld [vmem:[%s1 + $0x548] sm:$0xff]
      %v396 = vld [vmem:[%s1 + $0x550] sm:$0xff]
      %v397 = vld [vmem:[%s1 + $0x558] sm:$0xff]
      %v398 = vld [vmem:[%s1 + $0x560] sm:$0xff]
      %v399 = vld [vmem:[%s1 + $0x568] sm:$0xff]
      %v400 = vld [vmem:[%s1 + $0x570] sm:$0xff]
      %v401 = vld [vmem:[%s1 + $0x578] sm:$0xff]
      %v402 = vld [vmem:[%s1 + $0x580] sm:$0xff]
      %v403 = vld [vmem:[%s1 + $0x588] sm:$0xff]
      %v404 = vld [vmem:[%s1 + $0x590] sm:$0xff]
      %v405 = vld [vmem:[%s1 + $0x598] sm:$0xff]
      %v406 = vld [vmem:[%s2] sm:$0xf]
      %v407 = vld [vmem:[%s2 + $0x4] sm:$0xf]
      %v408 = vld [vmem:[%s2 + $0x8] sm:$0xf]
      %v409 = vld [vmem:[%s2 + $0xc] sm:$0xf]
      %v410 = vld [vmem:[%s2 + $0x10] sm:$0xf]
      %v411 = vld [vmem:[%s2 + $0x14] sm:$0xf]
      %v412 = vld [vmem:[%s2 + $0x18] sm:$0xf]
      %v413 = vld [vmem:[%s2 + $0x1c] sm:$0xf]
      %v414 = vld [vmem:[%s2 + $0x20] sm:$0xf]
      %v415 = vld [vmem:[%s2 + $0x24] sm:$0xf]
      %v416 = vld [vmem:[%s2 + $0x28] sm:$0xf]
      %v417 = vld [vmem:[%s2 + $0x2c] sm:$0xf]
      %v418 = vld [vmem:[%s2 + $0x30] sm:$0xf]
      %v419 = vld [vmem:[%s2 + $0x34] sm:$0xf]
      %v420 = vld [vmem:[%s2 + $0x38] sm:$0xf]
      %v421 = vld [vmem:[%s2 + $0x3c] sm:$0xf]
      %v422 = vld [vmem:[%s2 + $0x40] sm:$0xf]
      %v423 = vld [vmem:[%s2 + $0x44] sm:$0xf]
      %v424 = vld [vmem:[%s2 + $0x48] sm:$0xf]
      %v425 = vld [vmem:[%s2 + $0x4c] sm:$0xf]
      %v426 = vld [vmem:[%s2 + $0x50] sm:$0xf]
      %v427 = vld [vmem:[%s2 + $0x54] sm:$0xf]
      %v428 = vld [vmem:[%s2 + $0x58] sm:$0xf]
      %v429 = vld [vmem:[%s2 + $0x5c] sm:$0xf]
      %v430 = vld [vmem:[%s2 + $0x60] sm:$0xf]
      %v431 = vld [vmem:[%s2 + $0x64] sm:$0xf]
      %v432 = vld [vmem:[%s2 + $0x68] sm:$0xf]
      %v433 = vld [vmem:[%s2 + $0x6c] sm:$0xf]
      %v434 = vld [vmem:[%s2 + $0x70] sm:$0xf]
      %v435 = vld [vmem:[%s2 + $0x74] sm:$0xf]
      %v436 = vld [vmem:[%s2 + $0x78] sm:$0xf]
      %v437 = vld [vmem:[%s2 + $0x7c] sm:$0xf]
      %v438 = vld [vmem:[%s2 + $0x80] sm:$0xf]
      %v439 = vld [vmem:[%s2 + $0x84] sm:$0xf]
      %v440 = vld [vmem:[%s2 + $0x88] sm:$0xf]
      %v441 = vld [vmem:[%s2 + $0x8c] sm:$0xf]
      %v442 = vld [vmem:[%s2 + $0x90] sm:$0xf]
      %v443 = vld [vmem:[%s2 + $0x94] sm:$0xf]
      %v444 = vld [vmem:[%s2 + $0x98] sm:$0xf]
      %v445 = vld [vmem:[%s2 + $0x9c] sm:$0xf]
      %v446 = vld [vmem:[%s2 + $0xa0] sm:$0xf]
      %v447 = vld [vmem:[%s2 + $0xa4] sm:$0xf]
      %v448 = vld [vmem:[%s2 + $0xa8] sm:$0xf]
      %v449 = vld [vmem:[%s2 + $0xac] sm:$0xf]
      %v450 = vld [vmem:[%s2 + $0xb0] sm:$0xf]
      %v451 = vld [vmem:[%s2 + $0xb4] sm:$0xf]
      %v452 = vld [vmem:[%s2 + $0xb8] sm:$0xf]
      %v453 = vld [vmem:[%s2 + $0xbc] sm:$0xf]
      %v454 = vld [vmem:[%s2 + $0xc0] sm:$0xf]
      %v455 = vld [vmem:[%s2 + $0xc4] sm:$0xf]
      %v456 = vld [vmem:[%s2 + $0xc8] sm:$0xf]
      %v457 = vld [vmem:[%s2 + $0xcc] sm:$0xf]
      %v458 = vld [vmem:[%s2 + $0xd0] sm:$0xf]
      %v459 = vld [vmem:[%s2 + $0xd4] sm:$0xf]
      %v460 = vld [vmem:[%s2 + $0xd8] sm:$0xf]
      %v461 = vld [vmem:[%s2 + $0xdc] sm:$0xf]
      %v462 = vld [vmem:[%s2 + $0xe0] sm:$0xf]
      %v463 = vld [vmem:[%s2 + $0xe4] sm:$0xf]
      %v464 = vld [vmem:[%s2 + $0xe8] sm:$0xf]
      %v465 = vld [vmem:[%s2 + $0xec] sm:$0xf]
      %v466 = vld [vmem:[%s2 + $0xf0] sm:$0xf]
      %v467 = vld [vmem:[%s2 + $0xf4] sm:$0xf]
      %v468 = vld [vmem:[%s2 + $0xf8] sm:$0xf]
      %v469 = vld [vmem:[%s2 + $0xfc] sm:$0xf]
      %v470 = vld [vmem:[%s2 + $0x100] sm:$0xf]
      %v471 = vld [vmem:[%s2 + $0x104] sm:$0xf]
      %v472 = vld [vmem:[%s2 + $0x108] sm:$0xf]
      %v473 = vld [vmem:[%s2 + $0x10c] sm:$0xf]
      %v474 = vld [vmem:[%s2 + $0x110] sm:$0xf]
      %v475 = vld [vmem:[%s2 + $0x114] sm:$0xf]
      %v476 = vld [vmem:[%s2 + $0x118] sm:$0xf]
      %v477 = vld [vmem:[%s2 + $0x11c] sm:$0xf]
      %v478 = vld [vmem:[%s2 + $0x120] sm:$0xf]
      %v479 = vld [vmem:[%s2 + $0x124] sm:$0xf]
      %v480 = vld [vmem:[%s2 + $0x128] sm:$0xf]
      %v481 = vld [vmem:[%s2 + $0x12c] sm:$0xf]
      %v482 = vld [vmem:[%s2 + $0x130] sm:$0xf]
      %v483 = vld [vmem:[%s2 + $0x134] sm:$0xf]
      %v484 = vld [vmem:[%s2 + $0x138] sm:$0xf]
      %v485 = vld [vmem:[%s2 + $0x13c] sm:$0xf]
      %v486 = vld [vmem:[%s2 + $0x140] sm:$0xf]
      %v487 = vld [vmem:[%s2 + $0x144] sm:$0xf]
      %v488 = vld [vmem:[%s2 + $0x148] sm:$0xf]
      %v489 = vld [vmem:[%s2 + $0x14c] sm:$0xf]
      %v490 = vld [vmem:[%s2 + $0x150] sm:$0xf]
      %v491 = vld [vmem:[%s2 + $0x154] sm:$0xf]
      %v492 = vld [vmem:[%s2 + $0x158] sm:$0xf]
      %v493 = vld [vmem:[%s2 + $0x15c] sm:$0xf]
      %v494 = vld [vmem:[%s2 + $0x160] sm:$0xf]
      %v495 = vld [vmem:[%s2 + $0x164] sm:$0xf]
      %v496 = vld [vmem:[%s2 + $0x168] sm:$0xf]
      %v497 = vld [vmem:[%s2 + $0x16c] sm:$0xf]
      %v498 = vld [vmem:[%s2 + $0x170] sm:$0xf]
      %v499 = vld [vmem:[%s2 + $0x174] sm:$0xf]
      %v500 = vld [vmem:[%s2 + $0x178] sm:$0xf]
      %v501 = vld [vmem:[%s2 + $0x17c] sm:$0xf]
      %v502 = vld [vmem:[%s2 + $0x180] sm:$0xf]
      %v503 = vld [vmem:[%s2 + $0x184] sm:$0xf]
      %v504 = vld [vmem:[%s2 + $0x188] sm:$0xf]
      %v505 = vld [vmem:[%s2 + $0x18c] sm:$0xf]
      %v506 = vld [vmem:[%s2 + $0x190] sm:$0xf]
      %v507 = vld [vmem:[%s2 + $0x194] sm:$0xf]
      %v508 = vld [vmem:[%s2 + $0x198] sm:$0xf]
      %v509 = vld [vmem:[%s2 + $0x19c] sm:$0xf]
      %v510 = vld [vmem:[%s2 + $0x1a0] sm:$0xf]
      %v511 = vld [vmem:[%s2 + $0x1a4] sm:$0xf]
      %v512 = vld [vmem:[%s2 + $0x1a8] sm:$0xf]
      %v513 = vld [vmem:[%s2 + $0x1ac] sm:$0xf]
      %v514 = vld [vmem:[%s2 + $0x1b0] sm:$0xf]
      %v515 = vld [vmem:[%s2 + $0x1b4] sm:$0xf]
      %v516 = vld [vmem:[%s2 + $0x1b8] sm:$0xf]
      %v517 = vld [vmem:[%s2 + $0x1bc] sm:$0xf]
      %v518 = vld [vmem:[%s2 + $0x1c0] sm:$0xf]
      %v519 = vld [vmem:[%s2 + $0x1c4] sm:$0xf]
      %v520 = vld [vmem:[%s2 + $0x1c8] sm:$0xf]
      %v521 = vld [vmem:[%s2 + $0x1cc] sm:$0xf]
      %v522 = vld [vmem:[%s2 + $0x1d0] sm:$0xf]
      %v523 = vld [vmem:[%s2 + $0x1d4] sm:$0xf]
      %v524 = vld [vmem:[%s2 + $0x1d8] sm:$0xf]
      %v525 = vld [vmem:[%s2 + $0x1dc] sm:$0xf]
      %v526 = vld [vmem:[%s2 + $0x1e0] sm:$0xf]
      %v527 = vld [vmem:[%s2 + $0x1e4] sm:$0xf]
      %v528 = vld [vmem:[%s2 + $0x1e8] sm:$0xf]
      %v529 = vld [vmem:[%s2 + $0x1ec] sm:$0xf]
      %v530 = vld [vmem:[%s2 + $0x1f0] sm:$0xf]
      %v531 = vld [vmem:[%s2 + $0x1f4] sm:$0xf]
      %v532 = vld [vmem:[%s2 + $0x1f8] sm:$0xf]
      %v533 = vld [vmem:[%s2 + $0x1fc] sm:$0xf]
      %v534 = vld [vmem:[%s2 + $0x200] sm:$0xf]
      %v535 = vld [vmem:[%s2 + $0x204] sm:$0xf]
      %v536 = vld [vmem:[%s2 + $0x208] sm:$0xf]
      %v537 = vld [vmem:[%s2 + $0x20c] sm:$0xf]
      %v538 = vld [vmem:[%s2 + $0x210] sm:$0xf]
      %v539 = vld [vmem:[%s2 + $0x214] sm:$0xf]
      %v540 = vld [vmem:[%s2 + $0x218] sm:$0xf]
      %v541 = vld [vmem:[%s2 + $0x21c] sm:$0xf]
      %v542 = vld [vmem:[%s2 + $0x220] sm:$0xf]
      %v543 = vld [vmem:[%s2 + $0x224] sm:$0xf]
      %v544 = vld [vmem:[%s2 + $0x228] sm:$0xf]
      %v545 = vld [vmem:[%s2 + $0x22c] sm:$0xf]
      %v546 = vld [vmem:[%s2 + $0x230] sm:$0xf]
      %v547 = vld [vmem:[%s2 + $0x234] sm:$0xf]
      %v548 = vld [vmem:[%s2 + $0x238] sm:$0xf]
      %v549 = vld [vmem:[%s2 + $0x23c] sm:$0xf]
      %v550 = vld [vmem:[%s2 + $0x240] sm:$0xf]
      %v551 = vld [vmem:[%s2 + $0x244] sm:$0xf]
      %v552 = vld [vmem:[%s2 + $0x248] sm:$0xf]
      %v553 = vld [vmem:[%s2 + $0x24c] sm:$0xf]
      %v554 = vld [vmem:[%s2 + $0x250] sm:$0xf]
      %v555 = vld [vmem:[%s2 + $0x254] sm:$0xf]
      %v556 = vld [vmem:[%s2 + $0x258] sm:$0xf]
      %v557 = vld [vmem:[%s2 + $0x25c] sm:$0xf]
      %v558 = vld [vmem:[%s2 + $0x260] sm:$0xf]
      %v559 = vld [vmem:[%s2 + $0x264] sm:$0xf]
      %v560 = vld [vmem:[%s2 + $0x268] sm:$0xf]
      %v561 = vld [vmem:[%s2 + $0x26c] sm:$0xf]
      %v562 = vld [vmem:[%s2 + $0x270] sm:$0xf]
      %v563 = vld [vmem:[%s2 + $0x274] sm:$0xf]
      %v564 = vld [vmem:[%s2 + $0x278] sm:$0xf]
      %v565 = vld [vmem:[%s2 + $0x27c] sm:$0xf]
      %v566 = vld [vmem:[%s2 + $0x280] sm:$0xf]
      %v567 = vld [vmem:[%s2 + $0x284] sm:$0xf]
      %v568 = vld [vmem:[%s2 + $0x288] sm:$0xf]
      %v569 = vld [vmem:[%s2 + $0x28c] sm:$0xf]
      %v570 = vld [vmem:[%s2 + $0x290] sm:$0xf]
      %v571 = vld [vmem:[%s2 + $0x294] sm:$0xf]
      %v572 = vld [vmem:[%s2 + $0x298] sm:$0xf]
      %v573 = vld [vmem:[%s2 + $0x29c] sm:$0xf]
      %v574 = vld [vmem:[%s2 + $0x2a0] sm:$0xf]
      %v575 = vld [vmem:[%s2 + $0x2a4] sm:$0xf]
      %v576 = vld [vmem:[%s2 + $0x2a8] sm:$0xf]
      %v577 = vld [vmem:[%s2 + $0x2ac] sm:$0xf]
      %v578 = vld [vmem:[%s2 + $0x2b0] sm:$0xf]
      %v579 = vld [vmem:[%s2 + $0x2b4] sm:$0xf]
      %v580 = vld [vmem:[%s2 + $0x2b8] sm:$0xf]
      %v581 = vld [vmem:[%s2 + $0x2bc] sm:$0xf]
      %v582 = vld [vmem:[%s2 + $0x2c0] sm:$0xf]
      %v583 = vld [vmem:[%s2 + $0x2c4] sm:$0xf]
      %v584 = vld [vmem:[%s2 + $0x2c8] sm:$0xf]
      %v585 = vld [vmem:[%s2 + $0x2cc] sm:$0xf]
      %v586 = vld [vmem:[%s2 + $0x2d0] sm:$0xf]
      %v587 = vld [vmem:[%s2 + $0x2d4] sm:$0xf]
      %v588 = vld [vmem:[%s2 + $0x2d8] sm:$0xf]
      %v589 = vld [vmem:[%s2 + $0x2dc] sm:$0xf]
      %v590 = vld [vmem:[%s2 + $0x2e0] sm:$0xf]
      %v591 = vld [vmem:[%s2 + $0x2e4] sm:$0xf]
      %v592 = vld [vmem:[%s2 + $0x2e8] sm:$0xf]
      %v593 = vld [vmem:[%s2 + $0x2ec] sm:$0xf]
      %v594 = vld [vmem:[%s2 + $0x2f0] sm:$0xf]
      %v595 = vld [vmem:[%s2 + $0x2f4] sm:$0xf]
      %v596 = vld [vmem:[%s2 + $0x2f8] sm:$0xf]
      %v597 = vld [vmem:[%s2 + $0x2fc] sm:$0xf]
      %v598 = vld [vmem:[%s2 + $0x300] sm:$0xf]
      %v599 = vld [vmem:[%s2 + $0x304] sm:$0xf]
      %v600 = vld [vmem:[%s2 + $0x308] sm:$0xf]
      %v601 = vld [vmem:[%s2 + $0x30c] sm:$0xf]
      %v602 = vld [vmem:[%s2 + $0x310] sm:$0xf]
      %v603 = vld [vmem:[%s2 + $0x314] sm:$0xf]
      %v604 = vld [vmem:[%s2 + $0x318] sm:$0xf]
      %v605 = vld [vmem:[%s2 + $0x31c] sm:$0xf]
      %v606 = vld [vmem:[%s2 + $0x320] sm:$0xf]
      %v607 = vld [vmem:[%s2 + $0x324] sm:$0xf]
      %v608 = vld [vmem:[%s2 + $0x328] sm:$0xf]
      %v609 = vld [vmem:[%s2 + $0x32c] sm:$0xf]
      %v610 = vld [vmem:[%s2 + $0x330] sm:$0xf]
      %v611 = vld [vmem:[%s2 + $0x334] sm:$0xf]
      %v612 = vld [vmem:[%s2 + $0x338] sm:$0xf]
      %v613 = vld [vmem:[%s2 + $0x33c] sm:$0xf]
      %v614 = vld [vmem:[%s2 + $0x340] sm:$0xf]
      %v615 = vld [vmem:[%s2 + $0x344] sm:$0xf]
      %v616 = vld [vmem:[%s2 + $0x348] sm:$0xf]
      %v617 = vld [vmem:[%s2 + $0x34c] sm:$0xf]
      %v618 = vld [vmem:[%s2 + $0x350] sm:$0xf]
      %v619 = vld [vmem:[%s2 + $0x354] sm:$0xf]
      %v620 = vld [vmem:[%s2 + $0x358] sm:$0xf]
      %v621 = vld [vmem:[%s2 + $0x35c] sm:$0xf]
      %v622 = vld [vmem:[%s2 + $0x360] sm:$0xf]
      %v623 = vld [vmem:[%s2 + $0x364] sm:$0xf]
      %v624 = vld [vmem:[%s2 + $0x368] sm:$0xf]
      %v625 = vld [vmem:[%s2 + $0x36c] sm:$0xf]
      %v626 = vld [vmem:[%s2 + $0x370] sm:$0xf]
      %v627 = vld [vmem:[%s2 + $0x374] sm:$0xf]
      %v628 = vld [vmem:[%s2 + $0x378] sm:$0xf]
      %v629 = vld [vmem:[%s2 + $0x37c] sm:$0xf]
      %v630 = vld [vmem:[%s2 + $0x380] sm:$0xf]
      %v631 = vld [vmem:[%s2 + $0x384] sm:$0xf]
      %v632 = vld [vmem:[%s2 + $0x388] sm:$0xf]
      %v633 = vld [vmem:[%s2 + $0x38c] sm:$0xf]
      %v634 = vld [vmem:[%s2 + $0x390] sm:$0xf]
      %v635 = vld [vmem:[%s2 + $0x394] sm:$0xf]
      %v636 = vld [vmem:[%s2 + $0x398] sm:$0xf]
      %v637 = vld [vmem:[%s2 + $0x39c] sm:$0xf]
      %v638 = vld [vmem:[%s2 + $0x3a0] sm:$0xf]
      %v639 = vld [vmem:[%s2 + $0x3a4] sm:$0xf]
      %v640 = vld [vmem:[%s2 + $0x3a8] sm:$0xf]
      %v641 = vld [vmem:[%s2 + $0x3ac] sm:$0xf]
      %v642 = vld [vmem:[%s2 + $0x3b0] sm:$0xf]
      %v643 = vld [vmem:[%s2 + $0x3b4] sm:$0xf]
      %v644 = vld [vmem:[%s2 + $0x3b8] sm:$0xf]
      %v645 = vld [vmem:[%s2 + $0x3bc] sm:$0xf]
      %v646 = vld [vmem:[%s3] sm:$0xff]
      %v647 = vld [vmem:[%s3 + $0x8] sm:$0xff]
      %v648 = vld [vmem:[%s3 + $0x10] sm:$0xff]
      %v649 = vld [vmem:[%s3 + $0x18] sm:$0xff]
      %v650 = vld [vmem:[%s3 + $0x20] sm:$0xff]
      %v651 = vld [vmem:[%s3 + $0x28] sm:$0xff]
      %v652 = vld [vmem:[%s3 + $0x30] sm:$0xff]
      %v653 = vld [vmem:[%s3 + $0x38] sm:$0xff]
      %v654 = vld [vmem:[%s3 + $0x40] sm:$0xff]
      %v655 = vld [vmem:[%s3 + $0x48] sm:$0xff]
      %v656 = vld [vmem:[%s3 + $0x50] sm:$0xff]
      %v657 = vld [vmem:[%s3 + $0x58] sm:$0xff]
      %v658 = vld [vmem:[%s3 + $0x60] sm:$0xff]
      %v659 = vld [vmem:[%s3 + $0x68] sm:$0xff]
      %v660 = vld [vmem:[%s3 + $0x70] sm:$0xff]
      %v661 = vld [vmem:[%s3 + $0x78] sm:$0xff]
      %v662 = vld [vmem:[%s3 + $0x80] sm:$0xff]
      %v663 = vld [vmem:[%s3 + $0x88] sm:$0xff]
      %v664 = vld [vmem:[%s3 + $0x90] sm:$0xff]
      %v665 = vld [vmem:[%s3 + $0x98] sm:$0xff]
      %v666 = vld [vmem:[%s3 + $0xa0] sm:$0xff]
      %v667 = vld [vmem:[%s3 + $0xa8] sm:$0xff]
      %v668 = vld [vmem:[%s3 + $0xb0] sm:$0xff]
      %v669 = vld [vmem:[%s3 + $0xb8] sm:$0xff]
      %v670 = vld [vmem:[%s3 + $0xc0] sm:$0xff]
      %v671 = vld [vmem:[%s3 + $0xc8] sm:$0xff]
      %v672 = vld [vmem:[%s3 + $0xd0] sm:$0xff]
      %v673 = vld [vmem:[%s3 + $0xd8] sm:$0xff]
      %v674 = vld [vmem:[%s3 + $0xe0] sm:$0xff]
      %v675 = vld [vmem:[%s3 + $0xe8] sm:$0xff]
      %v676 = vld [vmem:[%s3 + $0xf0] sm:$0xff]
      %v677 = vld [vmem:[%s3 + $0xf8] sm:$0xff]
      %v678 = vld [vmem:[%s3 + $0x100] sm:$0xff]
      %v679 = vld [vmem:[%s3 + $0x108] sm:$0xff]
      %v680 = vld [vmem:[%s3 + $0x110] sm:$0xff]
      %v681 = vld [vmem:[%s3 + $0x118] sm:$0xff]
      %v682 = vld [vmem:[%s3 + $0x120] sm:$0xff]
      %v683 = vld [vmem:[%s3 + $0x128] sm:$0xff]
      %v684 = vld [vmem:[%s3 + $0x130] sm:$0xff]
      %v685 = vld [vmem:[%s3 + $0x138] sm:$0xff]
      %v686 = vld [vmem:[%s3 + $0x140] sm:$0xff]
      %v687 = vld [vmem:[%s3 + $0x148] sm:$0xff]
      %v688 = vld [vmem:[%s3 + $0x150] sm:$0xff]
      %v689 = vld [vmem:[%s3 + $0x158] sm:$0xff]
      %v690 = vld [vmem:[%s3 + $0x160] sm:$0xff]
      %v691 = vld [vmem:[%s3 + $0x168] sm:$0xff]
      %v692 = vld [vmem:[%s3 + $0x170] sm:$0xff]
      %v693 = vld [vmem:[%s3 + $0x178] sm:$0xff]
      %v694 = vld [vmem:[%s3 + $0x180] sm:$0xff]
      %v695 = vld [vmem:[%s3 + $0x188] sm:$0xff]
      %v696 = vld [vmem:[%s3 + $0x190] sm:$0xff]
      %v697 = vld [vmem:[%s3 + $0x198] sm:$0xff]
      %v698 = vld [vmem:[%s3 + $0x1a0] sm:$0xff]
      %v699 = vld [vmem:[%s3 + $0x1a8] sm:$0xff]
      %v700 = vld [vmem:[%s3 + $0x1b0] sm:$0xff]
      %v701 = vld [vmem:[%s3 + $0x1b8] sm:$0xff]
      %v702 = vld [vmem:[%s3 + $0x1c0] sm:$0xff]
      %v703 = vld [vmem:[%s3 + $0x1c8] sm:$0xff]
      %v704 = vld [vmem:[%s3 + $0x1d0] sm:$0xff]
      %v705 = vld [vmem:[%s3 + $0x1d8] sm:$0xff]
      %v706 = vld [vmem:[%s3 + $0x1e0] sm:$0xff]
      %v707 = vld [vmem:[%s3 + $0x1e8] sm:$0xff]
      %v708 = vld [vmem:[%s3 + $0x1f0] sm:$0xff]
      %v709 = vld [vmem:[%s3 + $0x1f8] sm:$0xff]
      %v710 = vld [vmem:[%s4] sm:$0xff]
      %v711 = vld [vmem:[%s4 + $0x8] sm:$0xff]
      %v712 = vld [vmem:[%s4 + $0x10] sm:$0xff]
      %v713 = vld [vmem:[%s4 + $0x18] sm:$0xff]
      %v714 = vld [vmem:[%s219] sm:$0xff]
      %v715 = vld [vmem:[%s219 + $0x1] sm:$0xff]
      %v716 = vld [vmem:[%s219 + $0x2] sm:$0xff]
      %718 = vrot.lane.b32.xlu0 %v715, 80
      %v719 = vpop.permute.xlu0 %718
      %722 = vrot.lane.b32.xlu0 %v716, 32
      %v723 = vpop.permute.xlu0 %722
      %vm725 = vcmask 654336
      %v726 = vsel %vm725, %v714, %v719
      %vm727 = vcmask 261120
      %v728 = vsel %vm727, %v719, %v723
      %s729 = scalar_lea.vmem %s219, 16
      %v730 = vld [vmem:[%s729] sm:$0xff]
      %v731 = vld [vmem:[%s729 + $0x1] sm:$0xff]
      %v732 = vld [vmem:[%s729 + $0x2] sm:$0xff]
      %734 = vrot.lane.b32.xlu0 %v731, 80
      %v735 = vpop.permute.xlu0 %734
      %738 = vrot.lane.b32.xlu0 %v732, 32
      %v739 = vpop.permute.xlu0 %738
      %v741 = vsel %vm725, %v730, %v735
      %v742 = vsel %vm727, %v735, %v739
      %s743 = scalar_lea.vmem %s219, 32
      %v744 = vld [vmem:[%s743] sm:$0xff]
      %v745 = vld [vmem:[%s743 + $0x1] sm:$0xff]
      %v746 = vld [vmem:[%s743 + $0x2] sm:$0xff]
      %748 = vrot.lane.b32.xlu0 %v745, 80
      %v749 = vpop.permute.xlu0 %748
      %752 = vrot.lane.b32.xlu0 %v746, 32
      %v753 = vpop.permute.xlu0 %752
      %v755 = vsel %vm725, %v744, %v749
      %v756 = vsel %vm727, %v749, %v753
      %s757 = scalar_lea.vmem %s219, 48
      %v758 = vld [vmem:[%s757] sm:$0xff]
      %v759 = vld [vmem:[%s757 + $0x1] sm:$0xff]
      %v760 = vld [vmem:[%s757 + $0x2] sm:$0xff]
      %762 = vrot.lane.b32.xlu0 %v759, 80
      %v763 = vpop.permute.xlu0 %762
      %766 = vrot.lane.b32.xlu0 %v760, 32
      %v767 = vpop.permute.xlu0 %766
      %v769 = vsel %vm725, %v758, %v763
      %v770 = vsel %vm727, %v763, %v767
      %v771 = vpack.c.bf16 %v741, %v726
      %v772 = vpack.c.bf16 %v742, %v728
      %v773 = vpack.c.bf16 %v769, %v755
      %v774 = vpack.c.bf16 %v770, %v756
      %v955 = vunpack.c.l.b16 %v226
      %v956 = vunpack.c.h.b16 %v226
      %v957 = vunpack.c.l.b16 %v227
      %v958 = vunpack.c.h.b16 %v227
      %v959 = vunpack.c.l.b16 %v228
      %v960 = vunpack.c.h.b16 %v228
      %v961 = vunpack.c.l.b16 %v229
      %v962 = vunpack.c.h.b16 %v229
      %v963 = vunpack.c.l.b16 %v230
      %v964 = vunpack.c.h.b16 %v230
      %v965 = vunpack.c.l.b16 %v231
      %v966 = vunpack.c.h.b16 %v231
      %v967 = vunpack.c.l.b16 %v232
      %v968 = vunpack.c.h.b16 %v232
      %v969 = vunpack.c.l.b16 %v233
      %v970 = vunpack.c.h.b16 %v233
      %v971 = vunpack.c.l.b16 %v234
      %v972 = vunpack.c.h.b16 %v234
      %v973 = vunpack.c.l.b16 %v235
      %v974 = vunpack.c.h.b16 %v235
      %v975 = vunpack.c.l.b16 %v236
      %v976 = vunpack.c.h.b16 %v236
      %v977 = vunpack.c.l.b16 %v237
      %v978 = vunpack.c.h.b16 %v237
      %v979 = vunpack.c.l.b16 %v238
      %v980 = vunpack.c.h.b16 %v238
      %v981 = vunpack.c.l.b16 %v239
      %v982 = vunpack.c.h.b16 %v239
      %v983 = vunpack.c.l.b16 %v240
      %v984 = vunpack.c.h.b16 %v240
      %v985 = vunpack.c.l.b16 %v241
      %v986 = vunpack.c.h.b16 %v241
      %v987 = vunpack.c.l.b16 %v242
      %v988 = vunpack.c.h.b16 %v242
      %v989 = vunpack.c.l.b16 %v243
      %v990 = vunpack.c.h.b16 %v243
      %v991 = vunpack.c.l.b16 %v244
      %v992 = vunpack.c.h.b16 %v244
      %v993 = vunpack.c.l.b16 %v245
      %v994 = vunpack.c.h.b16 %v245
      %v995 = vunpack.c.l.b16 %v246
      %v996 = vunpack.c.h.b16 %v246
      %v997 = vunpack.c.l.b16 %v247
      %v998 = vunpack.c.h.b16 %v247
      %v999 = vunpack.c.l.b16 %v248
      %v1000 = vunpack.c.h.b16 %v248
      %v1001 = vunpack.c.l.b16 %v249
      %v1002 = vunpack.c.h.b16 %v249
      %v1003 = vunpack.c.l.b16 %v250
      %v1004 = vunpack.c.h.b16 %v250
      %v1005 = vunpack.c.l.b16 %v251
      %v1006 = vunpack.c.h.b16 %v251
      %v1007 = vunpack.c.l.b16 %v252
      %v1008 = vunpack.c.h.b16 %v252
      %v1009 = vunpack.c.l.b16 %v253
      %v1010 = vunpack.c.h.b16 %v253
      %v1011 = vunpack.c.l.b16 %v254
      %v1012 = vunpack.c.h.b16 %v254
      %v1013 = vunpack.c.l.b16 %v255
      %v1014 = vunpack.c.h.b16 %v255
      %v1015 = vunpack.c.l.b16 %v256
      %v1016 = vunpack.c.h.b16 %v256
      %v1017 = vunpack.c.l.b16 %v257
      %v1018 = vunpack.c.h.b16 %v257
      %v1019 = vunpack.c.l.b16 %v258
      %v1020 = vunpack.c.h.b16 %v258
      %v1021 = vunpack.c.l.b16 %v259
      %v1022 = vunpack.c.h.b16 %v259
      %v1023 = vunpack.c.l.b16 %v260
      %v1024 = vunpack.c.h.b16 %v260
      %v1025 = vunpack.c.l.b16 %v261
      %v1026 = vunpack.c.h.b16 %v261
      %v1027 = vunpack.c.l.b16 %v262
      %v1028 = vunpack.c.h.b16 %v262
      %v1029 = vunpack.c.l.b16 %v263
      %v1030 = vunpack.c.h.b16 %v263
      %v1031 = vunpack.c.l.b16 %v264
      %v1032 = vunpack.c.h.b16 %v264
      %v1033 = vunpack.c.l.b16 %v265
      %v1034 = vunpack.c.h.b16 %v265
      %v1035 = vunpack.c.l.b16 %v266
      %v1036 = vunpack.c.h.b16 %v266
      %v1037 = vunpack.c.l.b16 %v267
      %v1038 = vunpack.c.h.b16 %v267
      %v1039 = vunpack.c.l.b16 %v268
      %v1040 = vunpack.c.h.b16 %v268
      %v1041 = vunpack.c.l.b16 %v269
      %v1042 = vunpack.c.h.b16 %v269
      %v1043 = vunpack.c.l.b16 %v270
      %v1044 = vunpack.c.h.b16 %v270
      %v1045 = vunpack.c.l.b16 %v271
      %v1046 = vunpack.c.h.b16 %v271
      %v1047 = vunpack.c.l.b16 %v272
      %v1048 = vunpack.c.h.b16 %v272
      %v1049 = vunpack.c.l.b16 %v273
      %v1050 = vunpack.c.h.b16 %v273
      %v1051 = vunpack.c.l.b16 %v274
      %v1052 = vunpack.c.h.b16 %v274
      %v1053 = vunpack.c.l.b16 %v275
      %v1054 = vunpack.c.h.b16 %v275
      %v1055 = vunpack.c.l.b16 %v276
      %v1056 = vunpack.c.h.b16 %v276
      %v1057 = vunpack.c.l.b16 %v277
      %v1058 = vunpack.c.h.b16 %v277
      %v1059 = vunpack.c.l.b16 %v278
      %v1060 = vunpack.c.h.b16 %v278
      %v1061 = vunpack.c.l.b16 %v279
      %v1062 = vunpack.c.h.b16 %v279
      %v1063 = vunpack.c.l.b16 %v280
      %v1064 = vunpack.c.h.b16 %v280
      %v1065 = vunpack.c.l.b16 %v281
      %v1066 = vunpack.c.h.b16 %v281
      %v1067 = vunpack.c.l.b16 %v282
      %v1068 = vunpack.c.h.b16 %v282
      %v1069 = vunpack.c.l.b16 %v283
      %v1070 = vunpack.c.h.b16 %v283
      %v1071 = vunpack.c.l.b16 %v284
      %v1072 = vunpack.c.h.b16 %v284
      %v1073 = vunpack.c.l.b16 %v285
      %v1074 = vunpack.c.h.b16 %v285
      %v1075 = vunpack.c.l.b16 %v286
      %v1076 = vunpack.c.h.b16 %v286
      %v1077 = vunpack.c.l.b16 %v287
      %v1078 = vunpack.c.h.b16 %v287
      %v1079 = vunpack.c.l.b16 %v288
      %v1080 = vunpack.c.h.b16 %v288
      %v1081 = vunpack.c.l.b16 %v289
      %v1082 = vunpack.c.h.b16 %v289
      %v1083 = vunpack.c.l.b16 %v290
      %v1084 = vunpack.c.h.b16 %v290
      %v1085 = vunpack.c.l.b16 %v291
      %v1086 = vunpack.c.h.b16 %v291
      %v1087 = vunpack.c.l.b16 %v292
      %v1088 = vunpack.c.h.b16 %v292
      %v1089 = vunpack.c.l.b16 %v293
      %v1090 = vunpack.c.h.b16 %v293
      %v1091 = vunpack.c.l.b16 %v294
      %v1092 = vunpack.c.h.b16 %v294
      %v1093 = vunpack.c.l.b16 %v295
      %v1094 = vunpack.c.h.b16 %v295
      %v1095 = vunpack.c.l.b16 %v296
      %v1096 = vunpack.c.h.b16 %v296
      %v1097 = vunpack.c.l.b16 %v297
      %v1098 = vunpack.c.h.b16 %v297
      %v1099 = vunpack.c.l.b16 %v298
      %v1100 = vunpack.c.h.b16 %v298
      %v1101 = vunpack.c.l.b16 %v299
      %v1102 = vunpack.c.h.b16 %v299
      %v1103 = vunpack.c.l.b16 %v300
      %v1104 = vunpack.c.h.b16 %v300
      %v1105 = vunpack.c.l.b16 %v301
      %v1106 = vunpack.c.h.b16 %v301
      %v1107 = vunpack.c.l.b16 %v302
      %v1108 = vunpack.c.h.b16 %v302
      %v1109 = vunpack.c.l.b16 %v303
      %v1110 = vunpack.c.h.b16 %v303
      %v1111 = vunpack.c.l.b16 %v304
      %v1112 = vunpack.c.h.b16 %v304
      %v1113 = vunpack.c.l.b16 %v305
      %v1114 = vunpack.c.h.b16 %v305
      %v1115 = vunpack.c.l.b16 %v306
      %v1116 = vunpack.c.h.b16 %v306
      %v1117 = vunpack.c.l.b16 %v307
      %v1118 = vunpack.c.h.b16 %v307
      %v1119 = vunpack.c.l.b16 %v308
      %v1120 = vunpack.c.h.b16 %v308
      %v1121 = vunpack.c.l.b16 %v309
      %v1122 = vunpack.c.h.b16 %v309
      %v1123 = vunpack.c.l.b16 %v310
      %v1124 = vunpack.c.h.b16 %v310
      %v1125 = vunpack.c.l.b16 %v311
      %v1126 = vunpack.c.h.b16 %v311
      %v1127 = vunpack.c.l.b16 %v312
      %v1128 = vunpack.c.h.b16 %v312
      %v1129 = vunpack.c.l.b16 %v313
      %v1130 = vunpack.c.h.b16 %v313
      %v1131 = vunpack.c.l.b16 %v314
      %v1132 = vunpack.c.h.b16 %v314
      %v1133 = vunpack.c.l.b16 %v315
      %v1134 = vunpack.c.h.b16 %v315
      %v1135 = vunpack.c.l.b16 %v316
      %v1136 = vunpack.c.h.b16 %v316
      %v1137 = vunpack.c.l.b16 %v317
      %v1138 = vunpack.c.h.b16 %v317
      %v1139 = vunpack.c.l.b16 %v318
      %v1140 = vunpack.c.h.b16 %v318
      %v1141 = vunpack.c.l.b16 %v319
      %v1142 = vunpack.c.h.b16 %v319
      %v1143 = vunpack.c.l.b16 %v320
      %v1144 = vunpack.c.h.b16 %v320
      %v1145 = vunpack.c.l.b16 %v321
      %v1146 = vunpack.c.h.b16 %v321
      %v1147 = vunpack.c.l.b16 %v322
      %v1148 = vunpack.c.h.b16 %v322
      %v1149 = vunpack.c.l.b16 %v323
      %v1150 = vunpack.c.h.b16 %v323
      %v1151 = vunpack.c.l.b16 %v324
      %v1152 = vunpack.c.h.b16 %v324
      %v1153 = vunpack.c.l.b16 %v325
      %v1154 = vunpack.c.h.b16 %v325
      %v1155 = vunpack.c.l.b16 %v326
      %v1156 = vunpack.c.h.b16 %v326
      %v1157 = vunpack.c.l.b16 %v327
      %v1158 = vunpack.c.h.b16 %v327
      %v1159 = vunpack.c.l.b16 %v328
      %v1160 = vunpack.c.h.b16 %v328
      %v1161 = vunpack.c.l.b16 %v329
      %v1162 = vunpack.c.h.b16 %v329
      %v1163 = vunpack.c.l.b16 %v330
      %v1164 = vunpack.c.h.b16 %v330
      %v1165 = vunpack.c.l.b16 %v331
      %v1166 = vunpack.c.h.b16 %v331
      %v1167 = vunpack.c.l.b16 %v332
      %v1168 = vunpack.c.h.b16 %v332
      %v1169 = vunpack.c.l.b16 %v333
      %v1170 = vunpack.c.h.b16 %v333
      %v1171 = vunpack.c.l.b16 %v334
      %v1172 = vunpack.c.h.b16 %v334
      %v1173 = vunpack.c.l.b16 %v335
      %v1174 = vunpack.c.h.b16 %v335
      %v1175 = vunpack.c.l.b16 %v336
      %v1176 = vunpack.c.h.b16 %v336
      %v1177 = vunpack.c.l.b16 %v337
      %v1178 = vunpack.c.h.b16 %v337
      %v1179 = vunpack.c.l.b16 %v338
      %v1180 = vunpack.c.h.b16 %v338
      %v1181 = vunpack.c.l.b16 %v339
      %v1182 = vunpack.c.h.b16 %v339
      %v1183 = vunpack.c.l.b16 %v340
      %v1184 = vunpack.c.h.b16 %v340
      %v1185 = vunpack.c.l.b16 %v341
      %v1186 = vunpack.c.h.b16 %v341
      %v1187 = vunpack.c.l.b16 %v342
      %v1188 = vunpack.c.h.b16 %v342
      %v1189 = vunpack.c.l.b16 %v343
      %v1190 = vunpack.c.h.b16 %v343
      %v1191 = vunpack.c.l.b16 %v344
      %v1192 = vunpack.c.h.b16 %v344
      %v1193 = vunpack.c.l.b16 %v345
      %v1194 = vunpack.c.h.b16 %v345
      %v1195 = vunpack.c.l.b16 %v346
      %v1196 = vunpack.c.h.b16 %v346
      %v1197 = vunpack.c.l.b16 %v347
      %v1198 = vunpack.c.h.b16 %v347
      %v1199 = vunpack.c.l.b16 %v348
      %v1200 = vunpack.c.h.b16 %v348
      %v1201 = vunpack.c.l.b16 %v349
      %v1202 = vunpack.c.h.b16 %v349
      %v1203 = vunpack.c.l.b16 %v350
      %v1204 = vunpack.c.h.b16 %v350
      %v1205 = vunpack.c.l.b16 %v351
      %v1206 = vunpack.c.h.b16 %v351
      %v1207 = vunpack.c.l.b16 %v352
      %v1208 = vunpack.c.h.b16 %v352
      %v1209 = vunpack.c.l.b16 %v353
      %v1210 = vunpack.c.h.b16 %v353
      %v1211 = vunpack.c.l.b16 %v354
      %v1212 = vunpack.c.h.b16 %v354
      %v1213 = vunpack.c.l.b16 %v355
      %v1214 = vunpack.c.h.b16 %v355
      %v1215 = vunpack.c.l.b16 %v356
      %v1216 = vunpack.c.h.b16 %v356
      %v1217 = vunpack.c.l.b16 %v357
      %v1218 = vunpack.c.h.b16 %v357
      %v1219 = vunpack.c.l.b16 %v358
      %v1220 = vunpack.c.h.b16 %v358
      %v1221 = vunpack.c.l.b16 %v359
      %v1222 = vunpack.c.h.b16 %v359
      %v1223 = vunpack.c.l.b16 %v360
      %v1224 = vunpack.c.h.b16 %v360
      %v1225 = vunpack.c.l.b16 %v361
      %v1226 = vunpack.c.h.b16 %v361
      %v1227 = vunpack.c.l.b16 %v362
      %v1228 = vunpack.c.h.b16 %v362
      %v1229 = vunpack.c.l.b16 %v363
      %v1230 = vunpack.c.h.b16 %v363
      %v1231 = vunpack.c.l.b16 %v364
      %v1232 = vunpack.c.h.b16 %v364
      %v1233 = vunpack.c.l.b16 %v365
      %v1234 = vunpack.c.h.b16 %v365
      %v1235 = vunpack.c.l.b16 %v366
      %v1236 = vunpack.c.h.b16 %v366
      %v1237 = vunpack.c.l.b16 %v367
      %v1238 = vunpack.c.h.b16 %v367
      %v1239 = vunpack.c.l.b16 %v368
      %v1240 = vunpack.c.h.b16 %v368
      %v1241 = vunpack.c.l.b16 %v369
      %v1242 = vunpack.c.h.b16 %v369
      %v1243 = vunpack.c.l.b16 %v370
      %v1244 = vunpack.c.h.b16 %v370
      %v1245 = vunpack.c.l.b16 %v371
      %v1246 = vunpack.c.h.b16 %v371
      %v1247 = vunpack.c.l.b16 %v372
      %v1248 = vunpack.c.h.b16 %v372
      %v1249 = vunpack.c.l.b16 %v373
      %v1250 = vunpack.c.h.b16 %v373
      %v1251 = vunpack.c.l.b16 %v374
      %v1252 = vunpack.c.h.b16 %v374
      %v1253 = vunpack.c.l.b16 %v375
      %v1254 = vunpack.c.h.b16 %v375
      %v1255 = vunpack.c.l.b16 %v376
      %v1256 = vunpack.c.h.b16 %v376
      %v1257 = vunpack.c.l.b16 %v377
      %v1258 = vunpack.c.h.b16 %v377
      %v1259 = vunpack.c.l.b16 %v378
      %v1260 = vunpack.c.h.b16 %v378
      %v1261 = vunpack.c.l.b16 %v379
      %v1262 = vunpack.c.h.b16 %v379
      %v1263 = vunpack.c.l.b16 %v380
      %v1264 = vunpack.c.h.b16 %v380
      %v1265 = vunpack.c.l.b16 %v381
      %v1266 = vunpack.c.h.b16 %v381
      %v1267 = vunpack.c.l.b16 %v382
      %v1268 = vunpack.c.h.b16 %v382
      %v1269 = vunpack.c.l.b16 %v383
      %v1270 = vunpack.c.h.b16 %v383
      %v1271 = vunpack.c.l.b16 %v384
      %v1272 = vunpack.c.h.b16 %v384
      %v1273 = vunpack.c.l.b16 %v385
      %v1274 = vunpack.c.h.b16 %v385
      %v1275 = vunpack.c.l.b16 %v386
      %v1276 = vunpack.c.h.b16 %v386
      %v1277 = vunpack.c.l.b16 %v387
      %v1278 = vunpack.c.h.b16 %v387
      %v1279 = vunpack.c.l.b16 %v388
      %v1280 = vunpack.c.h.b16 %v388
      %v1281 = vunpack.c.l.b16 %v389
      %v1282 = vunpack.c.h.b16 %v389
      %v1283 = vunpack.c.l.b16 %v390
      %v1284 = vunpack.c.h.b16 %v390
      %v1285 = vunpack.c.l.b16 %v391
      %v1286 = vunpack.c.h.b16 %v391
      %v1287 = vunpack.c.l.b16 %v392
      %v1288 = vunpack.c.h.b16 %v392
      %v1289 = vunpack.c.l.b16 %v393
      %v1290 = vunpack.c.h.b16 %v393
      %v1291 = vunpack.c.l.b16 %v394
      %v1292 = vunpack.c.h.b16 %v394
      %v1293 = vunpack.c.l.b16 %v395
      %v1294 = vunpack.c.h.b16 %v395
      %v1295 = vunpack.c.l.b16 %v396
      %v1296 = vunpack.c.h.b16 %v396
      %v1297 = vunpack.c.l.b16 %v397
      %v1298 = vunpack.c.h.b16 %v397
      %v1299 = vunpack.c.l.b16 %v398
      %v1300 = vunpack.c.h.b16 %v398
      %v1301 = vunpack.c.l.b16 %v399
      %v1302 = vunpack.c.h.b16 %v399
      %v1303 = vunpack.c.l.b16 %v400
      %v1304 = vunpack.c.h.b16 %v400
      %v1305 = vunpack.c.l.b16 %v401
      %v1306 = vunpack.c.h.b16 %v401
      %v1307 = vunpack.c.l.b16 %v402
      %v1308 = vunpack.c.h.b16 %v402
      %v1309 = vunpack.c.l.b16 %v403
      %v1310 = vunpack.c.h.b16 %v403
      %v1311 = vunpack.c.l.b16 %v404
      %v1312 = vunpack.c.h.b16 %v404
      %v1313 = vunpack.c.l.b16 %v405
      %v1314 = vunpack.c.h.b16 %v405
      %v1315 = vpack.c.b16 %v967, %v955
      %v1316 = vpack.c.b16 %v968, %v956
      %v1317 = vpack.c.b16 %v969, %v957
      %v1318 = vpack.c.b16 %v970, %v958
      %v1319 = vpack.c.b16 %v971, %v959
      %v1320 = vpack.c.b16 %v972, %v960
      %v1321 = vpack.c.b16 %v973, %v961
      %v1322 = vpack.c.b16 %v974, %v962
      %v1323 = vpack.c.b16 %v975, %v963
      %v1324 = vpack.c.b16 %v976, %v964
      %v1325 = vpack.c.b16 %v977, %v965
      %v1326 = vpack.c.b16 %v978, %v966
      %v1327 = vpack.c.b16 %v991, %v979
      %v1328 = vpack.c.b16 %v992, %v980
      %v1329 = vpack.c.b16 %v993, %v981
      %v1330 = vpack.c.b16 %v994, %v982
      %v1331 = vpack.c.b16 %v995, %v983
      %v1332 = vpack.c.b16 %v996, %v984
      %v1333 = vpack.c.b16 %v997, %v985
      %v1334 = vpack.c.b16 %v998, %v986
      %v1335 = vpack.c.b16 %v999, %v987
      %v1336 = vpack.c.b16 %v1000, %v988
      %v1337 = vpack.c.b16 %v1001, %v989
      %v1338 = vpack.c.b16 %v1002, %v990
      %v1339 = vpack.c.b16 %v1015, %v1003
      %v1340 = vpack.c.b16 %v1016, %v1004
      %v1341 = vpack.c.b16 %v1017, %v1005
      %v1342 = vpack.c.b16 %v1018, %v1006
      %v1343 = vpack.c.b16 %v1019, %v1007
      %v1344 = vpack.c.b16 %v1020, %v1008
      %v1345 = vpack.c.b16 %v1021, %v1009
      %v1346 = vpack.c.b16 %v1022, %v1010
      %v1347 = vpack.c.b16 %v1023, %v1011
      %v1348 = vpack.c.b16 %v1024, %v1012
      %v1349 = vpack.c.b16 %v1025, %v1013
      %v1350 = vpack.c.b16 %v1026, %v1014
      %v1351 = vpack.c.b16 %v1039, %v1027
      %v1352 = vpack.c.b16 %v1040, %v1028
      %v1353 = vpack.c.b16 %v1041, %v1029
      %v1354 = vpack.c.b16 %v1042, %v1030
      %v1355 = vpack.c.b16 %v1043, %v1031
      %v1356 = vpack.c.b16 %v1044, %v1032
      %v1357 = vpack.c.b16 %v1045, %v1033
      %v1358 = vpack.c.b16 %v1046, %v1034
      %v1359 = vpack.c.b16 %v1047, %v1035
      %v1360 = vpack.c.b16 %v1048, %v1036
      %v1361 = vpack.c.b16 %v1049, %v1037
      %v1362 = vpack.c.b16 %v1050, %v1038
      %v1363 = vpack.c.b16 %v1063, %v1051
      %v1364 = vpack.c.b16 %v1064, %v1052
      %v1365 = vpack.c.b16 %v1065, %v1053
      %v1366 = vpack.c.b16 %v1066, %v1054
      %v1367 = vpack.c.b16 %v1067, %v1055
      %v1368 = vpack.c.b16 %v1068, %v1056
      %v1369 = vpack.c.b16 %v1069, %v1057
      %v1370 = vpack.c.b16 %v1070, %v1058
      %v1371 = vpack.c.b16 %v1071, %v1059
      %v1372 = vpack.c.b16 %v1072, %v1060
      %v1373 = vpack.c.b16 %v1073, %v1061
      %v1374 = vpack.c.b16 %v1074, %v1062
      %v1375 = vpack.c.b16 %v1087, %v1075
      %v1376 = vpack.c.b16 %v1088, %v1076
      %v1377 = vpack.c.b16 %v1089, %v1077
      %v1378 = vpack.c.b16 %v1090, %v1078
      %v1379 = vpack.c.b16 %v1091, %v1079
      %v1380 = vpack.c.b16 %v1092, %v1080
      %v1381 = vpack.c.b16 %v1093, %v1081
      %v1382 = vpack.c.b16 %v1094, %v1082
      %v1383 = vpack.c.b16 %v1095, %v1083
      %v1384 = vpack.c.b16 %v1096, %v1084
      %v1385 = vpack.c.b16 %v1097, %v1085
      %v1386 = vpack.c.b16 %v1098, %v1086
      %v1387 = vpack.c.b16 %v1111, %v1099
      %v1388 = vpack.c.b16 %v1112, %v1100
      %v1389 = vpack.c.b16 %v1113, %v1101
      %v1390 = vpack.c.b16 %v1114, %v1102
      %v1391 = vpack.c.b16 %v1115, %v1103
      %v1392 = vpack.c.b16 %v1116, %v1104
      %v1393 = vpack.c.b16 %v1117, %v1105
      %v1394 = vpack.c.b16 %v1118, %v1106
      %v1395 = vpack.c.b16 %v1119, %v1107
      %v1396 = vpack.c.b16 %v1120, %v1108
      %v1397 = vpack.c.b16 %v1121, %v1109
      %v1398 = vpack.c.b16 %v1122, %v1110
      %v1399 = vpack.c.b16 %v1135, %v1123
      %v1400 = vpack.c.b16 %v1136, %v1124
      %v1401 = vpack.c.b16 %v1137, %v1125
      %v1402 = vpack.c.b16 %v1138, %v1126
      %v1403 = vpack.c.b16 %v1139, %v1127
      %v1404 = vpack.c.b16 %v1140, %v1128
      %v1405 = vpack.c.b16 %v1141, %v1129
      %v1406 = vpack.c.b16 %v1142, %v1130
      %v1407 = vpack.c.b16 %v1143, %v1131
      %v1408 = vpack.c.b16 %v1144, %v1132
      %v1409 = vpack.c.b16 %v1145, %v1133
      %v1410 = vpack.c.b16 %v1146, %v1134
      %v1411 = vpack.c.b16 %v1159, %v1147
      %v1412 = vpack.c.b16 %v1160, %v1148
      %v1413 = vpack.c.b16 %v1161, %v1149
      %v1414 = vpack.c.b16 %v1162, %v1150
      %v1415 = vpack.c.b16 %v1163, %v1151
      %v1416 = vpack.c.b16 %v1164, %v1152
      %v1417 = vpack.c.b16 %v1165, %v1153
      %v1418 = vpack.c.b16 %v1166, %v1154
      %v1419 = vpack.c.b16 %v1167, %v1155
      %v1420 = vpack.c.b16 %v1168, %v1156
      %v1421 = vpack.c.b16 %v1169, %v1157
      %v1422 = vpack.c.b16 %v1170, %v1158
      %v1423 = vpack.c.b16 %v1183, %v1171
      %v1424 = vpack.c.b16 %v1184, %v1172
      %v1425 = vpack.c.b16 %v1185, %v1173
      %v1426 = vpack.c.b16 %v1186, %v1174
      %v1427 = vpack.c.b16 %v1187, %v1175
      %v1428 = vpack.c.b16 %v1188, %v1176
      %v1429 = vpack.c.b16 %v1189, %v1177
      %v1430 = vpack.c.b16 %v1190, %v1178
      %v1431 = vpack.c.b16 %v1191, %v1179
      %v1432 = vpack.c.b16 %v1192, %v1180
      %v1433 = vpack.c.b16 %v1193, %v1181
      %v1434 = vpack.c.b16 %v1194, %v1182
      %v1435 = vpack.c.b16 %v1207, %v1195
      %v1436 = vpack.c.b16 %v1208, %v1196
      %v1437 = vpack.c.b16 %v1209, %v1197
      %v1438 = vpack.c.b16 %v1210, %v1198
      %v1439 = vpack.c.b16 %v1211, %v1199
      %v1440 = vpack.c.b16 %v1212, %v1200
      %v1441 = vpack.c.b16 %v1213, %v1201
      %v1442 = vpack.c.b16 %v1214, %v1202
      %v1443 = vpack.c.b16 %v1215, %v1203
      %v1444 = vpack.c.b16 %v1216, %v1204
      %v1445 = vpack.c.b16 %v1217, %v1205
      %v1446 = vpack.c.b16 %v1218, %v1206
      %v1447 = vpack.c.b16 %v1231, %v1219
      %v1448 = vpack.c.b16 %v1232, %v1220
      %v1449 = vpack.c.b16 %v1233, %v1221
      %v1450 = vpack.c.b16 %v1234, %v1222
      %v1451 = vpack.c.b16 %v1235, %v1223
      %v1452 = vpack.c.b16 %v1236, %v1224
      %v1453 = vpack.c.b16 %v1237, %v1225
      %v1454 = vpack.c.b16 %v1238, %v1226
      %v1455 = vpack.c.b16 %v1239, %v1227
      %v1456 = vpack.c.b16 %v1240, %v1228
      %v1457 = vpack.c.b16 %v1241, %v1229
      %v1458 = vpack.c.b16 %v1242, %v1230
      %v1459 = vpack.c.b16 %v1255, %v1243
      %v1460 = vpack.c.b16 %v1256, %v1244
      %v1461 = vpack.c.b16 %v1257, %v1245
      %v1462 = vpack.c.b16 %v1258, %v1246
      %v1463 = vpack.c.b16 %v1259, %v1247
      %v1464 = vpack.c.b16 %v1260, %v1248
      %v1465 = vpack.c.b16 %v1261, %v1249
      %v1466 = vpack.c.b16 %v1262, %v1250
      %v1467 = vpack.c.b16 %v1263, %v1251
      %v1468 = vpack.c.b16 %v1264, %v1252
      %v1469 = vpack.c.b16 %v1265, %v1253
      %v1470 = vpack.c.b16 %v1266, %v1254
      %v1471 = vpack.c.b16 %v1279, %v1267
      %v1472 = vpack.c.b16 %v1280, %v1268
      %v1473 = vpack.c.b16 %v1281, %v1269
      %v1474 = vpack.c.b16 %v1282, %v1270
      %v1475 = vpack.c.b16 %v1283, %v1271
      %v1476 = vpack.c.b16 %v1284, %v1272
      %v1477 = vpack.c.b16 %v1285, %v1273
      %v1478 = vpack.c.b16 %v1286, %v1274
      %v1479 = vpack.c.b16 %v1287, %v1275
      %v1480 = vpack.c.b16 %v1288, %v1276
      %v1481 = vpack.c.b16 %v1289, %v1277
      %v1482 = vpack.c.b16 %v1290, %v1278
      %v1483 = vpack.c.b16 %v1303, %v1291
      %v1484 = vpack.c.b16 %v1304, %v1292
      %v1485 = vpack.c.b16 %v1305, %v1293
      %v1486 = vpack.c.b16 %v1306, %v1294
      %v1487 = vpack.c.b16 %v1307, %v1295
      %v1488 = vpack.c.b16 %v1308, %v1296
      %v1489 = vpack.c.b16 %v1309, %v1297
      %v1490 = vpack.c.b16 %v1310, %v1298
      %v1491 = vpack.c.b16 %v1311, %v1299
      %v1492 = vpack.c.b16 %v1312, %v1300
      %v1493 = vpack.c.b16 %v1313, %v1301
      %v1494 = vpack.c.b16 %v1314, %v1302
      %vm1675 = vcmask 916480
      %v1677 = vsel %vm1675, %v772, 0
      %v1680 = vsel %vm1675, %v774, 0
      %1682 = vmatprep.subr.bf16.mxu0 %v1316
      %1683 = vmatpush1.bf16.msra.mxu0 %v1315
      %1684 = vmatprep.subr.bf16.mxu0 %v1328
      %1685 = vmatpush1.bf16.msra.mxu0 %v1327
      %1686 = vmatprep.subr.bf16.mxu0 %v1340
      %1687 = vmatpush1.bf16.msra.mxu0 %v1339
      %1688 = vmatprep.subr.bf16.mxu0 %v1352
      %1689 = vmatpush1.bf16.msra.mxu0 %v1351
      %1690 = vmatprep.subr.bf16.mxu0 %v1364
      %1691 = vmatpush1.bf16.msra.mxu0 %v1363
      %1692 = vmatprep.subr.bf16.mxu0 %v1376
      %1693 = vmatpush1.bf16.msra.mxu0 %v1375
      %1694 = vmatprep.subr.bf16.mxu0 %v1388
      %1695 = vmatpush1.bf16.msra.mxu0 %v1387
      %1696 = vmatprep.subr.bf16.mxu0 %v1400
      %1697 = vmatpush1.bf16.msra.mxu0 %v1399
      %1698 = vmatprep.subr.bf16.mxu0 %v1412
      %1699 = vmatpush1.bf16.msra.mxu0 %v1411
      %1700 = vmatprep.subr.bf16.mxu0 %v1424
      %1701 = vmatpush1.bf16.msra.mxu0 %v1423
      %1702 = vmatprep.subr.bf16.mxu0 %v1436
      %1703 = vmatpush1.bf16.msra.mxu0 %v1435
      %1704 = vmatprep.subr.bf16.mxu0 %v1448
      %1705 = vmatpush1.bf16.msra.mxu0 %v1447
      %1706 = vmatprep.subr.bf16.mxu0 %v1460
      %1707 = vmatpush1.bf16.msra.mxu0 %v1459
      %1708 = vmatprep.subr.bf16.mxu0 %v1472
      %1709 = vmatpush1.bf16.msra.mxu0 %v1471
      %1710 = vmatprep.subr.bf16.mxu0 %v1484
      %1711 = vmatpush1.bf16.msra.mxu0 %v1483
      %1712 = vmatprep.subr.bf16.mxu0 0
      %1713 = vmatpush1.bf16.msra.mxu0 0
      %1714 = vmatprep.mubr.bf16.mxu0 %v1677
      %1715 = vmatmul.mubr.bf16.gmra.mrb[0].mxu0 %v771
      %v1716 = vpop.f32.mrb[0].mxu0
      %v1717 = vadd.f32 0.0, %v1716
      %v1718 = vpop.f32.mrb[0].mxu0
      %v1719 = vadd.f32 0.0, %v1718
      %v1720 = vpop.f32.mrb[0].mxu0
      %v1721 = vadd.f32 0.0, %v1720
      %v1722 = vpop.f32.mrb[0].mxu0
      %v1723 = vadd.f32 0.0, %v1722
      %1724 = vmatprep.mubr.bf16.mxu0 %v1680
      %1725 = vmatmul.mubr.bf16.gmra.mrb[0].mxu0 %v773
      %v1726 = vpop.f32.mrb[0].mxu0
      %v1727 = vadd.f32 0.0, %v1726
      %v1728 = vpop.f32.mrb[0].mxu0
      %v1729 = vadd.f32 0.0, %v1728
      %v1730 = vpop.f32.mrb[0].mxu0
      %v1731 = vadd.f32 0.0, %v1730
      %v1732 = vpop.f32.mrb[0].mxu0
      %v1733 = vadd.f32 0.0, %v1732
      %1734 = vdwg.mxu0
      %1735 = vmatprep.subr.bf16.mxu0 %v1318
      %1736 = vmatpush1.bf16.msra.mxu0 %v1317
      %1737 = vmatprep.subr.bf16.mxu0 %v1330
      %1738 = vmatpush1.bf16.msra.mxu0 %v1329
      %1739 = vmatprep.subr.bf16.mxu0 %v1342
      %1740 = vmatpush1.bf16.msra.mxu0 %v1341
      %1741 = vmatprep.subr.bf16.mxu0 %v1354
      %1742 = vmatpush1.bf16.msra.mxu0 %v1353
      %1743 = vmatprep.subr.bf16.mxu0 %v1366
      %1744 = vmatpush1.bf16.msra.mxu0 %v1365
      %1745 = vmatprep.subr.bf16.mxu0 %v1378
      %1746 = vmatpush1.bf16.msra.mxu0 %v1377
      %1747 = vmatprep.subr.bf16.mxu0 %v1390
      %1748 = vmatpush1.bf16.msra.mxu0 %v1389
      %1749 = vmatprep.subr.bf16.mxu0 %v1402
      %1750 = vmatpush1.bf16.msra.mxu0 %v1401
      %1751 = vmatprep.subr.bf16.mxu0 %v1414
      %1752 = vmatpush1.bf16.msra.mxu0 %v1413
      %1753 = vmatprep.subr.bf16.mxu0 %v1426
      %1754 = vmatpush1.bf16.msra.mxu0 %v1425
      %1755 = vmatprep.subr.bf16.mxu0 %v1438
      %1756 = vmatpush1.bf16.msra.mxu0 %v1437
      %1757 = vmatprep.subr.bf16.mxu0 %v1450
      %1758 = vmatpush1.bf16.msra.mxu0 %v1449
      %1759 = vmatprep.subr.bf16.mxu0 %v1462
      %1760 = vmatpush1.bf16.msra.mxu0 %v1461
      %1761 = vmatprep.subr.bf16.mxu0 %v1474
      %1762 = vmatpush1.bf16.msra.mxu0 %v1473
      %1763 = vmatprep.subr.bf16.mxu0 %v1486
      %1764 = vmatpush1.bf16.msra.mxu0 %v1485
      %1765 = vmatprep.subr.bf16.mxu0 0
      %1766 = vmatpush1.bf16.msra.mxu0 0
      %1767 = vmatprep.mubr.bf16.mxu0 %v1677
      %1768 = vmatmul.mubr.bf16.gmra.mrb[0].mxu0 %v771
      %v1769 = vpop.f32.mrb[0].mxu0
      %v1770 = vadd.f32 0.0, %v1769
      %v1771 = vpop.f32.mrb[0].mxu0
      %v1772 = vadd.f32 0.0, %v1771
      %v1773 = vpop.f32.mrb[0].mxu0
      %v1774 = vadd.f32 0.0, %v1773
      %v1775 = vpop.f32.mrb[0].mxu0
      %v1776 = vadd.f32 0.0, %v1775
      %1777 = vmatprep.mubr.bf16.mxu0 %v1680
      %1778 = vmatmul.mubr.bf16.gmra.mrb[0].mxu0 %v773
      %v1779 = vpop.f32.mrb[0].mxu0
      %v1780 = vadd.f32 0.0, %v1779
      %v1781 = vpop.f32.mrb[0].mxu0
      %v1782 = vadd.f32 0.0, %v1781
      %v1783 = vpop.f32.mrb[0].mxu0
      %v1784 = vadd.f32 0.0, %v1783
      %v1785 = vpop.f32.mrb[0].mxu0
      %v1786 = vadd.f32 0.0, %v1785
      %1787 = vdwg.mxu0
      %1788 = vmatprep.subr.bf16.mxu0 %v1320
      %1789 = vmatpush1.bf16.msra.mxu0 %v1319
      %1790 = vmatprep.subr.bf16.mxu0 %v1332
      %1791 = vmatpush1.bf16.msra.mxu0 %v1331
      %1792 = vmatprep.subr.bf16.mxu0 %v1344
      %1793 = vmatpush1.bf16.msra.mxu0 %v1343
      %1794 = vmatprep.subr.bf16.mxu0 %v1356
      %1795 = vmatpush1.bf16.msra.mxu0 %v1355
      %1796 = vmatprep.subr.bf16.mxu0 %v1368
      %1797 = vmatpush1.bf16.msra.mxu0 %v1367
      %1798 = vmatprep.subr.bf16.mxu0 %v1380
      %1799 = vmatpush1.bf16.msra.mxu0 %v1379
      %1800 = vmatprep.subr.bf16.mxu0 %v1392
      %1801 = vmatpush1.bf16.msra.mxu0 %v1391
      %1802 = vmatprep.subr.bf16.mxu0 %v1404
      %1803 = vmatpush1.bf16.msra.mxu0 %v1403
      %1804 = vmatprep.subr.bf16.mxu0 %v1416
      %1805 = vmatpush1.bf16.msra.mxu0 %v1415
      %1806 = vmatprep.subr.bf16.mxu0 %v1428
      %1807 = vmatpush1.bf16.msra.mxu0 %v1427
      %1808 = vmatprep.subr.bf16.mxu0 %v1440
      %1809 = vmatpush1.bf16.msra.mxu0 %v1439
      %1810 = vmatprep.subr.bf16.mxu0 %v1452
      %1811 = vmatpush1.bf16.msra.mxu0 %v1451
      %1812 = vmatprep.subr.bf16.mxu0 %v1464
      %1813 = vmatpush1.bf16.msra.mxu0 %v1463
      %1814 = vmatprep.subr.bf16.mxu0 %v1476
      %1815 = vmatpush1.bf16.msra.mxu0 %v1475
      %1816 = vmatprep.subr.bf16.mxu0 %v1488
      %1817 = vmatpush1.bf16.msra.mxu0 %v1487
      %1818 = vmatprep.subr.bf16.mxu0 0
      %1819 = vmatpush1.bf16.msra.mxu0 0
      %1820 = vmatprep.mubr.bf16.mxu0 %v1677
      %1821 = vmatmul.mubr.bf16.gmra.mrb[0].mxu0 %v771
      %v1822 = vpop.f32.mrb[0].mxu0
      %v1823 = vadd.f32 0.0, %v1822
      %v1824 = vpop.f32.mrb[0].mxu0
      %v1825 = vadd.f32 0.0, %v1824
      %v1826 = vpop.f32.mrb[0].mxu0
      %v1827 = vadd.f32 0.0, %v1826
      %v1828 = vpop.f32.mrb[0].mxu0
      %v1829 = vadd.f32 0.0, %v1828
      %1830 = vmatprep.mubr.bf16.mxu0 %v1680
      %1831 = vmatmul.mubr.bf16.gmra.mrb[0].mxu0 %v773
      %v1832 = vpop.f32.mrb[0].mxu0
      %v1833 = vadd.f32 0.0, %v1832
      %v1834 = vpop.f32.mrb[0].mxu0
      %v1835 = vadd.f32 0.0, %v1834
      %v1836 = vpop.f32.mrb[0].mxu0
      %v1837 = vadd.f32 0.0, %v1836
      %v1838 = vpop.f32.mrb[0].mxu0
      %v1839 = vadd.f32 0.0, %v1838
      %1840 = vdwg.mxu0
      %1841 = vmatprep.subr.bf16.mxu0 %v1322
      %1842 = vmatpush1.bf16.msra.mxu0 %v1321
      %1843 = vmatprep.subr.bf16.mxu0 %v1334
      %1844 = vmatpush1.bf16.msra.mxu0 %v1333
      %1845 = vmatprep.subr.bf16.mxu0 %v1346
      %1846 = vmatpush1.bf16.msra.mxu0 %v1345
      %1847 = vmatprep.subr.bf16.mxu0 %v1358
      %1848 = vmatpush1.bf16.msra.mxu0 %v1357
      %1849 = vmatprep.subr.bf16.mxu0 %v1370
      %1850 = vmatpush1.bf16.msra.mxu0 %v1369
      %1851 = vmatprep.subr.bf16.mxu0 %v1382
      %1852 = vmatpush1.bf16.msra.mxu0 %v1381
      %1853 = vmatprep.subr.bf16.mxu0 %v1394
      %1854 = vmatpush1.bf16.msra.mxu0 %v1393
      %1855 = vmatprep.subr.bf16.mxu0 %v1406
      %1856 = vmatpush1.bf16.msra.mxu0 %v1405
      %1857 = vmatprep.subr.bf16.mxu0 %v1418
      %1858 = vmatpush1.bf16.msra.mxu0 %v1417
      %1859 = vmatprep.subr.bf16.mxu0 %v1430
      %1860 = vmatpush1.bf16.msra.mxu0 %v1429
      %1861 = vmatprep.subr.bf16.mxu0 %v1442
      %1862 = vmatpush1.bf16.msra.mxu0 %v1441
      %1863 = vmatprep.subr.bf16.mxu0 %v1454
      %1864 = vmatpush1.bf16.msra.mxu0 %v1453
      %1865 = vmatprep.subr.bf16.mxu0 %v1466
      %1866 = vmatpush1.bf16.msra.mxu0 %v1465
      %1867 = vmatprep.subr.bf16.mxu0 %v1478
      %1868 = vmatpush1.bf16.msra.mxu0 %v1477
      %1869 = vmatprep.subr.bf16.mxu0 %v1490
      %1870 = vmatpush1.bf16.msra.mxu0 %v1489
      %1871 = vmatprep.subr.bf16.mxu0 0
      %1872 = vmatpush1.bf16.msra.mxu0 0
      %1873 = vmatprep.mubr.bf16.mxu0 %v1677
      %1874 = vmatmul.mubr.bf16.gmra.mrb[0].mxu0 %v771
      %v1875 = vpop.f32.mrb[0].mxu0
      %v1876 = vadd.f32 0.0, %v1875
      %v1877 = vpop.f32.mrb[0].mxu0
      %v1878 = vadd.f32 0.0, %v1877
      %v1879 = vpop.f32.mrb[0].mxu0
      %v1880 = vadd.f32 0.0, %v1879
      %v1881 = vpop.f32.mrb[0].mxu0
      %v1882 = vadd.f32 0.0, %v1881
      %1883 = vmatprep.mubr.bf16.mxu0 %v1680
      %1884 = vmatmul.mubr.bf16.gmra.mrb[0].mxu0 %v773
      %v1885 = vpop.f32.mrb[0].mxu0
      %v1886 = vadd.f32 0.0, %v1885
      %v1887 = vpop.f32.mrb[0].mxu0
      %v1888 = vadd.f32 0.0, %v1887
      %v1889 = vpop.f32.mrb[0].mxu0
      %v1890 = vadd.f32 0.0, %v1889
      %v1891 = vpop.f32.mrb[0].mxu0
      %v1892 = vadd.f32 0.0, %v1891
      %1893 = vdwg.mxu0
      %1894 = vmatprep.subr.bf16.mxu0 %v1324
      %1895 = vmatpush1.bf16.msra.mxu0 %v1323
      %1896 = vmatprep.subr.bf16.mxu0 %v1336
      %1897 = vmatpush1.bf16.msra.mxu0 %v1335
      %1898 = vmatprep.subr.bf16.mxu0 %v1348
      %1899 = vmatpush1.bf16.msra.mxu0 %v1347
      %1900 = vmatprep.subr.bf16.mxu0 %v1360
      %1901 = vmatpush1.bf16.msra.mxu0 %v1359
      %1902 = vmatprep.subr.bf16.mxu0 %v1372
      %1903 = vmatpush1.bf16.msra.mxu0 %v1371
      %1904 = vmatprep.subr.bf16.mxu0 %v1384
      %1905 = vmatpush1.bf16.msra.mxu0 %v1383
      %1906 = vmatprep.subr.bf16.mxu0 %v1396
      %1907 = vmatpush1.bf16.msra.mxu0 %v1395
      %1908 = vmatprep.subr.bf16.mxu0 %v1408
      %1909 = vmatpush1.bf16.msra.mxu0 %v1407
      %1910 = vmatprep.subr.bf16.mxu0 %v1420
      %1911 = vmatpush1.bf16.msra.mxu0 %v1419
      %1912 = vmatprep.subr.bf16.mxu0 %v1432
      %1913 = vmatpush1.bf16.msra.mxu0 %v1431
      %1914 = vmatprep.subr.bf16.mxu0 %v1444
      %1915 = vmatpush1.bf16.msra.mxu0 %v1443
      %1916 = vmatprep.subr.bf16.mxu0 %v1456
      %1917 = vmatpush1.bf16.msra.mxu0 %v1455
      %1918 = vmatprep.subr.bf16.mxu0 %v1468
      %1919 = vmatpush1.bf16.msra.mxu0 %v1467
      %1920 = vmatprep.subr.bf16.mxu0 %v1480
      %1921 = vmatpush1.bf16.msra.mxu0 %v1479
      %1922 = vmatprep.subr.bf16.mxu0 %v1492
      %1923 = vmatpush1.bf16.msra.mxu0 %v1491
      %1924 = vmatprep.subr.bf16.mxu0 0
      %1925 = vmatpush1.bf16.msra.mxu0 0
      %1926 = vmatprep.mubr.bf16.mxu0 %v1677
      %1927 = vmatmul.mubr.bf16.gmra.mrb[0].mxu0 %v771
      %v1928 = vpop.f32.mrb[0].mxu0
      %v1929 = vadd.f32 0.0, %v1928
      %v1930 = vpop.f32.mrb[0].mxu0
      %v1931 = vadd.f32 0.0, %v1930
      %v1932 = vpop.f32.mrb[0].mxu0
      %v1933 = vadd.f32 0.0, %v1932
      %v1934 = vpop.f32.mrb[0].mxu0
      %v1935 = vadd.f32 0.0, %v1934
      %1936 = vmatprep.mubr.bf16.mxu0 %v1680
      %1937 = vmatmul.mubr.bf16.gmra.mrb[0].mxu0 %v773
      %v1938 = vpop.f32.mrb[0].mxu0
      %v1939 = vadd.f32 0.0, %v1938
      %v1940 = vpop.f32.mrb[0].mxu0
      %v1941 = vadd.f32 0.0, %v1940
      %v1942 = vpop.f32.mrb[0].mxu0
      %v1943 = vadd.f32 0.0, %v1942
      %v1944 = vpop.f32.mrb[0].mxu0
      %v1945 = vadd.f32 0.0, %v1944
      %1946 = vdwg.mxu0
      %1947 = vmatprep.subr.bf16.mxu0 %v1326
      %1948 = vmatpush1.bf16.msra.mxu0 %v1325
      %1949 = vmatprep.subr.bf16.mxu0 %v1338
      %1950 = vmatpush1.bf16.msra.mxu0 %v1337
      %1951 = vmatprep.subr.bf16.mxu0 %v1350
      %1952 = vmatpush1.bf16.msra.mxu0 %v1349
      %1953 = vmatprep.subr.bf16.mxu0 %v1362
      %1954 = vmatpush1.bf16.msra.mxu0 %v1361
      %1955 = vmatprep.subr.bf16.mxu0 %v1374
      %1956 = vmatpush1.bf16.msra.mxu0 %v1373
      %1957 = vmatprep.subr.bf16.mxu0 %v1386
      %1958 = vmatpush1.bf16.msra.mxu0 %v1385
      %1959 = vmatprep.subr.bf16.mxu0 %v1398
      %1960 = vmatpush1.bf16.msra.mxu0 %v1397
      %1961 = vmatprep.subr.bf16.mxu0 %v1410
      %1962 = vmatpush1.bf16.msra.mxu0 %v1409
      %1963 = vmatprep.subr.bf16.mxu0 %v1422
      %1964 = vmatpush1.bf16.msra.mxu0 %v1421
      %1965 = vmatprep.subr.bf16.mxu0 %v1434
      %1966 = vmatpush1.bf16.msra.mxu0 %v1433
      %1967 = vmatprep.subr.bf16.mxu0 %v1446
      %1968 = vmatpush1.bf16.msra.mxu0 %v1445
      %1969 = vmatprep.subr.bf16.mxu0 %v1458
      %1970 = vmatpush1.bf16.msra.mxu0 %v1457
      %1971 = vmatprep.subr.bf16.mxu0 %v1470
      %1972 = vmatpush1.bf16.msra.mxu0 %v1469
      %1973 = vmatprep.subr.bf16.mxu0 %v1482
      %1974 = vmatpush1.bf16.msra.mxu0 %v1481
      %1975 = vmatprep.subr.bf16.mxu0 %v1494
      %1976 = vmatpush1.bf16.msra.mxu0 %v1493
      %1977 = vmatprep.subr.bf16.mxu0 0
      %1978 = vmatpush1.bf16.msra.mxu0 0
      %1979 = vmatprep.mubr.bf16.mxu0 %v1677
      %1980 = vmatmul.mubr.bf16.gmra.mrb[0].mxu0 %v771
      %v1981 = vpop.f32.mrb[0].mxu0
      %v1982 = vadd.f32 0.0, %v1981
      %v1983 = vpop.f32.mrb[0].mxu0
      %v1984 = vadd.f32 0.0, %v1983
      %v1985 = vpop.f32.mrb[0].mxu0
      %v1986 = vadd.f32 0.0, %v1985
      %v1987 = vpop.f32.mrb[0].mxu0
      %v1988 = vadd.f32 0.0, %v1987
      %1989 = vmatprep.mubr.bf16.mxu0 %v1680
      %1990 = vmatmul.mubr.bf16.gmra.mrb[0].mxu0 %v773
      %v1991 = vpop.f32.mrb[0].mxu0
      %v1992 = vadd.f32 0.0, %v1991
      %v1993 = vpop.f32.mrb[0].mxu0
      %v1994 = vadd.f32 0.0, %v1993
      %v1995 = vpop.f32.mrb[0].mxu0
      %v1996 = vadd.f32 0.0, %v1995
      %v1997 = vpop.f32.mrb[0].mxu0
      %v1998 = vadd.f32 0.0, %v1997
      %1999 = vdwg.mxu0
      %v2000 = vmul.f32 %v1717, %v1823
      %v2001 = vmul.f32 %v1719, %v1825
      %v2002 = vmul.f32 %v1770, %v1876
      %v2003 = vmul.f32 %v1772, %v1878
      %v2004 = vrot.slane %v2000, 4
      %v2005 = vadd.f32 %v2000, %v2004
      %v2006 = vrot.slane %v2005, 2
      %v2007 = vadd.f32 %v2005, %v2006
      %v2008 = vrot.slane %v2007, 1
      %v2009 = vadd.f32 %v2007, %v2008
      %v2010 = vrot.slane %v2001, 4
      %v2011 = vadd.f32 %v2001, %v2010
      %v2012 = vrot.slane %v2011, 2
      %v2013 = vadd.f32 %v2011, %v2012
      %v2014 = vrot.slane %v2013, 1
      %v2015 = vadd.f32 %v2013, %v2014
      %v2016 = vrot.slane %v2002, 4
      %v2017 = vadd.f32 %v2002, %v2016
      %v2018 = vrot.slane %v2017, 2
      %v2019 = vadd.f32 %v2017, %v2018
      %v2020 = vrot.slane %v2019, 1
      %v2021 = vadd.f32 %v2019, %v2020
      %v2022 = vrot.slane %v2003, 4
      %v2023 = vadd.f32 %v2003, %v2022
      %v2024 = vrot.slane %v2023, 2
      %v2025 = vadd.f32 %v2023, %v2024
      %v2026 = vrot.slane %v2025, 1
      %v2027 = vadd.f32 %v2025, %v2026
      %v2028 = vmul.f32 %v1717, %v1827
      %v2029 = vmul.f32 %v1719, %v1829
      %v2030 = vmul.f32 %v1770, %v1880
      %v2031 = vmul.f32 %v1772, %v1882
      %v2032 = vrot.slane %v2028, 4
      %v2033 = vadd.f32 %v2028, %v2032
      %v2034 = vrot.slane %v2033, 2
      %v2035 = vadd.f32 %v2033, %v2034
      %v2036 = vrot.slane %v2035, 1
      %v2037 = vadd.f32 %v2035, %v2036
      %v2038 = vrot.slane %v2029, 4
      %v2039 = vadd.f32 %v2029, %v2038
      %v2040 = vrot.slane %v2039, 2
      %v2041 = vadd.f32 %v2039, %v2040
      %v2042 = vrot.slane %v2041, 1
      %v2043 = vadd.f32 %v2041, %v2042
      %v2044 = vrot.slane %v2030, 4
      %v2045 = vadd.f32 %v2030, %v2044
      %v2046 = vrot.slane %v2045, 2
      %v2047 = vadd.f32 %v2045, %v2046
      %v2048 = vrot.slane %v2047, 1
      %v2049 = vadd.f32 %v2047, %v2048
      %v2050 = vrot.slane %v2031, 4
      %v2051 = vadd.f32 %v2031, %v2050
      %v2052 = vrot.slane %v2051, 2
      %v2053 = vadd.f32 %v2051, %v2052
      %v2054 = vrot.slane %v2053, 1
      %v2055 = vadd.f32 %v2053, %v2054
      %v2056 = vmul.f32 %v1717, %v1833
      %v2057 = vmul.f32 %v1719, %v1835
      %v2058 = vmul.f32 %v1770, %v1886
      %v2059 = vmul.f32 %v1772, %v1888
      %v2060 = vrot.slane %v2056, 4
      %v2061 = vadd.f32 %v2056, %v2060
      %v2062 = vrot.slane %v2061, 2
      %v2063 = vadd.f32 %v2061, %v2062
      %v2064 = vrot.slane %v2063, 1
      %v2065 = vadd.f32 %v2063, %v2064
      %v2066 = vrot.slane %v2057, 4
      %v2067 = vadd.f32 %v2057, %v2066
      %v2068 = vrot.slane %v2067, 2
      %v2069 = vadd.f32 %v2067, %v2068
      %v2070 = vrot.slane %v2069, 1
      %v2071 = vadd.f32 %v2069, %v2070
      %v2072 = vrot.slane %v2058, 4
      %v2073 = vadd.f32 %v2058, %v2072
      %v2074 = vrot.slane %v2073, 2
      %v2075 = vadd.f32 %v2073, %v2074
      %v2076 = vrot.slane %v2075, 1
      %v2077 = vadd.f32 %v2075, %v2076
      %v2078 = vrot.slane %v2059, 4
      %v2079 = vadd.f32 %v2059, %v2078
      %v2080 = vrot.slane %v2079, 2
      %v2081 = vadd.f32 %v2079, %v2080
      %v2082 = vrot.slane %v2081, 1
      %v2083 = vadd.f32 %v2081, %v2082
      %v2084 = vmul.f32 %v1717, %v1837
      %v2085 = vmul.f32 %v1719, %v1839
      %v2086 = vmul.f32 %v1770, %v1890
      %v2087 = vmul.f32 %v1772, %v1892
      %v2088 = vrot.slane %v2084, 4
      %v2089 = vadd.f32 %v2084, %v2088
      %v2090 = vrot.slane %v2089, 2
      %v2091 = vadd.f32 %v2089, %v2090
      %v2092 = vrot.slane %v2091, 1
      %v2093 = vadd.f32 %v2091, %v2092
      %v2094 = vrot.slane %v2085, 4
      %v2095 = vadd.f32 %v2085, %v2094
      %v2096 = vrot.slane %v2095, 2
      %v2097 = vadd.f32 %v2095, %v2096
      %v2098 = vrot.slane %v2097, 1
      %v2099 = vadd.f32 %v2097, %v2098
      %v2100 = vrot.slane %v2086, 4
      %v2101 = vadd.f32 %v2086, %v2100
      %v2102 = vrot.slane %v2101, 2
      %v2103 = vadd.f32 %v2101, %v2102
      %v2104 = vrot.slane %v2103, 1
      %v2105 = vadd.f32 %v2103, %v2104
      %v2106 = vrot.slane %v2087, 4
      %v2107 = vadd.f32 %v2087, %v2106
      %v2108 = vrot.slane %v2107, 2
      %v2109 = vadd.f32 %v2107, %v2108
      %v2110 = vrot.slane %v2109, 1
      %v2111 = vadd.f32 %v2109, %v2110
      %v2112 = vmul.f32 %v1721, %v1823
      %v2113 = vmul.f32 %v1723, %v1825
      %v2114 = vmul.f32 %v1774, %v1876
      %v2115 = vmul.f32 %v1776, %v1878
      %v2116 = vrot.slane %v2112, 4
      %v2117 = vadd.f32 %v2112, %v2116
      %v2118 = vrot.slane %v2117, 2
      %v2119 = vadd.f32 %v2117, %v2118
      %v2120 = vrot.slane %v2119, 1
      %v2121 = vadd.f32 %v2119, %v2120
      %v2122 = vrot.slane %v2113, 4
      %v2123 = vadd.f32 %v2113, %v2122
      %v2124 = vrot.slane %v2123, 2
      %v2125 = vadd.f32 %v2123, %v2124
      %v2126 = vrot.slane %v2125, 1
      %v2127 = vadd.f32 %v2125, %v2126
      %v2128 = vrot.slane %v2114, 4
      %v2129 = vadd.f32 %v2114, %v2128
      %v2130 = vrot.slane %v2129, 2
      %v2131 = vadd.f32 %v2129, %v2130
      %v2132 = vrot.slane %v2131, 1
      %v2133 = vadd.f32 %v2131, %v2132
      %v2134 = vrot.slane %v2115, 4
      %v2135 = vadd.f32 %v2115, %v2134
      %v2136 = vrot.slane %v2135, 2
      %v2137 = vadd.f32 %v2135, %v2136
      %v2138 = vrot.slane %v2137, 1
      %v2139 = vadd.f32 %v2137, %v2138
      %v2140 = vmul.f32 %v1721, %v1827
      %v2141 = vmul.f32 %v1723, %v1829
      %v2142 = vmul.f32 %v1774, %v1880
      %v2143 = vmul.f32 %v1776, %v1882
      %v2144 = vrot.slane %v2140, 4
      %v2145 = vadd.f32 %v2140, %v2144
      %v2146 = vrot.slane %v2145, 2
      %v2147 = vadd.f32 %v2145, %v2146
      %v2148 = vrot.slane %v2147, 1
      %v2149 = vadd.f32 %v2147, %v2148
      %v2150 = vrot.slane %v2141, 4
      %v2151 = vadd.f32 %v2141, %v2150
      %v2152 = vrot.slane %v2151, 2
      %v2153 = vadd.f32 %v2151, %v2152
      %v2154 = vrot.slane %v2153, 1
      %v2155 = vadd.f32 %v2153, %v2154
      %v2156 = vrot.slane %v2142, 4
      %v2157 = vadd.f32 %v2142, %v2156
      %v2158 = vrot.slane %v2157, 2
      %v2159 = vadd.f32 %v2157, %v2158
      %v2160 = vrot.slane %v2159, 1
      %v2161 = vadd.f32 %v2159, %v2160
      %v2162 = vrot.slane %v2143, 4
      %v2163 = vadd.f32 %v2143, %v2162
      %v2164 = vrot.slane %v2163, 2
      %v2165 = vadd.f32 %v2163, %v2164
      %v2166 = vrot.slane %v2165, 1
      %v2167 = vadd.f32 %v2165, %v2166
      %v2168 = vmul.f32 %v1721, %v1833
      %v2169 = vmul.f32 %v1723, %v1835
      %v2170 = vmul.f32 %v1774, %v1886
      %v2171 = vmul.f32 %v1776, %v1888
      %v2172 = vrot.slane %v2168, 4
      %v2173 = vadd.f32 %v2168, %v2172
      %v2174 = vrot.slane %v2173, 2
      %v2175 = vadd.f32 %v2173, %v2174
      %v2176 = vrot.slane %v2175, 1
      %v2177 = vadd.f32 %v2175, %v2176
      %v2178 = vrot.slane %v2169, 4
      %v2179 = vadd.f32 %v2169, %v2178
      %v2180 = vrot.slane %v2179, 2
      %v2181 = vadd.f32 %v2179, %v2180
      %v2182 = vrot.slane %v2181, 1
      %v2183 = vadd.f32 %v2181, %v2182
      %v2184 = vrot.slane %v2170, 4
      %v2185 = vadd.f32 %v2170, %v2184
      %v2186 = vrot.slane %v2185, 2
      %v2187 = vadd.f32 %v2185, %v2186
      %v2188 = vrot.slane %v2187, 1
      %v2189 = vadd.f32 %v2187, %v2188
      %v2190 = vrot.slane %v2171, 4
      %v2191 = vadd.f32 %v2171, %v2190
      %v2192 = vrot.slane %v2191, 2
      %v2193 = vadd.f32 %v2191, %v2192
      %v2194 = vrot.slane %v2193, 1
      %v2195 = vadd.f32 %v2193, %v2194
      %v2196 = vmul.f32 %v1721, %v1837
      %v2197 = vmul.f32 %v1723, %v1839
      %v2198 = vmul.f32 %v1774, %v1890
      %v2199 = vmul.f32 %v1776, %v1892
      %v2200 = vrot.slane %v2196, 4
      %v2201 = vadd.f32 %v2196, %v2200
      %v2202 = vrot.slane %v2201, 2
      %v2203 = vadd.f32 %v2201, %v2202
      %v2204 = vrot.slane %v2203, 1
      %v2205 = vadd.f32 %v2203, %v2204
      %v2206 = vrot.slane %v2197, 4
      %v2207 = vadd.f32 %v2197, %v2206
      %v2208 = vrot.slane %v2207, 2
      %v2209 = vadd.f32 %v2207, %v2208
      %v2210 = vrot.slane %v2209, 1
      %v2211 = vadd.f32 %v2209, %v2210
      %v2212 = vrot.slane %v2198, 4
      %v2213 = vadd.f32 %v2198, %v2212
      %v2214 = vrot.slane %v2213, 2
      %v2215 = vadd.f32 %v2213, %v2214
      %v2216 = vrot.slane %v2215, 1
      %v2217 = vadd.f32 %v2215, %v2216
      %v2218 = vrot.slane %v2199, 4
      %v2219 = vadd.f32 %v2199, %v2218
      %v2220 = vrot.slane %v2219, 2
      %v2221 = vadd.f32 %v2219, %v2220
      %v2222 = vrot.slane %v2221, 1
      %v2223 = vadd.f32 %v2221, %v2222
      %v2224 = vmul.f32 %v1727, %v1823
      %v2225 = vmul.f32 %v1729, %v1825
      %v2226 = vmul.f32 %v1780, %v1876
      %v2227 = vmul.f32 %v1782, %v1878
      %v2228 = vrot.slane %v2224, 4
      %v2229 = vadd.f32 %v2224, %v2228
      %v2230 = vrot.slane %v2229, 2
      %v2231 = vadd.f32 %v2229, %v2230
      %v2232 = vrot.slane %v2231, 1
      %v2233 = vadd.f32 %v2231, %v2232
      %v2234 = vrot.slane %v2225, 4
      %v2235 = vadd.f32 %v2225, %v2234
      %v2236 = vrot.slane %v2235, 2
      %v2237 = vadd.f32 %v2235, %v2236
      %v2238 = vrot.slane %v2237, 1
      %v2239 = vadd.f32 %v2237, %v2238
      %v2240 = vrot.slane %v2226, 4
      %v2241 = vadd.f32 %v2226, %v2240
      %v2242 = vrot.slane %v2241, 2
      %v2243 = vadd.f32 %v2241, %v2242
      %v2244 = vrot.slane %v2243, 1
      %v2245 = vadd.f32 %v2243, %v2244
      %v2246 = vrot.slane %v2227, 4
      %v2247 = vadd.f32 %v2227, %v2246
      %v2248 = vrot.slane %v2247, 2
      %v2249 = vadd.f32 %v2247, %v2248
      %v2250 = vrot.slane %v2249, 1
      %v2251 = vadd.f32 %v2249, %v2250
      %v2252 = vmul.f32 %v1727, %v1827
      %v2253 = vmul.f32 %v1729, %v1829
      %v2254 = vmul.f32 %v1780, %v1880
      %v2255 = vmul.f32 %v1782, %v1882
      %v2256 = vrot.slane %v2252, 4
      %v2257 = vadd.f32 %v2252, %v2256
      %v2258 = vrot.slane %v2257, 2
      %v2259 = vadd.f32 %v2257, %v2258
      %v2260 = vrot.slane %v2259, 1
      %v2261 = vadd.f32 %v2259, %v2260
      %v2262 = vrot.slane %v2253, 4
      %v2263 = vadd.f32 %v2253, %v2262
      %v2264 = vrot.slane %v2263, 2
      %v2265 = vadd.f32 %v2263, %v2264
      %v2266 = vrot.slane %v2265, 1
      %v2267 = vadd.f32 %v2265, %v2266
      %v2268 = vrot.slane %v2254, 4
      %v2269 = vadd.f32 %v2254, %v2268
      %v2270 = vrot.slane %v2269, 2
      %v2271 = vadd.f32 %v2269, %v2270
      %v2272 = vrot.slane %v2271, 1
      %v2273 = vadd.f32 %v2271, %v2272
      %v2274 = vrot.slane %v2255, 4
      %v2275 = vadd.f32 %v2255, %v2274
      %v2276 = vrot.slane %v2275, 2
      %v2277 = vadd.f32 %v2275, %v2276
      %v2278 = vrot.slane %v2277, 1
      %v2279 = vadd.f32 %v2277, %v2278
      %v2280 = vmul.f32 %v1727, %v1833
      %v2281 = vmul.f32 %v1729, %v1835
      %v2282 = vmul.f32 %v1780, %v1886
      %v2283 = vmul.f32 %v1782, %v1888
      %v2284 = vrot.slane %v2280, 4
      %v2285 = vadd.f32 %v2280, %v2284
      %v2286 = vrot.slane %v2285, 2
      %v2287 = vadd.f32 %v2285, %v2286
      %v2288 = vrot.slane %v2287, 1
      %v2289 = vadd.f32 %v2287, %v2288
      %v2290 = vrot.slane %v2281, 4
      %v2291 = vadd.f32 %v2281, %v2290
      %v2292 = vrot.slane %v2291, 2
      %v2293 = vadd.f32 %v2291, %v2292
      %v2294 = vrot.slane %v2293, 1
      %v2295 = vadd.f32 %v2293, %v2294
      %v2296 = vrot.slane %v2282, 4
      %v2297 = vadd.f32 %v2282, %v2296
      %v2298 = vrot.slane %v2297, 2
      %v2299 = vadd.f32 %v2297, %v2298
      %v2300 = vrot.slane %v2299, 1
      %v2301 = vadd.f32 %v2299, %v2300
      %v2302 = vrot.slane %v2283, 4
      %v2303 = vadd.f32 %v2283, %v2302
      %v2304 = vrot.slane %v2303, 2
      %v2305 = vadd.f32 %v2303, %v2304
      %v2306 = vrot.slane %v2305, 1
      %v2307 = vadd.f32 %v2305, %v2306
      %v2308 = vmul.f32 %v1727, %v1837
      %v2309 = vmul.f32 %v1729, %v1839
      %v2310 = vmul.f32 %v1780, %v1890
      %v2311 = vmul.f32 %v1782, %v1892
      %v2312 = vrot.slane %v2308, 4
      %v2313 = vadd.f32 %v2308, %v2312
      %v2314 = vrot.slane %v2313, 2
      %v2315 = vadd.f32 %v2313, %v2314
      %v2316 = vrot.slane %v2315, 1
      %v2317 = vadd.f32 %v2315, %v2316
      %v2318 = vrot.slane %v2309, 4
      %v2319 = vadd.f32 %v2309, %v2318
      %v2320 = vrot.slane %v2319, 2
      %v2321 = vadd.f32 %v2319, %v2320
      %v2322 = vrot.slane %v2321, 1
      %v2323 = vadd.f32 %v2321, %v2322
      %v2324 = vrot.slane %v2310, 4
      %v2325 = vadd.f32 %v2310, %v2324
      %v2326 = vrot.slane %v2325, 2
      %v2327 = vadd.f32 %v2325, %v2326
      %v2328 = vrot.slane %v2327, 1
      %v2329 = vadd.f32 %v2327, %v2328
      %v2330 = vrot.slane %v2311, 4
      %v2331 = vadd.f32 %v2311, %v2330
      %v2332 = vrot.slane %v2331, 2
      %v2333 = vadd.f32 %v2331, %v2332
      %v2334 = vrot.slane %v2333, 1
      %v2335 = vadd.f32 %v2333, %v2334
      %v2336 = vmul.f32 %v1731, %v1823
      %v2337 = vmul.f32 %v1733, %v1825
      %v2338 = vmul.f32 %v1784, %v1876
      %v2339 = vmul.f32 %v1786, %v1878
      %v2340 = vrot.slane %v2336, 4
      %v2341 = vadd.f32 %v2336, %v2340
      %v2342 = vrot.slane %v2341, 2
      %v2343 = vadd.f32 %v2341, %v2342
      %v2344 = vrot.slane %v2343, 1
      %v2345 = vadd.f32 %v2343, %v2344
      %v2346 = vrot.slane %v2337, 4
      %v2347 = vadd.f32 %v2337, %v2346
      %v2348 = vrot.slane %v2347, 2
      %v2349 = vadd.f32 %v2347, %v2348
      %v2350 = vrot.slane %v2349, 1
      %v2351 = vadd.f32 %v2349, %v2350
      %v2352 = vrot.slane %v2338, 4
      %v2353 = vadd.f32 %v2338, %v2352
      %v2354 = vrot.slane %v2353, 2
      %v2355 = vadd.f32 %v2353, %v2354
      %v2356 = vrot.slane %v2355, 1
      %v2357 = vadd.f32 %v2355, %v2356
      %v2358 = vrot.slane %v2339, 4
      %v2359 = vadd.f32 %v2339, %v2358
      %v2360 = vrot.slane %v2359, 2
      %v2361 = vadd.f32 %v2359, %v2360
      %v2362 = vrot.slane %v2361, 1
      %v2363 = vadd.f32 %v2361, %v2362
      %v2364 = vmul.f32 %v1731, %v1827
      %v2365 = vmul.f32 %v1733, %v1829
      %v2366 = vmul.f32 %v1784, %v1880
      %v2367 = vmul.f32 %v1786, %v1882
      %v2368 = vrot.slane %v2364, 4
      %v2369 = vadd.f32 %v2364, %v2368
      %v2370 = vrot.slane %v2369, 2
      %v2371 = vadd.f32 %v2369, %v2370
      %v2372 = vrot.slane %v2371, 1
      %v2373 = vadd.f32 %v2371, %v2372
      %v2374 = vrot.slane %v2365, 4
      %v2375 = vadd.f32 %v2365, %v2374
      %v2376 = vrot.slane %v2375, 2
      %v2377 = vadd.f32 %v2375, %v2376
      %v2378 = vrot.slane %v2377, 1
      %v2379 = vadd.f32 %v2377, %v2378
      %v2380 = vrot.slane %v2366, 4
      %v2381 = vadd.f32 %v2366, %v2380
      %v2382 = vrot.slane %v2381, 2
      %v2383 = vadd.f32 %v2381, %v2382
      %v2384 = vrot.slane %v2383, 1
      %v2385 = vadd.f32 %v2383, %v2384
      %v2386 = vrot.slane %v2367, 4
      %v2387 = vadd.f32 %v2367, %v2386
      %v2388 = vrot.slane %v2387, 2
      %v2389 = vadd.f32 %v2387, %v2388
      %v2390 = vrot.slane %v2389, 1
      %v2391 = vadd.f32 %v2389, %v2390
      %v2392 = vmul.f32 %v1731, %v1833
      %v2393 = vmul.f32 %v1733, %v1835
      %v2394 = vmul.f32 %v1784, %v1886
      %v2395 = vmul.f32 %v1786, %v1888
      %v2396 = vrot.slane %v2392, 4
      %v2397 = vadd.f32 %v2392, %v2396
      %v2398 = vrot.slane %v2397, 2
      %v2399 = vadd.f32 %v2397, %v2398
      %v2400 = vrot.slane %v2399, 1
      %v2401 = vadd.f32 %v2399, %v2400
      %v2402 = vrot.slane %v2393, 4
      %v2403 = vadd.f32 %v2393, %v2402
      %v2404 = vrot.slane %v2403, 2
      %v2405 = vadd.f32 %v2403, %v2404
      %v2406 = vrot.slane %v2405, 1
      %v2407 = vadd.f32 %v2405, %v2406
      %v2408 = vrot.slane %v2394, 4
      %v2409 = vadd.f32 %v2394, %v2408
      %v2410 = vrot.slane %v2409, 2
      %v2411 = vadd.f32 %v2409, %v2410
      %v2412 = vrot.slane %v2411, 1
      %v2413 = vadd.f32 %v2411, %v2412
      %v2414 = vrot.slane %v2395, 4
      %v2415 = vadd.f32 %v2395, %v2414
      %v2416 = vrot.slane %v2415, 2
      %v2417 = vadd.f32 %v2415, %v2416
      %v2418 = vrot.slane %v2417, 1
      %v2419 = vadd.f32 %v2417, %v2418
      %v2420 = vmul.f32 %v1731, %v1837
      %v2421 = vmul.f32 %v1733, %v1839
      %v2422 = vmul.f32 %v1784, %v1890
      %v2423 = vmul.f32 %v1786, %v1892
      %v2424 = vrot.slane %v2420, 4
      %v2425 = vadd.f32 %v2420, %v2424
      %v2426 = vrot.slane %v2425, 2
      %v2427 = vadd.f32 %v2425, %v2426
      %v2428 = vrot.slane %v2427, 1
      %v2429 = vadd.f32 %v2427, %v2428
      %v2430 = vrot.slane %v2421, 4
      %v2431 = vadd.f32 %v2421, %v2430
      %v2432 = vrot.slane %v2431, 2
      %v2433 = vadd.f32 %v2431, %v2432
      %v2434 = vrot.slane %v2433, 1
      %v2435 = vadd.f32 %v2433, %v2434
      %v2436 = vrot.slane %v2422, 4
      %v2437 = vadd.f32 %v2422, %v2436
      %v2438 = vrot.slane %v2437, 2
      %v2439 = vadd.f32 %v2437, %v2438
      %v2440 = vrot.slane %v2439, 1
      %v2441 = vadd.f32 %v2439, %v2440
      %v2442 = vrot.slane %v2423, 4
      %v2443 = vadd.f32 %v2423, %v2442
      %v2444 = vrot.slane %v2443, 2
      %v2445 = vadd.f32 %v2443, %v2444
      %v2446 = vrot.slane %v2445, 1
      %v2447 = vadd.f32 %v2445, %v2446
      %vm2448 = vcmask 1040384
      %v2449 = vsel %vm2448, %v2009, %v2037
      %v2450 = vsel %vm2448, %v2015, %v2043
      %v2451 = vsel %vm2448, %v2021, %v2049
      %v2452 = vsel %vm2448, %v2027, %v2055
      %vm2453 = vcmask 1041408
      %v2454 = vsel %vm2453, %v2449, %v2065
      %v2455 = vsel %vm2453, %v2450, %v2071
      %v2456 = vsel %vm2453, %v2451, %v2077
      %v2457 = vsel %vm2453, %v2452, %v2083
      %vm2458 = vcmask 1042432
      %v2459 = vsel %vm2458, %v2454, %v2093
      %v2460 = vsel %vm2458, %v2455, %v2099
      %v2461 = vsel %vm2458, %v2456, %v2105
      %v2462 = vsel %vm2458, %v2457, %v2111
      %vm2463 = vcmask 1043456
      %v2464 = vsel %vm2463, %v2459, %v2121
      %v2465 = vsel %vm2463, %v2460, %v2127
      %v2466 = vsel %vm2463, %v2461, %v2133
      %v2467 = vsel %vm2463, %v2462, %v2139
      %vm2468 = vcmask 1044480
      %v2469 = vsel %vm2468, %v2464, %v2149
      %v2470 = vsel %vm2468, %v2465, %v2155
      %v2471 = vsel %vm2468, %v2466, %v2161
      %v2472 = vsel %vm2468, %v2467, %v2167
      %vm2473 = vcmask 1045504
      %v2474 = vsel %vm2473, %v2469, %v2177
      %v2475 = vsel %vm2473, %v2470, %v2183
      %v2476 = vsel %vm2473, %v2471, %v2189
      %v2477 = vsel %vm2473, %v2472, %v2195
      %vm2478 = vcmask 1046528
      %v2479 = vsel %vm2478, %v2474, %v2205
      %v2480 = vsel %vm2478, %v2475, %v2211
      %v2481 = vsel %vm2478, %v2476, %v2217
      %v2482 = vsel %vm2478, %v2477, %v2223
      %v2483 = vsel %vm2448, %v2233, %v2261
      %v2484 = vsel %vm2448, %v2239, %v2267
      %v2485 = vsel %vm2448, %v2245, %v2273
      %v2486 = vsel %vm2448, %v2251, %v2279
      %v2487 = vsel %vm2453, %v2483, %v2289
      %v2488 = vsel %vm2453, %v2484, %v2295
      %v2489 = vsel %vm2453, %v2485, %v2301
      %v2490 = vsel %vm2453, %v2486, %v2307
      %v2491 = vsel %vm2458, %v2487, %v2317
      %v2492 = vsel %vm2458, %v2488, %v2323
      %v2493 = vsel %vm2458, %v2489, %v2329
      %v2494 = vsel %vm2458, %v2490, %v2335
      %v2495 = vsel %vm2463, %v2491, %v2345
      %v2496 = vsel %vm2463, %v2492, %v2351
      %v2497 = vsel %vm2463, %v2493, %v2357
      %v2498 = vsel %vm2463, %v2494, %v2363
      %v2499 = vsel %vm2468, %v2495, %v2373
      %v2500 = vsel %vm2468, %v2496, %v2379
      %v2501 = vsel %vm2468, %v2497, %v2385
      %v2502 = vsel %vm2468, %v2498, %v2391
      %v2503 = vsel %vm2473, %v2499, %v2401
      %v2504 = vsel %vm2473, %v2500, %v2407
      %v2505 = vsel %vm2473, %v2501, %v2413
      %v2506 = vsel %vm2473, %v2502, %v2419
      %v2507 = vsel %vm2478, %v2503, %v2429
      %v2508 = vsel %vm2478, %v2504, %v2435
      %v2509 = vsel %vm2478, %v2505, %v2441
      %v2510 = vsel %vm2478, %v2506, %v2447
      %2511 = vmatprep.subr.mxu0 0.0
      %2512 = vmatpush1.msra.mxu0 %v646
      %2513 = vmatprep.subr.mxu0 0.0
      %2514 = vmatpush1.msra.mxu0 %v647
      %2515 = vmatprep.subr.mxu0 0.0
      %2516 = vmatpush1.msra.mxu0 %v648
      %2517 = vmatprep.subr.mxu0 0.0
      %2518 = vmatpush1.msra.mxu0 %v649
      %2519 = vmatprep.subr.mxu0 0.0
      %2520 = vmatpush1.msra.mxu0 %v650
      %2521 = vmatprep.subr.mxu0 0.0
      %2522 = vmatpush1.msra.mxu0 %v651
      %2523 = vmatprep.subr.mxu0 0.0
      %2524 = vmatpush1.msra.mxu0 %v652
      %2525 = vmatprep.subr.mxu0 0.0
      %2526 = vmatpush1.msra.mxu0 %v653
      %2527 = vmatprep.subr.mxu0 0.0
      %2528 = vmatpush1.msra.mxu0 %v654
      %2529 = vmatprep.subr.mxu0 0.0
      %2530 = vmatpush1.msra.mxu0 %v655
      %2531 = vmatprep.subr.mxu0 0.0
      %2532 = vmatpush1.msra.mxu0 %v656
      %2533 = vmatprep.subr.mxu0 0.0
      %2534 = vmatpush1.msra.mxu0 %v657
      %2535 = vmatprep.subr.mxu0 0.0
      %2536 = vmatpush1.msra.mxu0 %v658
      %2537 = vmatprep.subr.mxu0 0.0
      %2538 = vmatpush1.msra.mxu0 %v659
      %2539 = vmatprep.subr.mxu0 0.0
      %2540 = vmatpush1.msra.mxu0 %v660
      %2541 = vmatprep.subr.mxu0 0.0
      %2542 = vmatpush1.msra.mxu0 %v661
      %2543 = vmatprep.subr.mxu0 0.0
      %2544 = vmatpush1.msra.mxu0 %v662
      %2545 = vmatprep.subr.mxu0 0.0
      %2546 = vmatpush1.msra.mxu0 %v663
      %2547 = vmatprep.subr.mxu0 0.0
      %2548 = vmatpush1.msra.mxu0 %v664
      %2549 = vmatprep.subr.mxu0 0.0
      %2550 = vmatpush1.msra.mxu0 %v665
      %2551 = vmatprep.subr.mxu0 0.0
      %2552 = vmatpush1.msra.mxu0 %v666
      %2553 = vmatprep.subr.mxu0 0.0
      %2554 = vmatpush1.msra.mxu0 %v667
      %2555 = vmatprep.subr.mxu0 0.0
      %2556 = vmatpush1.msra.mxu0 %v668
      %2557 = vmatprep.subr.mxu0 0.0
      %2558 = vmatpush1.msra.mxu0 %v669
      %2559 = vmatprep.subr.mxu0 0.0
      %2560 = vmatpush1.msra.mxu0 %v670
      %2561 = vmatprep.subr.mxu0 0.0
      %2562 = vmatpush1.msra.mxu0 %v671
      %2563 = vmatprep.subr.mxu0 0.0
      %2564 = vmatpush1.msra.mxu0 %v672
      %2565 = vmatprep.subr.mxu0 0.0
      %2566 = vmatpush1.msra.mxu0 %v673
      %2567 = vmatprep.subr.mxu0 0.0
      %2568 = vmatpush1.msra.mxu0 %v674
      %2569 = vmatprep.subr.mxu0 0.0
      %2570 = vmatpush1.msra.mxu0 %v675
      %2571 = vmatprep.subr.mxu0 0.0
      %2572 = vmatpush1.msra.mxu0 %v676
      %2573 = vmatprep.subr.mxu0 0.0
      %2574 = vmatpush1.msra.mxu0 %v677
      %2575 = vmatprep.mubr.f32.mxu0 %v2480
      %2576 = vmatmul.mubr.f32.gmra.mrb[0].mxu0 %v2479
      %v2577 = vpop.f32.mrb[0].mxu0
      %v2578 = vadd.f32 0.0, %v2577
      %v2579 = vpop.f32.mrb[0].mxu0
      %2580 = vmatprep.mubr.f32.mxu0 %v2508
      %2581 = vmatmul.mubr.f32.gmra.mrb[0].mxu0 %v2507
      %v2582 = vpop.f32.mrb[0].mxu0
      %v2583 = vadd.f32 0.0, %v2582
      %v2584 = vpop.f32.mrb[0].mxu0
      %2585 = vdwg.mxu0
      %2586 = vmatprep.subr.mxu0 0.0
      %2587 = vmatpush1.msra.mxu0 %v678
      %2588 = vmatprep.subr.mxu0 0.0
      %2589 = vmatpush1.msra.mxu0 %v679
      %2590 = vmatprep.subr.mxu0 0.0
      %2591 = vmatpush1.msra.mxu0 %v680
      %2592 = vmatprep.subr.mxu0 0.0
      %2593 = vmatpush1.msra.mxu0 %v681
      %2594 = vmatprep.subr.mxu0 0.0
      %2595 = vmatpush1.msra.mxu0 %v682
      %2596 = vmatprep.subr.mxu0 0.0
      %2597 = vmatpush1.msra.mxu0 %v683
      %2598 = vmatprep.subr.mxu0 0.0
      %2599 = vmatpush1.msra.mxu0 %v684
      %2600 = vmatprep.subr.mxu0 0.0
      %2601 = vmatpush1.msra.mxu0 %v685
      %2602 = vmatprep.subr.mxu0 0.0
      %2603 = vmatpush1.msra.mxu0 %v686
      %2604 = vmatprep.subr.mxu0 0.0
      %2605 = vmatpush1.msra.mxu0 %v687
      %2606 = vmatprep.subr.mxu0 0.0
      %2607 = vmatpush1.msra.mxu0 %v688
      %2608 = vmatprep.subr.mxu0 0.0
      %2609 = vmatpush1.msra.mxu0 %v689
      %2610 = vmatprep.subr.mxu0 0.0
      %2611 = vmatpush1.msra.mxu0 %v690
      %2612 = vmatprep.subr.mxu0 0.0
      %2613 = vmatpush1.msra.mxu0 %v691
      %2614 = vmatprep.subr.mxu0 0.0
      %2615 = vmatpush1.msra.mxu0 %v692
      %2616 = vmatprep.subr.mxu0 0.0
      %2617 = vmatpush1.msra.mxu0 %v693
      %2618 = vmatprep.subr.mxu0 0.0
      %2619 = vmatpush1.msra.mxu0 %v694
      %2620 = vmatprep.subr.mxu0 0.0
      %2621 = vmatpush1.msra.mxu0 %v695
      %2622 = vmatprep.subr.mxu0 0.0
      %2623 = vmatpush1.msra.mxu0 %v696
      %2624 = vmatprep.subr.mxu0 0.0
      %2625 = vmatpush1.msra.mxu0 %v697
      %2626 = vmatprep.subr.mxu0 0.0
      %2627 = vmatpush1.msra.mxu0 %v698
      %2628 = vmatprep.subr.mxu0 0.0
      %2629 = vmatpush1.msra.mxu0 %v699
      %2630 = vmatprep.subr.mxu0 0.0
      %2631 = vmatpush1.msra.mxu0 %v700
      %2632 = vmatprep.subr.mxu0 0.0
      %2633 = vmatpush1.msra.mxu0 %v701
      %2634 = vmatprep.subr.mxu0 0.0
      %2635 = vmatpush1.msra.mxu0 %v702
      %2636 = vmatprep.subr.mxu0 0.0
      %2637 = vmatpush1.msra.mxu0 %v703
      %2638 = vmatprep.subr.mxu0 0.0
      %2639 = vmatpush1.msra.mxu0 %v704
      %2640 = vmatprep.subr.mxu0 0.0
      %2641 = vmatpush1.msra.mxu0 %v705
      %2642 = vmatprep.subr.mxu0 0.0
      %2643 = vmatpush1.msra.mxu0 %v706
      %2644 = vmatprep.subr.mxu0 0.0
      %2645 = vmatpush1.msra.mxu0 %v707
      %2646 = vmatprep.subr.mxu0 0.0
      %2647 = vmatpush1.msra.mxu0 %v708
      %2648 = vmatprep.subr.mxu0 0.0
      %2649 = vmatpush1.msra.mxu0 %v709
      %2650 = vmatprep.mubr.f32.mxu0 %v2482
      %2651 = vmatmul.mubr.f32.gmra.mrb[0].mxu0 %v2481
      %v2652 = vpop.f32.mrb[0].mxu0
      %v2653 = vadd.f32 %v2578, %v2652
      %v2654 = vpop.f32.mrb[0].mxu0
      %2655 = vmatprep.mubr.f32.mxu0 %v2510
      %2656 = vmatmul.mubr.f32.gmra.mrb[0].mxu0 %v2509
      %v2657 = vpop.f32.mrb[0].mxu0
      %v2658 = vadd.f32 %v2583, %v2657
      %v2659 = vpop.f32.mrb[0].mxu0
      %2660 = vdwg.mxu0
      %vm2661 = vcmask 60416
      %v2662 = vsel %vm2661, %v2653, -inf
      %v2663 = vrot.slane %v2662, 4
      %v2664 = vmax.f32 %v2662, %v2663
      %v2665 = vrot.slane %v2664, 2
      %v2666 = vmax.f32 %v2664, %v2665
      %v2667 = vrot.slane %v2666, 1
      %v2668 = vmax.f32 %v2666, %v2667
      %v2669 = vsub.f32 %v2653, %v2668
      %v2670 = vmul.f32 %v2669, 1.442695
      %v2671 = vpow.pop %v2670
      %v2672 = vsel %vm2661, %v2671, 0.0
      %v2673 = vrot.slane %v2672, 4
      %v2674 = vadd.f32 %v2672, %v2673
      %v2675 = vrot.slane %v2674, 2
      %v2676 = vadd.f32 %v2674, %v2675
      %v2677 = vrot.slane %v2676, 1
      %v2678 = vadd.f32 %v2676, %v2677
      %v2679 = vrcp.pop %v2678
      %v2680 = vmul.f32 %v2671, %v2679
      %vm2681 = vcmask 64516
      %v2682 = vsel %vm2681, %v2653, -inf
      %v2683 = vrot.slane %v2682, 4
      %v2684 = vmax.f32 %v2682, %v2683
      %v2685 = vrot.slane %v2684, 2
      %v2686 = vmax.f32 %v2684, %v2685
      %v2687 = vrot.slane %v2686, 1
      %v2688 = vmax.f32 %v2686, %v2687
      %v2689 = vsub.f32 %v2653, %v2688
      %v2690 = vmul.f32 %v2689, 1.442695
      %v2691 = vpow.pop %v2690
      %v2693 = vrot.slane %v2691, 4
      %v2695 = vsel %vm2661, %v2693, 0.0
      %v2696 = vrot.slane %v2695, 4
      %v2697 = vadd.f32 %v2695, %v2696
      %v2698 = vrot.slane %v2697, 2
      %v2699 = vadd.f32 %v2697, %v2698
      %v2700 = vrot.slane %v2699, 1
      %v2701 = vadd.f32 %v2699, %v2700
      %v2702 = vrcp.pop %v2701
      %v2703 = vmul.f32 %v2691, %v2702
      %v2704 = vsel %vm2661, %v2658, -inf
      %v2705 = vrot.slane %v2704, 4
      %v2706 = vmax.f32 %v2704, %v2705
      %v2707 = vrot.slane %v2706, 2
      %v2708 = vmax.f32 %v2706, %v2707
      %v2709 = vrot.slane %v2708, 1
      %v2710 = vmax.f32 %v2708, %v2709
      %v2711 = vsub.f32 %v2658, %v2710
      %v2712 = vmul.f32 %v2711, 1.442695
      %v2713 = vpow.pop %v2712
      %v2714 = vsel %vm2661, %v2713, 0.0
      %v2715 = vrot.slane %v2714, 4
      %v2716 = vadd.f32 %v2714, %v2715
      %v2717 = vrot.slane %v2716, 2
      %v2718 = vadd.f32 %v2716, %v2717
      %v2719 = vrot.slane %v2718, 1
      %v2720 = vadd.f32 %v2718, %v2719
      %v2721 = vrcp.pop %v2720
      %v2722 = vmul.f32 %v2713, %v2721
      %v2723 = vsel %vm2681, %v2658, -inf
      %v2724 = vrot.slane %v2723, 4
      %v2725 = vmax.f32 %v2723, %v2724
      %v2726 = vrot.slane %v2725, 2
      %v2727 = vmax.f32 %v2725, %v2726
      %v2728 = vrot.slane %v2727, 1
      %v2729 = vmax.f32 %v2727, %v2728
      %v2730 = vsub.f32 %v2658, %v2729
      %v2731 = vmul.f32 %v2730, 1.442695
      %v2732 = vpow.pop %v2731
      %v2734 = vrot.slane %v2732, 4
      %v2736 = vsel %vm2661, %v2734, 0.0
      %v2737 = vrot.slane %v2736, 4
      %v2738 = vadd.f32 %v2736, %v2737
      %v2739 = vrot.slane %v2738, 2
      %v2740 = vadd.f32 %v2738, %v2739
      %v2741 = vrot.slane %v2740, 1
      %v2742 = vadd.f32 %v2740, %v2741
      %v2743 = vrcp.pop %v2742
      %v2744 = vmul.f32 %v2732, %v2743
      %v2745 = vsel %vm2463, %v2680, %v2703
      %v2746 = vsel %vm2463, %v2722, %v2744
      %vm2747 = vcmask 64512
      %v2749 = vsel %vm2747, %v2745, 0
      %v2752 = vsel %vm2747, %v2746, 0
      %2754 = vmatprep.subr.mxu0 %v711
      %2755 = vmatpush1.msra.mxu0 %v710
      %2756 = vmatprep.subr.mxu0 0.0
      %2757 = vmatpush1.msra.mxu0 0.0
      %2758 = vmatprep.subr.mxu0 0.0
      %2759 = vmatpush1.msra.mxu0 0.0
      %2760 = vmatprep.subr.mxu0 0.0
      %2761 = vmatpush1.msra.mxu0 0.0
      %2762 = vmatprep.subr.mxu0 0.0
      %2763 = vmatpush1.msra.mxu0 0.0
      %2764 = vmatprep.subr.mxu0 0.0
      %2765 = vmatpush1.msra.mxu0 0.0
      %2766 = vmatprep.subr.mxu0 0.0
      %2767 = vmatpush1.msra.mxu0 0.0
      %2768 = vmatprep.subr.mxu0 0.0
      %2769 = vmatpush1.msra.mxu0 0.0
      %2770 = vmatprep.subr.mxu0 0.0
      %2771 = vmatpush1.msra.mxu0 0.0
      %2772 = vmatprep.subr.mxu0 0.0
      %2773 = vmatpush1.msra.mxu0 0.0
      %2774 = vmatprep.subr.mxu0 0.0
      %2775 = vmatpush1.msra.mxu0 0.0
      %2776 = vmatprep.subr.mxu0 0.0
      %2777 = vmatpush1.msra.mxu0 0.0
      %2778 = vmatprep.subr.mxu0 0.0
      %2779 = vmatpush1.msra.mxu0 0.0
      %2780 = vmatprep.subr.mxu0 0.0
      %2781 = vmatpush1.msra.mxu0 0.0
      %2782 = vmatprep.subr.mxu0 0.0
      %2783 = vmatpush1.msra.mxu0 0.0
      %2784 = vmatprep.subr.mxu0 0.0
      %2785 = vmatpush1.msra.mxu0 0.0
      %2786 = vmatprep.subr.mxu0 0.0
      %2787 = vmatpush1.msra.mxu0 0.0
      %2788 = vmatprep.subr.mxu0 0.0
      %2789 = vmatpush1.msra.mxu0 0.0
      %2790 = vmatprep.subr.mxu0 0.0
      %2791 = vmatpush1.msra.mxu0 0.0
      %2792 = vmatprep.subr.mxu0 0.0
      %2793 = vmatpush1.msra.mxu0 0.0
      %2794 = vmatprep.subr.mxu0 0.0
      %2795 = vmatpush1.msra.mxu0 0.0
      %2796 = vmatprep.subr.mxu0 0.0
      %2797 = vmatpush1.msra.mxu0 0.0
      %2798 = vmatprep.subr.mxu0 0.0
      %2799 = vmatpush1.msra.mxu0 0.0
      %2800 = vmatprep.subr.mxu0 0.0
      %2801 = vmatpush1.msra.mxu0 0.0
      %2802 = vmatprep.subr.mxu0 0.0
      %2803 = vmatpush1.msra.mxu0 0.0
      %2804 = vmatprep.subr.mxu0 0.0
      %2805 = vmatpush1.msra.mxu0 0.0
      %2806 = vmatprep.subr.mxu0 0.0
      %2807 = vmatpush1.msra.mxu0 0.0
      %2808 = vmatprep.subr.mxu0 0.0
      %2809 = vmatpush1.msra.mxu0 0.0
      %2810 = vmatprep.subr.mxu0 0.0
      %2811 = vmatpush1.msra.mxu0 0.0
      %2812 = vmatprep.subr.mxu0 0.0
      %2813 = vmatpush1.msra.mxu0 0.0
      %2814 = vmatprep.subr.mxu0 0.0
      %2815 = vmatpush1.msra.mxu0 0.0
      %2816 = vmatprep.subr.mxu0 0.0
      %2817 = vmatpush1.msra.mxu0 0.0
      %2818 = vmatprep.mubr.f32.mxu0 0.0
      %2819 = vmatmul.mubr.f32.gmra.mrb[0].mxu0 %v2749
      %v2820 = vpop.f32.mrb[0].mxu0
      %v2821 = vadd.f32 0.0, %v2820
      %v2822 = vpop.f32.mrb[0].mxu0
      %v2823 = vadd.f32 0.0, %v2822
      %2824 = vmatprep.mubr.f32.mxu0 0.0
      %2825 = vmatmul.mubr.f32.gmra.mrb[0].mxu0 %v2752
      %v2826 = vpop.f32.mrb[0].mxu0
      %v2827 = vadd.f32 0.0, %v2826
      %v2828 = vpop.f32.mrb[0].mxu0
      %v2829 = vadd.f32 0.0, %v2828
      %2830 = vdwg.mxu0
      %2831 = vmatprep.subr.mxu0 %v713
      %2832 = vmatpush1.msra.mxu0 %v712
      %2833 = vmatprep.subr.mxu0 0.0
      %2834 = vmatpush1.msra.mxu0 0.0
      %2835 = vmatprep.subr.mxu0 0.0
      %2836 = vmatpush1.msra.mxu0 0.0
      %2837 = vmatprep.subr.mxu0 0.0
      %2838 = vmatpush1.msra.mxu0 0.0
      %2839 = vmatprep.subr.mxu0 0.0
      %2840 = vmatpush1.msra.mxu0 0.0
      %2841 = vmatprep.subr.mxu0 0.0
      %2842 = vmatpush1.msra.mxu0 0.0
      %2843 = vmatprep.subr.mxu0 0.0
      %2844 = vmatpush1.msra.mxu0 0.0
      %2845 = vmatprep.subr.mxu0 0.0
      %2846 = vmatpush1.msra.mxu0 0.0
      %2847 = vmatprep.subr.mxu0 0.0
      %2848 = vmatpush1.msra.mxu0 0.0
      %2849 = vmatprep.subr.mxu0 0.0
      %2850 = vmatpush1.msra.mxu0 0.0
      %2851 = vmatprep.subr.mxu0 0.0
      %2852 = vmatpush1.msra.mxu0 0.0
      %2853 = vmatprep.subr.mxu0 0.0
      %2854 = vmatpush1.msra.mxu0 0.0
      %2855 = vmatprep.subr.mxu0 0.0
      %2856 = vmatpush1.msra.mxu0 0.0
      %2857 = vmatprep.subr.mxu0 0.0
      %2858 = vmatpush1.msra.mxu0 0.0
      %2859 = vmatprep.subr.mxu0 0.0
      %2860 = vmatpush1.msra.mxu0 0.0
      %2861 = vmatprep.subr.mxu0 0.0
      %2862 = vmatpush1.msra.mxu0 0.0
      %2863 = vmatprep.subr.mxu0 0.0
      %2864 = vmatpush1.msra.mxu0 0.0
      %2865 = vmatprep.subr.mxu0 0.0
      %2866 = vmatpush1.msra.mxu0 0.0
      %2867 = vmatprep.subr.mxu0 0.0
      %2868 = vmatpush1.msra.mxu0 0.0
      %2869 = vmatprep.subr.mxu0 0.0
      %2870 = vmatpush1.msra.mxu0 0.0
      %2871 = vmatprep.subr.mxu0 0.0
      %2872 = vmatpush1.msra.mxu0 0.0
      %2873 = vmatprep.subr.mxu0 0.0
      %2874 = vmatpush1.msra.mxu0 0.0
      %2875 = vmatprep.subr.mxu0 0.0
      %2876 = vmatpush1.msra.mxu0 0.0
      %2877 = vmatprep.subr.mxu0 0.0
      %2878 = vmatpush1.msra.mxu0 0.0
      %2879 = vmatprep.subr.mxu0 0.0
      %2880 = vmatpush1.msra.mxu0 0.0
      %2881 = vmatprep.subr.mxu0 0.0
      %2882 = vmatpush1.msra.mxu0 0.0
      %2883 = vmatprep.subr.mxu0 0.0
      %2884 = vmatpush1.msra.mxu0 0.0
      %2885 = vmatprep.subr.mxu0 0.0
      %2886 = vmatpush1.msra.mxu0 0.0
      %2887 = vmatprep.subr.mxu0 0.0
      %2888 = vmatpush1.msra.mxu0 0.0
      %2889 = vmatprep.subr.mxu0 0.0
      %2890 = vmatpush1.msra.mxu0 0.0
      %2891 = vmatprep.subr.mxu0 0.0
      %2892 = vmatpush1.msra.mxu0 0.0
      %2893 = vmatprep.subr.mxu0 0.0
      %2894 = vmatpush1.msra.mxu0 0.0
      %2895 = vmatprep.mubr.f32.mxu0 0.0
      %2896 = vmatmul.mubr.f32.gmra.mrb[0].mxu0 %v2749
      %v2897 = vpop.f32.mrb[0].mxu0
      %v2898 = vadd.f32 0.0, %v2897
      %v2899 = vpop.f32.mrb[0].mxu0
      %v2900 = vadd.f32 0.0, %v2899
      %2901 = vmatprep.mubr.f32.mxu0 0.0
      %2902 = vmatmul.mubr.f32.gmra.mrb[0].mxu0 %v2752
      %v2903 = vpop.f32.mrb[0].mxu0
      %v2904 = vadd.f32 0.0, %v2903
      %v2905 = vpop.f32.mrb[0].mxu0
      %v2906 = vadd.f32 0.0, %v2905
      %2907 = vdwg.mxu0
      %v2908 = vlaneseq
      %v2909 = vshrl.u32 %v2908, 7
      %v2910 = vsub.s32 0, %v2909
      %v2911 = vrot.slane %v2821, %v2910
      %v2912 = vlaneseq
      %v2913 = vshrl.u32 %v2912, 7
      %v2914 = vsub.s32 0, %v2913
      %v2915 = vrot.slane %v2823, %v2914
      %v2916 = vlaneseq
      %v2917 = vshrl.u32 %v2916, 7
      %v2918 = vsub.s32 0, %v2917
      %v2919 = vrot.slane %v2898, %v2918
      %v2920 = vlaneseq
      %v2921 = vshrl.u32 %v2920, 7
      %v2922 = vsub.s32 0, %v2921
      %v2923 = vrot.slane %v2900, %v2922
      %v2924 = vmul.f32 %v1929, %v2911
      %v2925 = vmul.f32 %v1931, %v2915
      %v2926 = vmul.f32 %v1982, %v2919
      %v2927 = vmul.f32 %v1984, %v2923
      %v2928 = vadd.f32 %v2924, 0.0
      %v2929 = vadd.f32 %v2925, 0.0
      %v2930 = vadd.f32 %v2926, 0.0
      %v2931 = vadd.f32 %v2927, 0.0
      %v2932 = vlaneseq
      %v2933 = vshrl.u32 %v2932, 7
      %v2934 = vsub.s32 1, %v2933
      %v2935 = vrot.slane %v2821, %v2934
      %v2936 = vlaneseq
      %v2937 = vshrl.u32 %v2936, 7
      %v2938 = vsub.s32 1, %v2937
      %v2939 = vrot.slane %v2823, %v2938
      %v2940 = vlaneseq
      %v2941 = vshrl.u32 %v2940, 7
      %v2942 = vsub.s32 1, %v2941
      %v2943 = vrot.slane %v2898, %v2942
      %v2944 = vlaneseq
      %v2945 = vshrl.u32 %v2944, 7
      %v2946 = vsub.s32 1, %v2945
      %v2947 = vrot.slane %v2900, %v2946
      %v2948 = vmul.f32 %v1933, %v2935
      %v2949 = vmul.f32 %v1935, %v2939
      %v2950 = vmul.f32 %v1986, %v2943
      %v2951 = vmul.f32 %v1988, %v2947
      %v2952 = vadd.f32 %v2928, %v2948
      %v2953 = vadd.f32 %v2929, %v2949
      %v2954 = vadd.f32 %v2930, %v2950
      %v2955 = vadd.f32 %v2931, %v2951
      %v2956 = vlaneseq
      %v2957 = vshrl.u32 %v2956, 7
      %v2958 = vsub.s32 2, %v2957
      %v2959 = vrot.slane %v2821, %v2958
      %v2960 = vlaneseq
      %v2961 = vshrl.u32 %v2960, 7
      %v2962 = vsub.s32 2, %v2961
      %v2963 = vrot.slane %v2823, %v2962
      %v2964 = vlaneseq
      %v2965 = vshrl.u32 %v2964, 7
      %v2966 = vsub.s32 2, %v2965
      %v2967 = vrot.slane %v2898, %v2966
      %v2968 = vlaneseq
      %v2969 = vshrl.u32 %v2968, 7
      %v2970 = vsub.s32 2, %v2969
      %v2971 = vrot.slane %v2900, %v2970
      %v2972 = vmul.f32 %v1939, %v2959
      %v2973 = vmul.f32 %v1941, %v2963
      %v2974 = vmul.f32 %v1992, %v2967
      %v2975 = vmul.f32 %v1994, %v2971
      %v2976 = vadd.f32 %v2952, %v2972
      %v2977 = vadd.f32 %v2953, %v2973
      %v2978 = vadd.f32 %v2954, %v2974
      %v2979 = vadd.f32 %v2955, %v2975
      %v2980 = vlaneseq
      %v2981 = vshrl.u32 %v2980, 7
      %v2982 = vsub.s32 3, %v2981
      %v2983 = vrot.slane %v2821, %v2982
      %v2984 = vlaneseq
      %v2985 = vshrl.u32 %v2984, 7
      %v2986 = vsub.s32 3, %v2985
      %v2987 = vrot.slane %v2823, %v2986
      %v2988 = vlaneseq
      %v2989 = vshrl.u32 %v2988, 7
      %v2990 = vsub.s32 3, %v2989
      %v2991 = vrot.slane %v2898, %v2990
      %v2992 = vlaneseq
      %v2993 = vshrl.u32 %v2992, 7
      %v2994 = vsub.s32 3, %v2993
      %v2995 = vrot.slane %v2900, %v2994
      %v2996 = vmul.f32 %v1943, %v2983
      %v2997 = vmul.f32 %v1945, %v2987
      %v2998 = vmul.f32 %v1996, %v2991
      %v2999 = vmul.f32 %v1998, %v2995
      %v3000 = vadd.f32 %v2976, %v2996
      %v3001 = vadd.f32 %v2977, %v2997
      %v3002 = vadd.f32 %v2978, %v2998
      %v3003 = vadd.f32 %v2979, %v2999
      %3008 = vrot.lane.b32.xlu0 %v3000, 64
      %v3009 = vpop.permute.xlu0 %3008
      %3010 = vrot.lane.b32.xlu0 %v3001, 64
      %v3011 = vpop.permute.xlu0 %3010
      %3012 = vrot.lane.b32.xlu0 %v3002, 64
      %v3013 = vpop.permute.xlu0 %3012
      %3014 = vrot.lane.b32.xlu0 %v3003, 64
      %v3015 = vpop.permute.xlu0 %3014
      %vm3016 = vcmask 523264
      %v3017 = vsel %vm3016, %v3009, %v3011
      %v3018 = vsel %vm3016, %v3011, %v3013
      %v3019 = vsel %vm3016, %v3013, %v3015
      %v3022 = vsel %vm3016, 0.0, %v3009
      %v3023 = vsel %vm3016, %v3015, 0.0
      %v3026 = vrot.slane %v3022, 7
      %v3027 = vrot.slane %v3017, 7
      %v3028 = vrot.slane %v3018, 7
      %v3029 = vrot.slane %v3019, 7
      %v3030 = vrot.slane %v3023, 7
      %v3036 = vsel %vm2448, 0.0, %v3026
      %v3037 = vsel %vm2448, 0.0, %v3027
      %v3038 = vsel %vm2448, 0.0, %v3028
      %v3039 = vsel %vm2448, 0.0, %v3029
      %v3040 = vsel %vm2448, 0.0, %v3030
      %v3041 = vsel %vm2448, %v3026, 0.0
      %v3042 = vsel %vm2448, %v3027, 0.0
      %v3043 = vsel %vm2448, %v3028, 0.0
      %v3044 = vsel %vm2448, %v3029, 0.0
      %v3045 = vsel %vm2448, %v3030, 0.0
      %v3056 = vrot.slane %v3036, 1
      %v3057 = vrot.slane %v3041, 1
      %v3058 = vsel %vm2478, %v3056, %v3057
      %v3059 = vrot.slane %v3037, 1
      %v3060 = vrot.slane %v3042, 1
      %v3061 = vsel %vm2478, %v3059, %v3060
      %v3062 = vrot.slane %v3038, 1
      %v3063 = vrot.slane %v3043, 1
      %v3064 = vsel %vm2478, %v3062, %v3063
      %v3065 = vrot.slane %v3039, 1
      %v3066 = vrot.slane %v3044, 1
      %v3067 = vsel %vm2478, %v3065, %v3066
      %v3068 = vrot.slane %v3040, 1
      %v3069 = vrot.slane %v3045, 1
      %v3070 = vsel %vm2478, %v3068, %v3069
      %v3076 = vrot.slane %v3036, 2
      %v3077 = vrot.slane %v3041, 2
      %v3078 = vsel %vm2473, %v3076, %v3077
      %v3079 = vrot.slane %v3037, 2
      %v3080 = vrot.slane %v3042, 2
      %v3081 = vsel %vm2473, %v3079, %v3080
      %v3082 = vrot.slane %v3038, 2
      %v3083 = vrot.slane %v3043, 2
      %v3084 = vsel %vm2473, %v3082, %v3083
      %v3085 = vrot.slane %v3039, 2
      %v3086 = vrot.slane %v3044, 2
      %v3087 = vsel %vm2473, %v3085, %v3086
      %v3088 = vrot.slane %v3040, 2
      %v3089 = vrot.slane %v3045, 2
      %v3090 = vsel %vm2473, %v3088, %v3089
      %v3096 = vlaneseq
      %v3097 = vshrl.u32 %v3096, 7
      %v3098 = vsub.s32 4, %v3097
      %v3099 = vrot.slane %v2821, %v3098
      %v3100 = vlaneseq
      %v3101 = vshrl.u32 %v3100, 7
      %v3102 = vsub.s32 4, %v3101
      %v3103 = vrot.slane %v2823, %v3102
      %v3104 = vlaneseq
      %v3105 = vshrl.u32 %v3104, 7
      %v3106 = vsub.s32 4, %v3105
      %v3107 = vrot.slane %v2898, %v3106
      %v3108 = vlaneseq
      %v3109 = vshrl.u32 %v3108, 7
      %v3110 = vsub.s32 4, %v3109
      %v3111 = vrot.slane %v2900, %v3110
      %v3112 = vmul.f32 %v1929, %v3099
      %v3113 = vmul.f32 %v1931, %v3103
      %v3114 = vmul.f32 %v1982, %v3107
      %v3115 = vmul.f32 %v1984, %v3111
      %v3116 = vadd.f32 %v3112, 0.0
      %v3117 = vadd.f32 %v3113, 0.0
      %v3118 = vadd.f32 %v3114, 0.0
      %v3119 = vadd.f32 %v3115, 0.0
      %v3120 = vlaneseq
      %v3121 = vshrl.u32 %v3120, 7
      %v3122 = vsub.s32 5, %v3121
      %v3123 = vrot.slane %v2821, %v3122
      %v3124 = vlaneseq
      %v3125 = vshrl.u32 %v3124, 7
      %v3126 = vsub.s32 5, %v3125
      %v3127 = vrot.slane %v2823, %v3126
      %v3128 = vlaneseq
      %v3129 = vshrl.u32 %v3128, 7
      %v3130 = vsub.s32 5, %v3129
      %v3131 = vrot.slane %v2898, %v3130
      %v3132 = vlaneseq
      %v3133 = vshrl.u32 %v3132, 7
      %v3134 = vsub.s32 5, %v3133
      %v3135 = vrot.slane %v2900, %v3134
      %v3136 = vmul.f32 %v1933, %v3123
      %v3137 = vmul.f32 %v1935, %v3127
      %v3138 = vmul.f32 %v1986, %v3131
      %v3139 = vmul.f32 %v1988, %v3135
      %v3140 = vadd.f32 %v3116, %v3136
      %v3141 = vadd.f32 %v3117, %v3137
      %v3142 = vadd.f32 %v3118, %v3138
      %v3143 = vadd.f32 %v3119, %v3139
      %v3144 = vlaneseq
      %v3145 = vshrl.u32 %v3144, 7
      %v3146 = vsub.s32 6, %v3145
      %v3147 = vrot.slane %v2821, %v3146
      %v3148 = vlaneseq
      %v3149 = vshrl.u32 %v3148, 7
      %v3150 = vsub.s32 6, %v3149
      %v3151 = vrot.slane %v2823, %v3150
      %v3152 = vlaneseq
      %v3153 = vshrl.u32 %v3152, 7
      %v3154 = vsub.s32 6, %v3153
      %v3155 = vrot.slane %v2898, %v3154
      %v3156 = vlaneseq
      %v3157 = vshrl.u32 %v3156, 7
      %v3158 = vsub.s32 6, %v3157
      %v3159 = vrot.slane %v2900, %v3158
      %v3160 = vmul.f32 %v1939, %v3147
      %v3161 = vmul.f32 %v1941, %v3151
      %v3162 = vmul.f32 %v1992, %v3155
      %v3163 = vmul.f32 %v1994, %v3159
      %v3164 = vadd.f32 %v3140, %v3160
      %v3165 = vadd.f32 %v3141, %v3161
      %v3166 = vadd.f32 %v3142, %v3162
      %v3167 = vadd.f32 %v3143, %v3163
      %v3168 = vlaneseq
      %v3169 = vshrl.u32 %v3168, 7
      %v3170 = vsub.s32 7, %v3169
      %v3171 = vrot.slane %v2821, %v3170
      %v3172 = vlaneseq
      %v3173 = vshrl.u32 %v3172, 7
      %v3174 = vsub.s32 7, %v3173
      %v3175 = vrot.slane %v2823, %v3174
      %v3176 = vlaneseq
      %v3177 = vshrl.u32 %v3176, 7
      %v3178 = vsub.s32 7, %v3177
      %v3179 = vrot.slane %v2898, %v3178
      %v3180 = vlaneseq
      %v3181 = vshrl.u32 %v3180, 7
      %v3182 = vsub.s32 7, %v3181
      %v3183 = vrot.slane %v2900, %v3182
      %v3184 = vmul.f32 %v1943, %v3171
      %v3185 = vmul.f32 %v1945, %v3175
      %v3186 = vmul.f32 %v1996, %v3179
      %v3187 = vmul.f32 %v1998, %v3183
      %v3188 = vadd.f32 %v3164, %v3184
      %v3189 = vadd.f32 %v3165, %v3185
      %v3190 = vadd.f32 %v3166, %v3186
      %v3191 = vadd.f32 %v3167, %v3187
      %3196 = vrot.lane.b32.xlu0 %v3188, 64
      %v3197 = vpop.permute.xlu0 %3196
      %3198 = vrot.lane.b32.xlu0 %v3189, 64
      %v3199 = vpop.permute.xlu0 %3198
      %3200 = vrot.lane.b32.xlu0 %v3190, 64
      %v3201 = vpop.permute.xlu0 %3200
      %3202 = vrot.lane.b32.xlu0 %v3191, 64
      %v3203 = vpop.permute.xlu0 %3202
      %v3204 = vsel %vm3016, %v3197, %v3199
      %v3205 = vsel %vm3016, %v3199, %v3201
      %v3206 = vsel %vm3016, %v3201, %v3203
      %v3209 = vsel %vm3016, 0.0, %v3197
      %v3210 = vsel %vm3016, %v3203, 0.0
      %v3213 = vrot.slane %v3209, 7
      %v3214 = vrot.slane %v3204, 7
      %v3215 = vrot.slane %v3205, 7
      %v3216 = vrot.slane %v3206, 7
      %v3217 = vrot.slane %v3210, 7
      %v3223 = vsel %vm2448, 0.0, %v3213
      %v3224 = vsel %vm2448, 0.0, %v3214
      %v3225 = vsel %vm2448, 0.0, %v3215
      %v3226 = vsel %vm2448, 0.0, %v3216
      %v3227 = vsel %vm2448, 0.0, %v3217
      %v3228 = vsel %vm2448, %v3213, 0.0
      %v3229 = vsel %vm2448, %v3214, 0.0
      %v3230 = vsel %vm2448, %v3215, 0.0
      %v3231 = vsel %vm2448, %v3216, 0.0
      %v3232 = vsel %vm2448, %v3217, 0.0
      %v3243 = vrot.slane %v3223, 1
      %v3244 = vrot.slane %v3228, 1
      %v3245 = vsel %vm2478, %v3243, %v3244
      %v3246 = vrot.slane %v3224, 1
      %v3247 = vrot.slane %v3229, 1
      %v3248 = vsel %vm2478, %v3246, %v3247
      %v3249 = vrot.slane %v3225, 1
      %v3250 = vrot.slane %v3230, 1
      %v3251 = vsel %vm2478, %v3249, %v3250
      %v3252 = vrot.slane %v3226, 1
      %v3253 = vrot.slane %v3231, 1
      %v3254 = vsel %vm2478, %v3252, %v3253
      %v3255 = vrot.slane %v3227, 1
      %v3256 = vrot.slane %v3232, 1
      %v3257 = vsel %vm2478, %v3255, %v3256
      %v3263 = vrot.slane %v3223, 2
      %v3264 = vrot.slane %v3228, 2
      %v3265 = vsel %vm2473, %v3263, %v3264
      %v3266 = vrot.slane %v3224, 2
      %v3267 = vrot.slane %v3229, 2
      %v3268 = vsel %vm2473, %v3266, %v3267
      %v3269 = vrot.slane %v3225, 2
      %v3270 = vrot.slane %v3230, 2
      %v3271 = vsel %vm2473, %v3269, %v3270
      %v3272 = vrot.slane %v3226, 2
      %v3273 = vrot.slane %v3231, 2
      %v3274 = vsel %vm2473, %v3272, %v3273
      %v3275 = vrot.slane %v3227, 2
      %v3276 = vrot.slane %v3232, 2
      %v3277 = vsel %vm2473, %v3275, %v3276
      %v3283 = vlaneseq
      %v3284 = vshrl.u32 %v3283, 7
      %v3285 = vsub.s32 0, %v3284
      %v3286 = vrot.slane %v2827, %v3285
      %v3287 = vlaneseq
      %v3288 = vshrl.u32 %v3287, 7
      %v3289 = vsub.s32 0, %v3288
      %v3290 = vrot.slane %v2829, %v3289
      %v3291 = vlaneseq
      %v3292 = vshrl.u32 %v3291, 7
      %v3293 = vsub.s32 0, %v3292
      %v3294 = vrot.slane %v2904, %v3293
      %v3295 = vlaneseq
      %v3296 = vshrl.u32 %v3295, 7
      %v3297 = vsub.s32 0, %v3296
      %v3298 = vrot.slane %v2906, %v3297
      %v3299 = vmul.f32 %v1929, %v3286
      %v3300 = vmul.f32 %v1931, %v3290
      %v3301 = vmul.f32 %v1982, %v3294
      %v3302 = vmul.f32 %v1984, %v3298
      %v3303 = vadd.f32 %v3299, 0.0
      %v3304 = vadd.f32 %v3300, 0.0
      %v3305 = vadd.f32 %v3301, 0.0
      %v3306 = vadd.f32 %v3302, 0.0
      %v3307 = vlaneseq
      %v3308 = vshrl.u32 %v3307, 7
      %v3309 = vsub.s32 1, %v3308
      %v3310 = vrot.slane %v2827, %v3309
      %v3311 = vlaneseq
      %v3312 = vshrl.u32 %v3311, 7
      %v3313 = vsub.s32 1, %v3312
      %v3314 = vrot.slane %v2829, %v3313
      %v3315 = vlaneseq
      %v3316 = vshrl.u32 %v3315, 7
      %v3317 = vsub.s32 1, %v3316
      %v3318 = vrot.slane %v2904, %v3317
      %v3319 = vlaneseq
      %v3320 = vshrl.u32 %v3319, 7
      %v3321 = vsub.s32 1, %v3320
      %v3322 = vrot.slane %v2906, %v3321
      %v3323 = vmul.f32 %v1933, %v3310
      %v3324 = vmul.f32 %v1935, %v3314
      %v3325 = vmul.f32 %v1986, %v3318
      %v3326 = vmul.f32 %v1988, %v3322
      %v3327 = vadd.f32 %v3303, %v3323
      %v3328 = vadd.f32 %v3304, %v3324
      %v3329 = vadd.f32 %v3305, %v3325
      %v3330 = vadd.f32 %v3306, %v3326
      %v3331 = vlaneseq
      %v3332 = vshrl.u32 %v3331, 7
      %v3333 = vsub.s32 2, %v3332
      %v3334 = vrot.slane %v2827, %v3333
      %v3335 = vlaneseq
      %v3336 = vshrl.u32 %v3335, 7
      %v3337 = vsub.s32 2, %v3336
      %v3338 = vrot.slane %v2829, %v3337
      %v3339 = vlaneseq
      %v3340 = vshrl.u32 %v3339, 7
      %v3341 = vsub.s32 2, %v3340
      %v3342 = vrot.slane %v2904, %v3341
      %v3343 = vlaneseq
      %v3344 = vshrl.u32 %v3343, 7
      %v3345 = vsub.s32 2, %v3344
      %v3346 = vrot.slane %v2906, %v3345
      %v3347 = vmul.f32 %v1939, %v3334
      %v3348 = vmul.f32 %v1941, %v3338
      %v3349 = vmul.f32 %v1992, %v3342
      %v3350 = vmul.f32 %v1994, %v3346
      %v3351 = vadd.f32 %v3327, %v3347
      %v3352 = vadd.f32 %v3328, %v3348
      %v3353 = vadd.f32 %v3329, %v3349
      %v3354 = vadd.f32 %v3330, %v3350
      %v3355 = vlaneseq
      %v3356 = vshrl.u32 %v3355, 7
      %v3357 = vsub.s32 3, %v3356
      %v3358 = vrot.slane %v2827, %v3357
      %v3359 = vlaneseq
      %v3360 = vshrl.u32 %v3359, 7
      %v3361 = vsub.s32 3, %v3360
      %v3362 = vrot.slane %v2829, %v3361
      %v3363 = vlaneseq
      %v3364 = vshrl.u32 %v3363, 7
      %v3365 = vsub.s32 3, %v3364
      %v3366 = vrot.slane %v2904, %v3365
      %v3367 = vlaneseq
      %v3368 = vshrl.u32 %v3367, 7
      %v3369 = vsub.s32 3, %v3368
      %v3370 = vrot.slane %v2906, %v3369
      %v3371 = vmul.f32 %v1943, %v3358
      %v3372 = vmul.f32 %v1945, %v3362
      %v3373 = vmul.f32 %v1996, %v3366
      %v3374 = vmul.f32 %v1998, %v3370
      %v3375 = vadd.f32 %v3351, %v3371
      %v3376 = vadd.f32 %v3352, %v3372
      %v3377 = vadd.f32 %v3353, %v3373
      %v3378 = vadd.f32 %v3354, %v3374
      %3383 = vrot.lane.b32.xlu0 %v3375, 64
      %v3384 = vpop.permute.xlu0 %3383
      %3385 = vrot.lane.b32.xlu0 %v3376, 64
      %v3386 = vpop.permute.xlu0 %3385
      %3387 = vrot.lane.b32.xlu0 %v3377, 64
      %v3388 = vpop.permute.xlu0 %3387
      %3389 = vrot.lane.b32.xlu0 %v3378, 64
      %v3390 = vpop.permute.xlu0 %3389
      %v3391 = vsel %vm3016, %v3384, %v3386
      %v3392 = vsel %vm3016, %v3386, %v3388
      %v3393 = vsel %vm3016, %v3388, %v3390
      %v3396 = vsel %vm3016, 0.0, %v3384
      %v3397 = vsel %vm3016, %v3390, 0.0
      %v3400 = vrot.slane %v3396, 7
      %v3401 = vrot.slane %v3391, 7
      %v3402 = vrot.slane %v3392, 7
      %v3403 = vrot.slane %v3393, 7
      %v3404 = vrot.slane %v3397, 7
      %v3410 = vsel %vm2448, 0.0, %v3400
      %v3411 = vsel %vm2448, 0.0, %v3401
      %v3412 = vsel %vm2448, 0.0, %v3402
      %v3413 = vsel %vm2448, 0.0, %v3403
      %v3414 = vsel %vm2448, 0.0, %v3404
      %v3415 = vsel %vm2448, %v3400, 0.0
      %v3416 = vsel %vm2448, %v3401, 0.0
      %v3417 = vsel %vm2448, %v3402, 0.0
      %v3418 = vsel %vm2448, %v3403, 0.0
      %v3419 = vsel %vm2448, %v3404, 0.0
      %v3430 = vrot.slane %v3410, 1
      %v3431 = vrot.slane %v3415, 1
      %v3432 = vsel %vm2478, %v3430, %v3431
      %v3433 = vrot.slane %v3411, 1
      %v3434 = vrot.slane %v3416, 1
      %v3435 = vsel %vm2478, %v3433, %v3434
      %v3436 = vrot.slane %v3412, 1
      %v3437 = vrot.slane %v3417, 1
      %v3438 = vsel %vm2478, %v3436, %v3437
      %v3439 = vrot.slane %v3413, 1
      %v3440 = vrot.slane %v3418, 1
      %v3441 = vsel %vm2478, %v3439, %v3440
      %v3442 = vrot.slane %v3414, 1
      %v3443 = vrot.slane %v3419, 1
      %v3444 = vsel %vm2478, %v3442, %v3443
      %v3450 = vrot.slane %v3410, 2
      %v3451 = vrot.slane %v3415, 2
      %v3452 = vsel %vm2473, %v3450, %v3451
      %v3453 = vrot.slane %v3411, 2
      %v3454 = vrot.slane %v3416, 2
      %v3455 = vsel %vm2473, %v3453, %v3454
      %v3456 = vrot.slane %v3412, 2
      %v3457 = vrot.slane %v3417, 2
      %v3458 = vsel %vm2473, %v3456, %v3457
      %v3459 = vrot.slane %v3413, 2
      %v3460 = vrot.slane %v3418, 2
      %v3461 = vsel %vm2473, %v3459, %v3460
      %v3462 = vrot.slane %v3414, 2
      %v3463 = vrot.slane %v3419, 2
      %v3464 = vsel %vm2473, %v3462, %v3463
      %v3470 = vlaneseq
      %v3471 = vshrl.u32 %v3470, 7
      %v3472 = vsub.s32 4, %v3471
      %v3473 = vrot.slane %v2827, %v3472
      %v3474 = vlaneseq
      %v3475 = vshrl.u32 %v3474, 7
      %v3476 = vsub.s32 4, %v3475
      %v3477 = vrot.slane %v2829, %v3476
      %v3478 = vlaneseq
      %v3479 = vshrl.u32 %v3478, 7
      %v3480 = vsub.s32 4, %v3479
      %v3481 = vrot.slane %v2904, %v3480
      %v3482 = vlaneseq
      %v3483 = vshrl.u32 %v3482, 7
      %v3484 = vsub.s32 4, %v3483
      %v3485 = vrot.slane %v2906, %v3484
      %v3486 = vmul.f32 %v1929, %v3473
      %v3487 = vmul.f32 %v1931, %v3477
      %v3488 = vmul.f32 %v1982, %v3481
      %v3489 = vmul.f32 %v1984, %v3485
      %v3490 = vadd.f32 %v3486, 0.0
      %v3491 = vadd.f32 %v3487, 0.0
      %v3492 = vadd.f32 %v3488, 0.0
      %v3493 = vadd.f32 %v3489, 0.0
      %v3494 = vlaneseq
      %v3495 = vshrl.u32 %v3494, 7
      %v3496 = vsub.s32 5, %v3495
      %v3497 = vrot.slane %v2827, %v3496
      %v3498 = vlaneseq
      %v3499 = vshrl.u32 %v3498, 7
      %v3500 = vsub.s32 5, %v3499
      %v3501 = vrot.slane %v2829, %v3500
      %v3502 = vlaneseq
      %v3503 = vshrl.u32 %v3502, 7
      %v3504 = vsub.s32 5, %v3503
      %v3505 = vrot.slane %v2904, %v3504
      %v3506 = vlaneseq
      %v3507 = vshrl.u32 %v3506, 7
      %v3508 = vsub.s32 5, %v3507
      %v3509 = vrot.slane %v2906, %v3508
      %v3510 = vmul.f32 %v1933, %v3497
      %v3511 = vmul.f32 %v1935, %v3501
      %v3512 = vmul.f32 %v1986, %v3505
      %v3513 = vmul.f32 %v1988, %v3509
      %v3514 = vadd.f32 %v3490, %v3510
      %v3515 = vadd.f32 %v3491, %v3511
      %v3516 = vadd.f32 %v3492, %v3512
      %v3517 = vadd.f32 %v3493, %v3513
      %v3518 = vlaneseq
      %v3519 = vshrl.u32 %v3518, 7
      %v3520 = vsub.s32 6, %v3519
      %v3521 = vrot.slane %v2827, %v3520
      %v3522 = vlaneseq
      %v3523 = vshrl.u32 %v3522, 7
      %v3524 = vsub.s32 6, %v3523
      %v3525 = vrot.slane %v2829, %v3524
      %v3526 = vlaneseq
      %v3527 = vshrl.u32 %v3526, 7
      %v3528 = vsub.s32 6, %v3527
      %v3529 = vrot.slane %v2904, %v3528
      %v3530 = vlaneseq
      %v3531 = vshrl.u32 %v3530, 7
      %v3532 = vsub.s32 6, %v3531
      %v3533 = vrot.slane %v2906, %v3532
      %v3534 = vmul.f32 %v1939, %v3521
      %v3535 = vmul.f32 %v1941, %v3525
      %v3536 = vmul.f32 %v1992, %v3529
      %v3537 = vmul.f32 %v1994, %v3533
      %v3538 = vadd.f32 %v3514, %v3534
      %v3539 = vadd.f32 %v3515, %v3535
      %v3540 = vadd.f32 %v3516, %v3536
      %v3541 = vadd.f32 %v3517, %v3537
      %v3542 = vlaneseq
      %v3543 = vshrl.u32 %v3542, 7
      %v3544 = vsub.s32 7, %v3543
      %v3545 = vrot.slane %v2827, %v3544
      %v3546 = vlaneseq
      %v3547 = vshrl.u32 %v3546, 7
      %v3548 = vsub.s32 7, %v3547
      %v3549 = vrot.slane %v2829, %v3548
      %v3550 = vlaneseq
      %v3551 = vshrl.u32 %v3550, 7
      %v3552 = vsub.s32 7, %v3551
      %v3553 = vrot.slane %v2904, %v3552
      %v3554 = vlaneseq
      %v3555 = vshrl.u32 %v3554, 7
      %v3556 = vsub.s32 7, %v3555
      %v3557 = vrot.slane %v2906, %v3556
      %v3558 = vmul.f32 %v1943, %v3545
      %v3559 = vmul.f32 %v1945, %v3549
      %v3560 = vmul.f32 %v1996, %v3553
      %v3561 = vmul.f32 %v1998, %v3557
      %v3562 = vadd.f32 %v3538, %v3558
      %v3563 = vadd.f32 %v3539, %v3559
      %v3564 = vadd.f32 %v3540, %v3560
      %v3565 = vadd.f32 %v3541, %v3561
      %3570 = vrot.lane.b32.xlu0 %v3562, 64
      %v3571 = vpop.permute.xlu0 %3570
      %3572 = vrot.lane.b32.xlu0 %v3563, 64
      %v3573 = vpop.permute.xlu0 %3572
      %3574 = vrot.lane.b32.xlu0 %v3564, 64
      %v3575 = vpop.permute.xlu0 %3574
      %3576 = vrot.lane.b32.xlu0 %v3565, 64
      %v3577 = vpop.permute.xlu0 %3576
      %v3578 = vsel %vm3016, %v3571, %v3573
      %v3579 = vsel %vm3016, %v3573, %v3575
      %v3580 = vsel %vm3016, %v3575, %v3577
      %v3583 = vsel %vm3016, 0.0, %v3571
      %v3584 = vsel %vm3016, %v3577, 0.0
      %v3587 = vrot.slane %v3583, 7
      %v3588 = vrot.slane %v3578, 7
      %v3589 = vrot.slane %v3579, 7
      %v3590 = vrot.slane %v3580, 7
      %v3591 = vrot.slane %v3584, 7
      %v3597 = vsel %vm2448, 0.0, %v3587
      %v3598 = vsel %vm2448, 0.0, %v3588
      %v3599 = vsel %vm2448, 0.0, %v3589
      %v3600 = vsel %vm2448, 0.0, %v3590
      %v3601 = vsel %vm2448, 0.0, %v3591
      %v3602 = vsel %vm2448, %v3587, 0.0
      %v3603 = vsel %vm2448, %v3588, 0.0
      %v3604 = vsel %vm2448, %v3589, 0.0
      %v3605 = vsel %vm2448, %v3590, 0.0
      %v3606 = vsel %vm2448, %v3591, 0.0
      %v3617 = vrot.slane %v3597, 1
      %v3618 = vrot.slane %v3602, 1
      %v3619 = vsel %vm2478, %v3617, %v3618
      %v3620 = vrot.slane %v3598, 1
      %v3621 = vrot.slane %v3603, 1
      %v3622 = vsel %vm2478, %v3620, %v3621
      %v3623 = vrot.slane %v3599, 1
      %v3624 = vrot.slane %v3604, 1
      %v3625 = vsel %vm2478, %v3623, %v3624
      %v3626 = vrot.slane %v3600, 1
      %v3627 = vrot.slane %v3605, 1
      %v3628 = vsel %vm2478, %v3626, %v3627
      %v3629 = vrot.slane %v3601, 1
      %v3630 = vrot.slane %v3606, 1
      %v3631 = vsel %vm2478, %v3629, %v3630
      %v3637 = vrot.slane %v3597, 2
      %v3638 = vrot.slane %v3602, 2
      %v3639 = vsel %vm2473, %v3637, %v3638
      %v3640 = vrot.slane %v3598, 2
      %v3641 = vrot.slane %v3603, 2
      %v3642 = vsel %vm2473, %v3640, %v3641
      %v3643 = vrot.slane %v3599, 2
      %v3644 = vrot.slane %v3604, 2
      %v3645 = vsel %vm2473, %v3643, %v3644
      %v3646 = vrot.slane %v3600, 2
      %v3647 = vrot.slane %v3605, 2
      %v3648 = vsel %vm2473, %v3646, %v3647
      %v3649 = vrot.slane %v3601, 2
      %v3650 = vrot.slane %v3606, 2
      %v3651 = vsel %vm2473, %v3649, %v3650
      %v3657 = vpack.c.bf16 %v3223, %v3036
      %v3658 = vpack.c.bf16 %v3224, %v3037
      %v3659 = vpack.c.bf16 %v3225, %v3038
      %v3660 = vpack.c.bf16 %v3226, %v3039
      %v3661 = vpack.c.bf16 %v3227, %v3040
      %v3662 = vpack.c.bf16 %v3245, %v3058
      %v3663 = vpack.c.bf16 %v3248, %v3061
      %v3664 = vpack.c.bf16 %v3251, %v3064
      %v3665 = vpack.c.bf16 %v3254, %v3067
      %v3666 = vpack.c.bf16 %v3257, %v3070
      %v3667 = vpack.c.bf16 %v3265, %v3078
      %v3668 = vpack.c.bf16 %v3268, %v3081
      %v3669 = vpack.c.bf16 %v3271, %v3084
      %v3670 = vpack.c.bf16 %v3274, %v3087
      %v3671 = vpack.c.bf16 %v3277, %v3090
      %v3672 = vpack.c.bf16 %v3597, %v3410
      %v3673 = vpack.c.bf16 %v3598, %v3411
      %v3674 = vpack.c.bf16 %v3599, %v3412
      %v3675 = vpack.c.bf16 %v3600, %v3413
      %v3676 = vpack.c.bf16 %v3601, %v3414
      %v3677 = vpack.c.bf16 %v3619, %v3432
      %v3678 = vpack.c.bf16 %v3622, %v3435
      %v3679 = vpack.c.bf16 %v3625, %v3438
      %v3680 = vpack.c.bf16 %v3628, %v3441
      %v3681 = vpack.c.bf16 %v3631, %v3444
      %v3682 = vpack.c.bf16 %v3639, %v3452
      %v3683 = vpack.c.bf16 %v3642, %v3455
      %v3684 = vpack.c.bf16 %v3645, %v3458
      %v3685 = vpack.c.bf16 %v3648, %v3461
      %v3686 = vpack.c.bf16 %v3651, %v3464
      %v3927 = vunpack.c.l.b16 %v406
      %v3928 = vunpack.c.l.b16 %v407
      %v3929 = vunpack.c.l.b16 %v408
      %v3930 = vunpack.c.l.b16 %v409
      %v3931 = vunpack.c.l.b16 %v410
      %v3932 = vunpack.c.l.b16 %v411
      %v3933 = vunpack.c.l.b16 %v412
      %v3934 = vunpack.c.l.b16 %v413
      %v3935 = vunpack.c.l.b16 %v414
      %v3936 = vunpack.c.l.b16 %v415
      %v3937 = vunpack.c.l.b16 %v416
      %v3938 = vunpack.c.l.b16 %v417
      %v3939 = vunpack.c.l.b16 %v418
      %v3940 = vunpack.c.l.b16 %v419
      %v3941 = vunpack.c.l.b16 %v420
      %v3942 = vunpack.c.l.b16 %v421
      %v3943 = vunpack.c.l.b16 %v422
      %v3944 = vunpack.c.l.b16 %v423
      %v3945 = vunpack.c.l.b16 %v424
      %v3946 = vunpack.c.l.b16 %v425
      %v3947 = vunpack.c.l.b16 %v426
      %v3948 = vunpack.c.l.b16 %v427
      %v3949 = vunpack.c.l.b16 %v428
      %v3950 = vunpack.c.l.b16 %v429
      %v3951 = vunpack.c.l.b16 %v430
      %v3952 = vunpack.c.l.b16 %v431
      %v3953 = vunpack.c.l.b16 %v432
      %v3954 = vunpack.c.l.b16 %v433
      %v3955 = vunpack.c.l.b16 %v434
      %v3956 = vunpack.c.l.b16 %v435
      %v3957 = vunpack.c.l.b16 %v436
      %v3958 = vunpack.c.l.b16 %v437
      %v3959 = vunpack.c.l.b16 %v438
      %v3960 = vunpack.c.l.b16 %v439
      %v3961 = vunpack.c.l.b16 %v440
      %v3962 = vunpack.c.l.b16 %v441
      %v3963 = vunpack.c.l.b16 %v442
      %v3964 = vunpack.c.l.b16 %v443
      %v3965 = vunpack.c.l.b16 %v444
      %v3966 = vunpack.c.l.b16 %v445
      %v3967 = vunpack.c.l.b16 %v446
      %v3968 = vunpack.c.l.b16 %v447
      %v3969 = vunpack.c.l.b16 %v448
      %v3970 = vunpack.c.l.b16 %v449
      %v3971 = vunpack.c.l.b16 %v450
      %v3972 = vunpack.c.l.b16 %v451
      %v3973 = vunpack.c.l.b16 %v452
      %v3974 = vunpack.c.l.b16 %v453
      %v3975 = vunpack.c.l.b16 %v454
      %v3976 = vunpack.c.l.b16 %v455
      %v3977 = vunpack.c.l.b16 %v456
      %v3978 = vunpack.c.l.b16 %v457
      %v3979 = vunpack.c.l.b16 %v458
      %v3980 = vunpack.c.l.b16 %v459
      %v3981 = vunpack.c.l.b16 %v460
      %v3982 = vunpack.c.l.b16 %v461
      %v3983 = vunpack.c.l.b16 %v462
      %v3984 = vunpack.c.l.b16 %v463
      %v3985 = vunpack.c.l.b16 %v464
      %v3986 = vunpack.c.l.b16 %v465
      %v3987 = vunpack.c.l.b16 %v466
      %v3988 = vunpack.c.l.b16 %v467
      %v3989 = vunpack.c.l.b16 %v468
      %v3990 = vunpack.c.l.b16 %v469
      %v3991 = vunpack.c.l.b16 %v470
      %v3992 = vunpack.c.l.b16 %v471
      %v3993 = vunpack.c.l.b16 %v472
      %v3994 = vunpack.c.l.b16 %v473
      %v3995 = vunpack.c.l.b16 %v474
      %v3996 = vunpack.c.l.b16 %v475
      %v3997 = vunpack.c.l.b16 %v476
      %v3998 = vunpack.c.l.b16 %v477
      %v3999 = vunpack.c.l.b16 %v478
      %v4000 = vunpack.c.l.b16 %v479
      %v4001 = vunpack.c.l.b16 %v480
      %v4002 = vunpack.c.l.b16 %v481
      %v4003 = vunpack.c.l.b16 %v482
      %v4004 = vunpack.c.l.b16 %v483
      %v4005 = vunpack.c.l.b16 %v484
      %v4006 = vunpack.c.l.b16 %v485
      %v4007 = vunpack.c.l.b16 %v486
      %v4008 = vunpack.c.l.b16 %v487
      %v4009 = vunpack.c.l.b16 %v488
      %v4010 = vunpack.c.l.b16 %v489
      %v4011 = vunpack.c.l.b16 %v490
      %v4012 = vunpack.c.l.b16 %v491
      %v4013 = vunpack.c.l.b16 %v492
      %v4014 = vunpack.c.l.b16 %v493
      %v4015 = vunpack.c.l.b16 %v494
      %v4016 = vunpack.c.l.b16 %v495
      %v4017 = vunpack.c.l.b16 %v496
      %v4018 = vunpack.c.l.b16 %v497
      %v4019 = vunpack.c.l.b16 %v498
      %v4020 = vunpack.c.l.b16 %v499
      %v4021 = vunpack.c.l.b16 %v500
      %v4022 = vunpack.c.l.b16 %v501
      %v4023 = vunpack.c.l.b16 %v502
      %v4024 = vunpack.c.l.b16 %v503
      %v4025 = vunpack.c.l.b16 %v504
      %v4026 = vunpack.c.l.b16 %v505
      %v4027 = vunpack.c.l.b16 %v506
      %v4028 = vunpack.c.l.b16 %v507
      %v4029 = vunpack.c.l.b16 %v508
      %v4030 = vunpack.c.l.b16 %v509
      %v4031 = vunpack.c.l.b16 %v510
      %v4032 = vunpack.c.l.b16 %v511
      %v4033 = vunpack.c.l.b16 %v512
      %v4034 = vunpack.c.l.b16 %v513
      %v4035 = vunpack.c.l.b16 %v514
      %v4036 = vunpack.c.l.b16 %v515
      %v4037 = vunpack.c.l.b16 %v516
      %v4038 = vunpack.c.l.b16 %v517
      %v4039 = vunpack.c.l.b16 %v518
      %v4040 = vunpack.c.l.b16 %v519
      %v4041 = vunpack.c.l.b16 %v520
      %v4042 = vunpack.c.l.b16 %v521
      %v4043 = vunpack.c.l.b16 %v522
      %v4044 = vunpack.c.l.b16 %v523
      %v4045 = vunpack.c.l.b16 %v524
      %v4046 = vunpack.c.l.b16 %v525
      %v4047 = vunpack.c.l.b16 %v526
      %v4048 = vunpack.c.l.b16 %v527
      %v4049 = vunpack.c.l.b16 %v528
      %v4050 = vunpack.c.l.b16 %v529
      %v4051 = vunpack.c.l.b16 %v530
      %v4052 = vunpack.c.l.b16 %v531
      %v4053 = vunpack.c.l.b16 %v532
      %v4054 = vunpack.c.l.b16 %v533
      %v4055 = vunpack.c.l.b16 %v534
      %v4056 = vunpack.c.l.b16 %v535
      %v4057 = vunpack.c.l.b16 %v536
      %v4058 = vunpack.c.l.b16 %v537
      %v4059 = vunpack.c.l.b16 %v538
      %v4060 = vunpack.c.l.b16 %v539
      %v4061 = vunpack.c.l.b16 %v540
      %v4062 = vunpack.c.l.b16 %v541
      %v4063 = vunpack.c.l.b16 %v542
      %v4064 = vunpack.c.l.b16 %v543
      %v4065 = vunpack.c.l.b16 %v544
      %v4066 = vunpack.c.l.b16 %v545
      %v4067 = vunpack.c.l.b16 %v546
      %v4068 = vunpack.c.l.b16 %v547
      %v4069 = vunpack.c.l.b16 %v548
      %v4070 = vunpack.c.l.b16 %v549
      %v4071 = vunpack.c.l.b16 %v550
      %v4072 = vunpack.c.l.b16 %v551
      %v4073 = vunpack.c.l.b16 %v552
      %v4074 = vunpack.c.l.b16 %v553
      %v4075 = vunpack.c.l.b16 %v554
      %v4076 = vunpack.c.l.b16 %v555
      %v4077 = vunpack.c.l.b16 %v556
      %v4078 = vunpack.c.l.b16 %v557
      %v4079 = vunpack.c.l.b16 %v558
      %v4080 = vunpack.c.l.b16 %v559
      %v4081 = vunpack.c.l.b16 %v560
      %v4082 = vunpack.c.l.b16 %v561
      %v4083 = vunpack.c.l.b16 %v562
      %v4084 = vunpack.c.l.b16 %v563
      %v4085 = vunpack.c.l.b16 %v564
      %v4086 = vunpack.c.l.b16 %v565
      %v4087 = vunpack.c.l.b16 %v566
      %v4088 = vunpack.c.l.b16 %v567
      %v4089 = vunpack.c.l.b16 %v568
      %v4090 = vunpack.c.l.b16 %v569
      %v4091 = vunpack.c.l.b16 %v570
      %v4092 = vunpack.c.l.b16 %v571
      %v4093 = vunpack.c.l.b16 %v572
      %v4094 = vunpack.c.l.b16 %v573
      %v4095 = vunpack.c.l.b16 %v574
      %v4096 = vunpack.c.l.b16 %v575
      %v4097 = vunpack.c.l.b16 %v576
      %v4098 = vunpack.c.l.b16 %v577
      %v4099 = vunpack.c.l.b16 %v578
      %v4100 = vunpack.c.l.b16 %v579
      %v4101 = vunpack.c.l.b16 %v580
      %v4102 = vunpack.c.l.b16 %v581
      %v4103 = vunpack.c.l.b16 %v582
      %v4104 = vunpack.c.l.b16 %v583
      %v4105 = vunpack.c.l.b16 %v584
      %v4106 = vunpack.c.l.b16 %v585
      %v4107 = vunpack.c.l.b16 %v586
      %v4108 = vunpack.c.l.b16 %v587
      %v4109 = vunpack.c.l.b16 %v588
      %v4110 = vunpack.c.l.b16 %v589
      %v4111 = vunpack.c.l.b16 %v590
      %v4112 = vunpack.c.l.b16 %v591
      %v4113 = vunpack.c.l.b16 %v592
      %v4114 = vunpack.c.l.b16 %v593
      %v4115 = vunpack.c.l.b16 %v594
      %v4116 = vunpack.c.l.b16 %v595
      %v4117 = vunpack.c.l.b16 %v596
      %v4118 = vunpack.c.l.b16 %v597
      %v4119 = vunpack.c.l.b16 %v598
      %v4120 = vunpack.c.l.b16 %v599
      %v4121 = vunpack.c.l.b16 %v600
      %v4122 = vunpack.c.l.b16 %v601
      %v4123 = vunpack.c.l.b16 %v602
      %v4124 = vunpack.c.l.b16 %v603
      %v4125 = vunpack.c.l.b16 %v604
      %v4126 = vunpack.c.l.b16 %v605
      %v4127 = vunpack.c.l.b16 %v606
      %v4128 = vunpack.c.l.b16 %v607
      %v4129 = vunpack.c.l.b16 %v608
      %v4130 = vunpack.c.l.b16 %v609
      %v4131 = vunpack.c.l.b16 %v610
      %v4132 = vunpack.c.l.b16 %v611
      %v4133 = vunpack.c.l.b16 %v612
      %v4134 = vunpack.c.l.b16 %v613
      %v4135 = vunpack.c.l.b16 %v614
      %v4136 = vunpack.c.l.b16 %v615
      %v4137 = vunpack.c.l.b16 %v616
      %v4138 = vunpack.c.l.b16 %v617
      %v4139 = vunpack.c.l.b16 %v618
      %v4140 = vunpack.c.l.b16 %v619
      %v4141 = vunpack.c.l.b16 %v620
      %v4142 = vunpack.c.l.b16 %v621
      %v4143 = vunpack.c.l.b16 %v622
      %v4144 = vunpack.c.l.b16 %v623
      %v4145 = vunpack.c.l.b16 %v624
      %v4146 = vunpack.c.l.b16 %v625
      %v4147 = vunpack.c.l.b16 %v626
      %v4148 = vunpack.c.l.b16 %v627
      %v4149 = vunpack.c.l.b16 %v628
      %v4150 = vunpack.c.l.b16 %v629
      %v4151 = vunpack.c.l.b16 %v630
      %v4152 = vunpack.c.l.b16 %v631
      %v4153 = vunpack.c.l.b16 %v632
      %v4154 = vunpack.c.l.b16 %v633
      %v4155 = vunpack.c.l.b16 %v634
      %v4156 = vunpack.c.l.b16 %v635
      %v4157 = vunpack.c.l.b16 %v636
      %v4158 = vunpack.c.l.b16 %v637
      %v4159 = vunpack.c.l.b16 %v638
      %v4160 = vunpack.c.l.b16 %v639
      %v4161 = vunpack.c.l.b16 %v640
      %v4162 = vunpack.c.l.b16 %v641
      %v4163 = vunpack.c.l.b16 %v642
      %v4164 = vunpack.c.l.b16 %v643
      %v4165 = vunpack.c.l.b16 %v644
      %v4166 = vunpack.c.l.b16 %v645
      %v4167 = vpack.c.b16 %v3928, %v3927
      %v4168 = vpack.c.b16 %v3930, %v3929
      %v4169 = vpack.c.b16 %v3932, %v3931
      %v4170 = vpack.c.b16 %v3934, %v3933
      %v4171 = vpack.c.b16 %v3936, %v3935
      %v4172 = vpack.c.b16 %v3938, %v3937
      %v4173 = vpack.c.b16 %v3940, %v3939
      %v4174 = vpack.c.b16 %v3942, %v3941
      %v4175 = vpack.c.b16 %v3944, %v3943
      %v4176 = vpack.c.b16 %v3946, %v3945
      %v4177 = vpack.c.b16 %v3948, %v3947
      %v4178 = vpack.c.b16 %v3950, %v3949
      %v4179 = vpack.c.b16 %v3952, %v3951
      %v4180 = vpack.c.b16 %v3954, %v3953
      %v4181 = vpack.c.b16 %v3956, %v3955
      %v4182 = vpack.c.b16 %v3958, %v3957
      %v4183 = vpack.c.b16 %v3960, %v3959
      %v4184 = vpack.c.b16 %v3962, %v3961
      %v4185 = vpack.c.b16 %v3964, %v3963
      %v4186 = vpack.c.b16 %v3966, %v3965
      %v4187 = vpack.c.b16 %v3968, %v3967
      %v4188 = vpack.c.b16 %v3970, %v3969
      %v4189 = vpack.c.b16 %v3972, %v3971
      %v4190 = vpack.c.b16 %v3974, %v3973
      %v4191 = vpack.c.b16 %v3976, %v3975
      %v4192 = vpack.c.b16 %v3978, %v3977
      %v4193 = vpack.c.b16 %v3980, %v3979
      %v4194 = vpack.c.b16 %v3982, %v3981
      %v4195 = vpack.c.b16 %v3984, %v3983
      %v4196 = vpack.c.b16 %v3986, %v3985
      %v4197 = vpack.c.b16 %v3988, %v3987
      %v4198 = vpack.c.b16 %v3990, %v3989
      %v4199 = vpack.c.b16 %v3992, %v3991
      %v4200 = vpack.c.b16 %v3994, %v3993
      %v4201 = vpack.c.b16 %v3996, %v3995
      %v4202 = vpack.c.b16 %v3998, %v3997
      %v4203 = vpack.c.b16 %v4000, %v3999
      %v4204 = vpack.c.b16 %v4002, %v4001
      %v4205 = vpack.c.b16 %v4004, %v4003
      %v4206 = vpack.c.b16 %v4006, %v4005
      %v4207 = vpack.c.b16 %v4008, %v4007
      %v4208 = vpack.c.b16 %v4010, %v4009
      %v4209 = vpack.c.b16 %v4012, %v4011
      %v4210 = vpack.c.b16 %v4014, %v4013
      %v4211 = vpack.c.b16 %v4016, %v4015
      %v4212 = vpack.c.b16 %v4018, %v4017
      %v4213 = vpack.c.b16 %v4020, %v4019
      %v4214 = vpack.c.b16 %v4022, %v4021
      %v4215 = vpack.c.b16 %v4024, %v4023
      %v4216 = vpack.c.b16 %v4026, %v4025
      %v4217 = vpack.c.b16 %v4028, %v4027
      %v4218 = vpack.c.b16 %v4030, %v4029
      %v4219 = vpack.c.b16 %v4032, %v4031
      %v4220 = vpack.c.b16 %v4034, %v4033
      %v4221 = vpack.c.b16 %v4036, %v4035
      %v4222 = vpack.c.b16 %v4038, %v4037
      %v4223 = vpack.c.b16 %v4040, %v4039
      %v4224 = vpack.c.b16 %v4042, %v4041
      %v4225 = vpack.c.b16 %v4044, %v4043
      %v4226 = vpack.c.b16 %v4046, %v4045
      %v4227 = vpack.c.b16 %v4048, %v4047
      %v4228 = vpack.c.b16 %v4050, %v4049
      %v4229 = vpack.c.b16 %v4052, %v4051
      %v4230 = vpack.c.b16 %v4054, %v4053
      %v4231 = vpack.c.b16 %v4056, %v4055
      %v4232 = vpack.c.b16 %v4058, %v4057
      %v4233 = vpack.c.b16 %v4060, %v4059
      %v4234 = vpack.c.b16 %v4062, %v4061
      %v4235 = vpack.c.b16 %v4064, %v4063
      %v4236 = vpack.c.b16 %v4066, %v4065
      %v4237 = vpack.c.b16 %v4068, %v4067
      %v4238 = vpack.c.b16 %v4070, %v4069
      %v4239 = vpack.c.b16 %v4072, %v4071
      %v4240 = vpack.c.b16 %v4074, %v4073
      %v4241 = vpack.c.b16 %v4076, %v4075
      %v4242 = vpack.c.b16 %v4078, %v4077
      %v4243 = vpack.c.b16 %v4080, %v4079
      %v4244 = vpack.c.b16 %v4082, %v4081
      %v4245 = vpack.c.b16 %v4084, %v4083
      %v4246 = vpack.c.b16 %v4086, %v4085
      %v4247 = vpack.c.b16 %v4088, %v4087
      %v4248 = vpack.c.b16 %v4090, %v4089
      %v4249 = vpack.c.b16 %v4092, %v4091
      %v4250 = vpack.c.b16 %v4094, %v4093
      %v4251 = vpack.c.b16 %v4096, %v4095
      %v4252 = vpack.c.b16 %v4098, %v4097
      %v4253 = vpack.c.b16 %v4100, %v4099
      %v4254 = vpack.c.b16 %v4102, %v4101
      %v4255 = vpack.c.b16 %v4104, %v4103
      %v4256 = vpack.c.b16 %v4106, %v4105
      %v4257 = vpack.c.b16 %v4108, %v4107
      %v4258 = vpack.c.b16 %v4110, %v4109
      %v4259 = vpack.c.b16 %v4112, %v4111
      %v4260 = vpack.c.b16 %v4114, %v4113
      %v4261 = vpack.c.b16 %v4116, %v4115
      %v4262 = vpack.c.b16 %v4118, %v4117
      %v4263 = vpack.c.b16 %v4120, %v4119
      %v4264 = vpack.c.b16 %v4122, %v4121
      %v4265 = vpack.c.b16 %v4124, %v4123
      %v4266 = vpack.c.b16 %v4126, %v4125
      %v4267 = vpack.c.b16 %v4128, %v4127
      %v4268 = vpack.c.b16 %v4130, %v4129
      %v4269 = vpack.c.b16 %v4132, %v4131
      %v4270 = vpack.c.b16 %v4134, %v4133
      %v4271 = vpack.c.b16 %v4136, %v4135
      %v4272 = vpack.c.b16 %v4138, %v4137
      %v4273 = vpack.c.b16 %v4140, %v4139
      %v4274 = vpack.c.b16 %v4142, %v4141
      %v4275 = vpack.c.b16 %v4144, %v4143
      %v4276 = vpack.c.b16 %v4146, %v4145
      %v4277 = vpack.c.b16 %v4148, %v4147
      %v4278 = vpack.c.b16 %v4150, %v4149
      %v4279 = vpack.c.b16 %v4152, %v4151
      %v4280 = vpack.c.b16 %v4154, %v4153
      %v4281 = vpack.c.b16 %v4156, %v4155
      %v4282 = vpack.c.b16 %v4158, %v4157
      %v4283 = vpack.c.b16 %v4160, %v4159
      %v4284 = vpack.c.b16 %v4162, %v4161
      %v4285 = vpack.c.b16 %v4164, %v4163
      %v4286 = vpack.c.b16 %v4166, %v4165
      %4407 = vmatprep.subr.bf16.mxu0 0
      %4408 = vmatpush1.bf16.msra.mxu0 %v4167
      %4409 = vmatprep.subr.bf16.mxu0 0
      %4410 = vmatpush1.bf16.msra.mxu0 %v4168
      %4411 = vmatprep.subr.bf16.mxu0 0
      %4412 = vmatpush1.bf16.msra.mxu0 %v4169
      %4413 = vmatprep.subr.bf16.mxu0 0
      %4414 = vmatpush1.bf16.msra.mxu0 %v4170
      %4415 = vmatprep.subr.bf16.mxu0 0
      %4416 = vmatpush1.bf16.msra.mxu0 %v4171
      %4417 = vmatprep.subr.bf16.mxu0 0
      %4418 = vmatpush1.bf16.msra.mxu0 %v4172
      %4419 = vmatprep.subr.bf16.mxu0 0
      %4420 = vmatpush1.bf16.msra.mxu0 %v4173
      %4421 = vmatprep.subr.bf16.mxu0 0
      %4422 = vmatpush1.bf16.msra.mxu0 %v4174
      %4423 = vmatprep.subr.bf16.mxu0 0
      %4424 = vmatpush1.bf16.msra.mxu0 %v4175
      %4425 = vmatprep.subr.bf16.mxu0 0
      %4426 = vmatpush1.bf16.msra.mxu0 %v4176
      %4427 = vmatprep.subr.bf16.mxu0 0
      %4428 = vmatpush1.bf16.msra.mxu0 %v4177
      %4429 = vmatprep.subr.bf16.mxu0 0
      %4430 = vmatpush1.bf16.msra.mxu0 %v4178
      %4431 = vmatprep.subr.bf16.mxu0 0
      %4432 = vmatpush1.bf16.msra.mxu0 %v4179
      %4433 = vmatprep.subr.bf16.mxu0 0
      %4434 = vmatpush1.bf16.msra.mxu0 %v4180
      %4435 = vmatprep.subr.bf16.mxu0 0
      %4436 = vmatpush1.bf16.msra.mxu0 %v4181
      %4437 = vmatprep.subr.bf16.mxu0 0
      %4438 = vmatpush1.bf16.msra.mxu0 %v4182
      %4439 = vmatprep.mubr.bf16.mxu0 %v3658
      %4440 = vmatmul.mubr.bf16.gmra.mrb[0].mxu0 %v3657
      %v4441 = vpop.f32.mrb[0].mxu0
      %v4442 = vadd.f32 0.0, %v4441
      %v4443 = vpop.f32.mrb[0].mxu0
      %v4444 = vpop.f32.mrb[0].mxu0
      %v4445 = vadd.f32 0.0, %v4444
      %v4446 = vpop.f32.mrb[0].mxu0
      %4447 = vmatprep.mubr.bf16.mxu0 %v3673
      %4448 = vmatmul.mubr.bf16.gmra.mrb[0].mxu0 %v3672
      %v4449 = vpop.f32.mrb[0].mxu0
      %v4450 = vadd.f32 0.0, %v4449
      %v4451 = vpop.f32.mrb[0].mxu0
      %v4452 = vpop.f32.mrb[0].mxu0
      %v4453 = vadd.f32 0.0, %v4452
      %v4454 = vpop.f32.mrb[0].mxu0
      %4455 = vdwg.mxu0
      %4456 = vmatprep.subr.bf16.mxu0 0
      %4457 = vmatpush1.bf16.msra.mxu0 %v4183
      %4458 = vmatprep.subr.bf16.mxu0 0
      %4459 = vmatpush1.bf16.msra.mxu0 %v4184
      %4460 = vmatprep.subr.bf16.mxu0 0
      %4461 = vmatpush1.bf16.msra.mxu0 %v4185
      %4462 = vmatprep.subr.bf16.mxu0 0
      %4463 = vmatpush1.bf16.msra.mxu0 %v4186
      %4464 = vmatprep.subr.bf16.mxu0 0
      %4465 = vmatpush1.bf16.msra.mxu0 %v4187
      %4466 = vmatprep.subr.bf16.mxu0 0
      %4467 = vmatpush1.bf16.msra.mxu0 %v4188
      %4468 = vmatprep.subr.bf16.mxu0 0
      %4469 = vmatpush1.bf16.msra.mxu0 %v4189
      %4470 = vmatprep.subr.bf16.mxu0 0
      %4471 = vmatpush1.bf16.msra.mxu0 %v4190
      %4472 = vmatprep.subr.bf16.mxu0 0
      %4473 = vmatpush1.bf16.msra.mxu0 %v4191
      %4474 = vmatprep.subr.bf16.mxu0 0
      %4475 = vmatpush1.bf16.msra.mxu0 %v4192
      %4476 = vmatprep.subr.bf16.mxu0 0
      %4477 = vmatpush1.bf16.msra.mxu0 %v4193
      %4478 = vmatprep.subr.bf16.mxu0 0
      %4479 = vmatpush1.bf16.msra.mxu0 %v4194
      %4480 = vmatprep.subr.bf16.mxu0 0
      %4481 = vmatpush1.bf16.msra.mxu0 %v4195
      %4482 = vmatprep.subr.bf16.mxu0 0
      %4483 = vmatpush1.bf16.msra.mxu0 %v4196
      %4484 = vmatprep.subr.bf16.mxu0 0
      %4485 = vmatpush1.bf16.msra.mxu0 %v4197
      %4486 = vmatprep.subr.bf16.mxu0 0
      %4487 = vmatpush1.bf16.msra.mxu0 %v4198
      %4488 = vmatprep.mubr.bf16.mxu0 %v3660
      %4489 = vmatmul.mubr.bf16.gmra.mrb[0].mxu0 %v3659
      %v4490 = vpop.f32.mrb[0].mxu0
      %v4491 = vadd.f32 %v4442, %v4490
      %v4492 = vpop.f32.mrb[0].mxu0
      %v4493 = vpop.f32.mrb[0].mxu0
      %v4494 = vadd.f32 %v4445, %v4493
      %v4495 = vpop.f32.mrb[0].mxu0
      %4496 = vmatprep.mubr.bf16.mxu0 %v3675
      %4497 = vmatmul.mubr.bf16.gmra.mrb[0].mxu0 %v3674
      %v4498 = vpop.f32.mrb[0].mxu0
      %v4499 = vadd.f32 %v4450, %v4498
      %v4500 = vpop.f32.mrb[0].mxu0
      %v4501 = vpop.f32.mrb[0].mxu0
      %v4502 = vadd.f32 %v4453, %v4501
      %v4503 = vpop.f32.mrb[0].mxu0
      %4504 = vdwg.mxu0
      %4505 = vmatprep.subr.bf16.mxu0 0
      %4506 = vmatpush1.bf16.msra.mxu0 %v4199
      %4507 = vmatprep.subr.bf16.mxu0 0
      %4508 = vmatpush1.bf16.msra.mxu0 %v4200
      %4509 = vmatprep.subr.bf16.mxu0 0
      %4510 = vmatpush1.bf16.msra.mxu0 %v4201
      %4511 = vmatprep.subr.bf16.mxu0 0
      %4512 = vmatpush1.bf16.msra.mxu0 %v4202
      %4513 = vmatprep.subr.bf16.mxu0 0
      %4514 = vmatpush1.bf16.msra.mxu0 %v4203
      %4515 = vmatprep.subr.bf16.mxu0 0
      %4516 = vmatpush1.bf16.msra.mxu0 %v4204
      %4517 = vmatprep.subr.bf16.mxu0 0
      %4518 = vmatpush1.bf16.msra.mxu0 %v4205
      %4519 = vmatprep.subr.bf16.mxu0 0
      %4520 = vmatpush1.bf16.msra.mxu0 %v4206
      %4521 = vmatprep.subr.bf16.mxu0 0
      %4522 = vmatpush1.bf16.msra.mxu0 %v4207
      %4523 = vmatprep.subr.bf16.mxu0 0
      %4524 = vmatpush1.bf16.msra.mxu0 %v4208
      %4525 = vmatprep.subr.bf16.mxu0 0
      %4526 = vmatpush1.bf16.msra.mxu0 %v4209
      %4527 = vmatprep.subr.bf16.mxu0 0
      %4528 = vmatpush1.bf16.msra.mxu0 %v4210
      %4529 = vmatprep.subr.bf16.mxu0 0
      %4530 = vmatpush1.bf16.msra.mxu0 %v4211
      %4531 = vmatprep.subr.bf16.mxu0 0
      %4532 = vmatpush1.bf16.msra.mxu0 %v4212
      %4533 = vmatprep.subr.bf16.mxu0 0
      %4534 = vmatpush1.bf16.msra.mxu0 %v4213
      %4535 = vmatprep.subr.bf16.mxu0 0
      %4536 = vmatpush1.bf16.msra.mxu0 %v4214
      %4537 = vmatprep.mubr.bf16.mxu0 %v3662
      %4538 = vmatmul.mubr.bf16.gmra.mrb[0].mxu0 %v3661
      %v4539 = vpop.f32.mrb[0].mxu0
      %v4540 = vadd.f32 %v4491, %v4539
      %v4541 = vpop.f32.mrb[0].mxu0
      %v4542 = vpop.f32.mrb[0].mxu0
      %v4543 = vadd.f32 %v4494, %v4542
      %v4544 = vpop.f32.mrb[0].mxu0
      %4545 = vmatprep.mubr.bf16.mxu0 %v3677
      %4546 = vmatmul.mubr.bf16.gmra.mrb[0].mxu0 %v3676
      %v4547 = vpop.f32.mrb[0].mxu0
      %v4548 = vadd.f32 %v4499, %v4547
      %v4549 = vpop.f32.mrb[0].mxu0
      %v4550 = vpop.f32.mrb[0].mxu0
      %v4551 = vadd.f32 %v4502, %v4550
      %v4552 = vpop.f32.mrb[0].mxu0
      %4553 = vdwg.mxu0
      %4554 = vmatprep.subr.bf16.mxu0 0
      %4555 = vmatpush1.bf16.msra.mxu0 %v4215
      %4556 = vmatprep.subr.bf16.mxu0 0
      %4557 = vmatpush1.bf16.msra.mxu0 %v4216
      %4558 = vmatprep.subr.bf16.mxu0 0
      %4559 = vmatpush1.bf16.msra.mxu0 %v4217
      %4560 = vmatprep.subr.bf16.mxu0 0
      %4561 = vmatpush1.bf16.msra.mxu0 %v4218
      %4562 = vmatprep.subr.bf16.mxu0 0
      %4563 = vmatpush1.bf16.msra.mxu0 %v4219
      %4564 = vmatprep.subr.bf16.mxu0 0
      %4565 = vmatpush1.bf16.msra.mxu0 %v4220
      %4566 = vmatprep.subr.bf16.mxu0 0
      %4567 = vmatpush1.bf16.msra.mxu0 %v4221
      %4568 = vmatprep.subr.bf16.mxu0 0
      %4569 = vmatpush1.bf16.msra.mxu0 %v4222
      %4570 = vmatprep.subr.bf16.mxu0 0
      %4571 = vmatpush1.bf16.msra.mxu0 %v4223
      %4572 = vmatprep.subr.bf16.mxu0 0
      %4573 = vmatpush1.bf16.msra.mxu0 %v4224
      %4574 = vmatprep.subr.bf16.mxu0 0
      %4575 = vmatpush1.bf16.msra.mxu0 %v4225
      %4576 = vmatprep.subr.bf16.mxu0 0
      %4577 = vmatpush1.bf16.msra.mxu0 %v4226
      %4578 = vmatprep.subr.bf16.mxu0 0
      %4579 = vmatpush1.bf16.msra.mxu0 %v4227
      %4580 = vmatprep.subr.bf16.mxu0 0
      %4581 = vmatpush1.bf16.msra.mxu0 %v4228
      %4582 = vmatprep.subr.bf16.mxu0 0
      %4583 = vmatpush1.bf16.msra.mxu0 %v4229
      %4584 = vmatprep.subr.bf16.mxu0 0
      %4585 = vmatpush1.bf16.msra.mxu0 %v4230
      %4586 = vmatprep.mubr.bf16.mxu0 %v3664
      %4587 = vmatmul.mubr.bf16.gmra.mrb[0].mxu0 %v3663
      %v4588 = vpop.f32.mrb[0].mxu0
      %v4589 = vadd.f32 %v4540, %v4588
      %v4590 = vpop.f32.mrb[0].mxu0
      %v4591 = vpop.f32.mrb[0].mxu0
      %v4592 = vadd.f32 %v4543, %v4591
      %v4593 = vpop.f32.mrb[0].mxu0
      %4594 = vmatprep.mubr.bf16.mxu0 %v3679
      %4595 = vmatmul.mubr.bf16.gmra.mrb[0].mxu0 %v3678
      %v4596 = vpop.f32.mrb[0].mxu0
      %v4597 = vadd.f32 %v4548, %v4596
      %v4598 = vpop.f32.mrb[0].mxu0
      %v4599 = vpop.f32.mrb[0].mxu0
      %v4600 = vadd.f32 %v4551, %v4599
      %v4601 = vpop.f32.mrb[0].mxu0
      %4602 = vdwg.mxu0
      %4603 = vmatprep.subr.bf16.mxu0 0
      %4604 = vmatpush1.bf16.msra.mxu0 %v4231
      %4605 = vmatprep.subr.bf16.mxu0 0
      %4606 = vmatpush1.bf16.msra.mxu0 %v4232
      %4607 = vmatprep.subr.bf16.mxu0 0
      %4608 = vmatpush1.bf16.msra.mxu0 %v4233
      %4609 = vmatprep.subr.bf16.mxu0 0
      %4610 = vmatpush1.bf16.msra.mxu0 %v4234
      %4611 = vmatprep.subr.bf16.mxu0 0
      %4612 = vmatpush1.bf16.msra.mxu0 %v4235
      %4613 = vmatprep.subr.bf16.mxu0 0
      %4614 = vmatpush1.bf16.msra.mxu0 %v4236
      %4615 = vmatprep.subr.bf16.mxu0 0
      %4616 = vmatpush1.bf16.msra.mxu0 %v4237
      %4617 = vmatprep.subr.bf16.mxu0 0
      %4618 = vmatpush1.bf16.msra.mxu0 %v4238
      %4619 = vmatprep.subr.bf16.mxu0 0
      %4620 = vmatpush1.bf16.msra.mxu0 %v4239
      %4621 = vmatprep.subr.bf16.mxu0 0
      %4622 = vmatpush1.bf16.msra.mxu0 %v4240
      %4623 = vmatprep.subr.bf16.mxu0 0
      %4624 = vmatpush1.bf16.msra.mxu0 %v4241
      %4625 = vmatprep.subr.bf16.mxu0 0
      %4626 = vmatpush1.bf16.msra.mxu0 %v4242
      %4627 = vmatprep.subr.bf16.mxu0 0
      %4628 = vmatpush1.bf16.msra.mxu0 %v4243
      %4629 = vmatprep.subr.bf16.mxu0 0
      %4630 = vmatpush1.bf16.msra.mxu0 %v4244
      %4631 = vmatprep.subr.bf16.mxu0 0
      %4632 = vmatpush1.bf16.msra.mxu0 %v4245
      %4633 = vmatprep.subr.bf16.mxu0 0
      %4634 = vmatpush1.bf16.msra.mxu0 %v4246
      %4635 = vmatprep.mubr.bf16.mxu0 %v3666
      %4636 = vmatmul.mubr.bf16.gmra.mrb[0].mxu0 %v3665
      %v4637 = vpop.f32.mrb[0].mxu0
      %v4638 = vadd.f32 %v4589, %v4637
      %v4639 = vpop.f32.mrb[0].mxu0
      %v4640 = vpop.f32.mrb[0].mxu0
      %v4641 = vadd.f32 %v4592, %v4640
      %v4642 = vpop.f32.mrb[0].mxu0
      %4643 = vmatprep.mubr.bf16.mxu0 %v3681
      %4644 = vmatmul.mubr.bf16.gmra.mrb[0].mxu0 %v3680
      %v4645 = vpop.f32.mrb[0].mxu0
      %v4646 = vadd.f32 %v4597, %v4645
      %v4647 = vpop.f32.mrb[0].mxu0
      %v4648 = vpop.f32.mrb[0].mxu0
      %v4649 = vadd.f32 %v4600, %v4648
      %v4650 = vpop.f32.mrb[0].mxu0
      %4651 = vdwg.mxu0
      %4652 = vmatprep.subr.bf16.mxu0 0
      %4653 = vmatpush1.bf16.msra.mxu0 %v4247
      %4654 = vmatprep.subr.bf16.mxu0 0
      %4655 = vmatpush1.bf16.msra.mxu0 %v4248
      %4656 = vmatprep.subr.bf16.mxu0 0
      %4657 = vmatpush1.bf16.msra.mxu0 %v4249
      %4658 = vmatprep.subr.bf16.mxu0 0
      %4659 = vmatpush1.bf16.msra.mxu0 %v4250
      %4660 = vmatprep.subr.bf16.mxu0 0
      %4661 = vmatpush1.bf16.msra.mxu0 %v4251
      %4662 = vmatprep.subr.bf16.mxu0 0
      %4663 = vmatpush1.bf16.msra.mxu0 %v4252
      %4664 = vmatprep.subr.bf16.mxu0 0
      %4665 = vmatpush1.bf16.msra.mxu0 %v4253
      %4666 = vmatprep.subr.bf16.mxu0 0
      %4667 = vmatpush1.bf16.msra.mxu0 %v4254
      %4668 = vmatprep.subr.bf16.mxu0 0
      %4669 = vmatpush1.bf16.msra.mxu0 %v4255
      %4670 = vmatprep.subr.bf16.mxu0 0
      %4671 = vmatpush1.bf16.msra.mxu0 %v4256
      %4672 = vmatprep.subr.bf16.mxu0 0
      %4673 = vmatpush1.bf16.msra.mxu0 %v4257
      %4674 = vmatprep.subr.bf16.mxu0 0
      %4675 = vmatpush1.bf16.msra.mxu0 %v4258
      %4676 = vmatprep.subr.bf16.mxu0 0
      %4677 = vmatpush1.bf16.msra.mxu0 %v4259
      %4678 = vmatprep.subr.bf16.mxu0 0
      %4679 = vmatpush1.bf16.msra.mxu0 %v4260
      %4680 = vmatprep.subr.bf16.mxu0 0
      %4681 = vmatpush1.bf16.msra.mxu0 %v4261
      %4682 = vmatprep.subr.bf16.mxu0 0
      %4683 = vmatpush1.bf16.msra.mxu0 %v4262
      %4684 = vmatprep.mubr.bf16.mxu0 %v3668
      %4685 = vmatmul.mubr.bf16.gmra.mrb[0].mxu0 %v3667
      %v4686 = vpop.f32.mrb[0].mxu0
      %v4687 = vadd.f32 %v4638, %v4686
      %v4688 = vpop.f32.mrb[0].mxu0
      %v4689 = vpop.f32.mrb[0].mxu0
      %v4690 = vadd.f32 %v4641, %v4689
      %v4691 = vpop.f32.mrb[0].mxu0
      %4692 = vmatprep.mubr.bf16.mxu0 %v3683
      %4693 = vmatmul.mubr.bf16.gmra.mrb[0].mxu0 %v3682
      %v4694 = vpop.f32.mrb[0].mxu0
      %v4695 = vadd.f32 %v4646, %v4694
      %v4696 = vpop.f32.mrb[0].mxu0
      %v4697 = vpop.f32.mrb[0].mxu0
      %v4698 = vadd.f32 %v4649, %v4697
      %v4699 = vpop.f32.mrb[0].mxu0
      %4700 = vdwg.mxu0
      %4701 = vmatprep.subr.bf16.mxu0 0
      %4702 = vmatpush1.bf16.msra.mxu0 %v4263
      %4703 = vmatprep.subr.bf16.mxu0 0
      %4704 = vmatpush1.bf16.msra.mxu0 %v4264
      %4705 = vmatprep.subr.bf16.mxu0 0
      %4706 = vmatpush1.bf16.msra.mxu0 %v4265
      %4707 = vmatprep.subr.bf16.mxu0 0
      %4708 = vmatpush1.bf16.msra.mxu0 %v4266
      %4709 = vmatprep.subr.bf16.mxu0 0
      %4710 = vmatpush1.bf16.msra.mxu0 %v4267
      %4711 = vmatprep.subr.bf16.mxu0 0
      %4712 = vmatpush1.bf16.msra.mxu0 %v4268
      %4713 = vmatprep.subr.bf16.mxu0 0
      %4714 = vmatpush1.bf16.msra.mxu0 %v4269
      %4715 = vmatprep.subr.bf16.mxu0 0
      %4716 = vmatpush1.bf16.msra.mxu0 %v4270
      %4717 = vmatprep.subr.bf16.mxu0 0
      %4718 = vmatpush1.bf16.msra.mxu0 %v4271
      %4719 = vmatprep.subr.bf16.mxu0 0
      %4720 = vmatpush1.bf16.msra.mxu0 %v4272
      %4721 = vmatprep.subr.bf16.mxu0 0
      %4722 = vmatpush1.bf16.msra.mxu0 %v4273
      %4723 = vmatprep.subr.bf16.mxu0 0
      %4724 = vmatpush1.bf16.msra.mxu0 %v4274
      %4725 = vmatprep.subr.bf16.mxu0 0
      %4726 = vmatpush1.bf16.msra.mxu0 %v4275
      %4727 = vmatprep.subr.bf16.mxu0 0
      %4728 = vmatpush1.bf16.msra.mxu0 %v4276
      %4729 = vmatprep.subr.bf16.mxu0 0
      %4730 = vmatpush1.bf16.msra.mxu0 %v4277
      %4731 = vmatprep.subr.bf16.mxu0 0
      %4732 = vmatpush1.bf16.msra.mxu0 %v4278
      %4733 = vmatprep.mubr.bf16.mxu0 %v3670
      %4734 = vmatmul.mubr.bf16.gmra.mrb[0].mxu0 %v3669
      %v4735 = vpop.f32.mrb[0].mxu0
      %v4736 = vadd.f32 %v4687, %v4735
      %v4737 = vpop.f32.mrb[0].mxu0
      %v4738 = vpop.f32.mrb[0].mxu0
      %v4739 = vadd.f32 %v4690, %v4738
      %v4740 = vpop.f32.mrb[0].mxu0
      %4741 = vmatprep.mubr.bf16.mxu0 %v3685
      %4742 = vmatmul.mubr.bf16.gmra.mrb[0].mxu0 %v3684
      %v4743 = vpop.f32.mrb[0].mxu0
      %v4744 = vadd.f32 %v4695, %v4743
      %v4745 = vpop.f32.mrb[0].mxu0
      %v4746 = vpop.f32.mrb[0].mxu0
      %v4747 = vadd.f32 %v4698, %v4746
      %v4748 = vpop.f32.mrb[0].mxu0
      %4749 = vdwg.mxu0
      %4750 = vmatprep.subr.bf16.mxu0 0
      %4751 = vmatpush1.bf16.msra.mxu0 %v4279
      %4752 = vmatprep.subr.bf16.mxu0 0
      %4753 = vmatpush1.bf16.msra.mxu0 %v4280
      %4754 = vmatprep.subr.bf16.mxu0 0
      %4755 = vmatpush1.bf16.msra.mxu0 %v4281
      %4756 = vmatprep.subr.bf16.mxu0 0
      %4757 = vmatpush1.bf16.msra.mxu0 %v4282
      %4758 = vmatprep.subr.bf16.mxu0 0
      %4759 = vmatpush1.bf16.msra.mxu0 %v4283
      %4760 = vmatprep.subr.bf16.mxu0 0
      %4761 = vmatpush1.bf16.msra.mxu0 %v4284
      %4762 = vmatprep.subr.bf16.mxu0 0
      %4763 = vmatpush1.bf16.msra.mxu0 %v4285
      %4764 = vmatprep.subr.bf16.mxu0 0
      %4765 = vmatpush1.bf16.msra.mxu0 %v4286
      %4766 = vmatprep.subr.bf16.mxu0 0
      %4767 = vmatpush1.bf16.msra.mxu0 0
      %4768 = vmatprep.subr.bf16.mxu0 0
      %4769 = vmatpush1.bf16.msra.mxu0 0
      %4770 = vmatprep.subr.bf16.mxu0 0
      %4771 = vmatpush1.bf16.msra.mxu0 0
      %4772 = vmatprep.subr.bf16.mxu0 0
      %4773 = vmatpush1.bf16.msra.mxu0 0
      %4774 = vmatprep.subr.bf16.mxu0 0
      %4775 = vmatpush1.bf16.msra.mxu0 0
      %4776 = vmatprep.subr.bf16.mxu0 0
      %4777 = vmatpush1.bf16.msra.mxu0 0
      %4778 = vmatprep.subr.bf16.mxu0 0
      %4779 = vmatpush1.bf16.msra.mxu0 0
      %4780 = vmatprep.subr.bf16.mxu0 0
      %4781 = vmatpush1.bf16.msra.mxu0 0
      %4782 = vmatprep.mubr.bf16.mxu0 0
      %4783 = vmatmul.mubr.bf16.gmra.mrb[0].mxu0 %v3671
      %v4784 = vpop.f32.mrb[0].mxu0
      %v4785 = vadd.f32 %v4736, %v4784
      %v4786 = vpop.f32.mrb[0].mxu0
      %v4787 = vpop.f32.mrb[0].mxu0
      %v4788 = vadd.f32 %v4739, %v4787
      %v4789 = vpop.f32.mrb[0].mxu0
      %4790 = vmatprep.mubr.bf16.mxu0 0
      %4791 = vmatmul.mubr.bf16.gmra.mrb[0].mxu0 %v3686
      %v4792 = vpop.f32.mrb[0].mxu0
      %v4793 = vadd.f32 %v4744, %v4792
      %v4794 = vpop.f32.mrb[0].mxu0
      %v4795 = vpop.f32.mrb[0].mxu0
      %v4796 = vadd.f32 %v4747, %v4795
      %v4797 = vpop.f32.mrb[0].mxu0
      %4798 = vdwg.mxu0
      %4799 = vst.msk [vmem:[%s224] sm:$0xff] %vm3016, %v4785
      %4800 = vst.msk [vmem:[%s224 + $0x8] sm:$0xff] %vm3016, %v4788
      %4801 = vst.msk [vmem:[%s224 + $0x10] sm:$0xff] %vm3016, %v4793
      %4802 = vst.msk [vmem:[%s224 + $0x18] sm:$0xff] %vm3016, %v4796
      %p4803 = scmp.lt.s32.totalorder %s16, 1
      %s4804 = scalar_select %p4803, %s16, 1
      %s4805 = smul.addr %s4804, 4
      %s4806 = smul.addr %s4805, 8
      %s4807 = scalar_lea.vmem %s5, %s4806
      // Predicated region
      $region41: #{cnn_self_attention.1} parent=39 // pred_check
        %p4808 = pneg %p144
      $region42: #{cnn_self_attention.1} parent=39 // pred_check_branch
        %4810 = sbr.rel (%p4808) target = $region44
      $region43: #{cnn_self_attention.1} parent=39 // pred_region
        _
      $region44: #{cnn_self_attention.1} parent=39 // pred_fallthru
        _
    $region40: #{cnn_self_attention.1} parent=5 // pred_fallthru
      _
    %p4811 = scmp.le.s32.totalorder 2, %s11
    // Predicated region
    $region45: #{cnn_self_attention.1} parent=5 // pred_check
      %p4812 = pneg %p4811
    $region46: #{cnn_self_attention.1} parent=5 // pred_check_branch
      %4814 = sbr.rel (%p4812) target = $region48
    $region47: #{cnn_self_attention.1} parent=5 // pred_region
      %s4815 = ssub.s32 %s11, 2
      // Predicated region
      $region49: #{cnn_self_attention.1} parent=47 // pred_check
        %p4816 = pneg %p150
      $region50: #{cnn_self_attention.1} parent=47 // pred_check_branch
        %4818 = sbr.rel (%p4816) target = $region52
      $region51: #{cnn_self_attention.1} parent=47 // pred_region
        %p4819 = scmp.lt.s32.totalorder %s17, 1
        %s4820 = scalar_select %p4819, %s17, 1
        %s4821 = smul.addr %s4820, 4
        %s4822 = smul.addr %s4821, 8
        %s4823 = scalar_lea.vmem %s5, %s4822
      $region52: #{cnn_self_attention.1} parent=47 // pred_fallthru
        _
    $region48: #{cnn_self_attention.1} parent=5 // pred_fallthru
      _
  $region6: #{cnn_self_attention.1} parent=0 // loop_footer
    %s15 = sadd.s32 1, %s11
  $region7: #{cnn_self_attention.1} parent=0 // loop_footer_branch
    %10 = sbr.rel target = $region3
  $region8: #{cnn_self_attention.1} parent=0 // loop_exit
    _

</llo_original>
